<compile_context>
chip_gen: v7x
topology: tpu7x:2x2x1
jax: 0.10.0
libtpu: 0.0.40
codegen_flags: <defaults>
</compile_context>

<pallas_src>
import functools
import math

import numpy as np
import jax
import jax.numpy as jnp
from jax import lax
from jax.experimental import pallas as pl
from jax.experimental.pallas import tpu as pltpu

# ----------------------------- model hyper-params (small synthetic ViViT) ----
HIDDEN = 32       # config.hidden_size
HEADS = 4
DH = HIDDEN // HEADS
LAYERS = 2
FFN = 64
TUBELET_T = 2
TUBELET_P = 8
LN_EPS = 1e-6
NUM_CLASSES = 5
RPM_HIDDEN = 96

# q @ k^T without an explicit transpose (standard TPU flash-attention dimension numbers)
_TRANS_B = (((1,), (1,)), ((), ()))


# ----------------------------- fused Pallas kernel ---------------------------
def _fused_kernel(rpm_ref, tok_ref, mask_ref, wm32_ref, wqkv_ref, w1_ref,
                  vec32_ref, vec96_ref, feats_ref, logits_ref,
                  *, B, s_pad, tub_dim):
    """Whole TransformerVanilla forward for the full (sublane-stacked) batch."""
    f32, bf16 = jnp.float32, jnp.bfloat16
    BS = B * s_pad
    H = HIDDEN

    # ---- static row offsets into the packed slabs (must mirror _pack_params) ----
    o_patch = 0
    o_wo = o_patch + tub_dim               # + l*H
    o_w2 = o_wo + LAYERS * H               # + l*FFN
    o_pool = o_w2 + LAYERS * FFN
    o_rpmw2 = o_pool + H
    o_clsw = o_rpmw2 + RPM_HIDDEN

    v_biaspos = 0
    v_ln1 = v_biaspos + BS                 # + 2*l (gamma), +2*l+1 (beta)
    v_bo = v_ln1 + 2 * LAYERS              # + l
    v_ln2 = v_bo + LAYERS                  # + 2*l
    v_b2 = v_ln2 + 2 * LAYERS              # + l
    v_lnf = v_b2 + LAYERS
    v_poolb = v_lnf + 2
    v_rpmb2 = v_poolb + 1
    v_clsb = v_rpmb2 + 1

    def ln(x, goff):
        g = vec32_ref[goff:goff + 1, :]
        b = vec32_ref[goff + 1:goff + 2, :]
        mu = jnp.mean(x, axis=-1, keepdims=True)
        xc = x - mu
        var = jnp.mean(xc * xc, axis=-1, keepdims=True)
        return xc * lax.rsqrt(var + LN_EPS) * g + b

    # ---- patch / tubelet embedding over ALL stacked rows (one fat bf16 matmul) ----
    # CLS token, patch bias and position embeddings are pre-folded into the bias rows.
    x = jnp.dot(tok_ref[...], wm32_ref[o_patch:o_patch + tub_dim, :],
                preferred_element_type=f32)
    x = x + vec32_ref[v_biaspos:v_biaspos + BS, :]

    mask_bias = mask_ref[...]              # (BS, BS) additive block-diagonal key mask

    for l in range(LAYERS):
        # -------- attention block (pre-LN); fused QKV, q pre-scaled in the weights --------
        h = ln(x, v_ln1 + 2 * l).astype(bf16)
        qkv = jnp.dot(h, wqkv_ref[l * H:(l + 1) * H, :], preferred_element_type=f32)
        qkv = (qkv + vec96_ref[l:l + 1, :]).astype(bf16)        # (BS, 96)

        heads = []
        for hh in range(HEADS):
            qh = qkv[:, hh * DH:(hh + 1) * DH]                  # (BS, DH)
            kh = qkv[:, H + hh * DH: H + (hh + 1) * DH]
            vh = qkv[:, 2 * H + hh * DH: 2 * H + (hh + 1) * DH]

            s = lax.dot_general(qh, kh, _TRANS_B, preferred_element_type=f32)  # (BS, BS)
            s = s + mask_bias
            m = jnp.max(s, axis=-1, keepdims=True)
            p = jnp.exp(s - m)
            p = p * pl.reciprocal(jnp.sum(p, axis=-1, keepdims=True), approx=True)
            heads.append(jnp.dot(p.astype(bf16), vh, preferred_element_type=f32))

        # head merge folded into ONE output-projection matmul
        att = jnp.concatenate(heads, axis=-1).astype(bf16)      # (BS, H)
        att = jnp.dot(att, wm32_ref[o_wo + l * H: o_wo + (l + 1) * H, :],
                      preferred_element_type=f32)
        x = x + att + vec32_ref[v_bo + l: v_bo + l + 1, :]

        # -------- MLP block (pre-LN) --------
        h = ln(x, v_ln2 + 2 * l).astype(bf16)
        h = jnp.dot(h, w1_ref[l * H:(l + 1) * H, :], preferred_element_type=f32)
        h = h + vec96_ref[4 + l:5 + l, 0:FFN]
        h = jax.nn.gelu(h).astype(bf16)                         # tanh-approx GELU
        h = jnp.dot(h, wm32_ref[o_w2 + l * FFN: o_w2 + (l + 1) * FFN, :],
                    preferred_element_type=f32)
        x = x + h + vec32_ref[v_b2 + l: v_b2 + l + 1, :]

    # ---- final LN + pooler on each sample's CLS row: tanh(W @ cls + b) ----
    xf = ln(x, v_lnf)
    cls_tok = jnp.concatenate([xf[b * s_pad: b * s_pad + 1, :] for b in range(B)],
                              axis=0)                           # (B, H)
    pooled = jnp.tanh(
        jnp.dot(cls_tok.astype(bf16), wm32_ref[o_pool:o_pool + H, :],
                preferred_element_type=f32) + vec32_ref[v_poolb:v_poolb + 1, :])

    # ---- rpm MLP: Linear(1,96)+ReLU as a VPU broadcast-MAD, then Linear(96,H) ----
    r = rpm_ref[...]                                            # (B, 1) f32
    rh = jnp.maximum(r * vec96_ref[2:3, :] + vec96_ref[3:4, :], 0.0)   # (B, 96)
    rpm_vec = jnp.dot(rh.astype(bf16), wm32_ref[o_rpmw2:o_rpmw2 + RPM_HIDDEN, :],
                      preferred_element_type=f32) + vec32_ref[v_rpmb2:v_rpmb2 + 1, :]

    # ---- concat([pooled, rpm_vec]) (single lane-dense store) + classifier ----
    feats = jnp.concatenate([pooled, rpm_vec], axis=-1)         # (B, 2H)
    feats_ref[...] = feats.astype(feats_ref.dtype)

    logits = jnp.dot(feats.astype(bf16), wm32_ref[o_clsw:o_clsw + 2 * H, :],
                     preferred_element_type=f32) + vec32_ref[v_clsb:v_clsb + 1, :]
    logits_ref[...] = logits[:, :NUM_CLASSES].astype(logits_ref.dtype)


# ----------------------------- parameter init --------------------------------
def init_params(key, num_frames, channels, image_size):
    nt = num_frames // TUBELET_T
    nsp = image_size // TUBELET_P
    num_patches = nt * nsp * nsp
    seq = num_patches + 1
    tubelet_dim = TUBELET_T * channels * TUBELET_P * TUBELET_P

    keys = iter(jax.random.split(key, 32))

    def dense(fan_in, fan_out):
        return (jax.random.normal(next(keys), (fan_in, fan_out), jnp.float32) * 0.02,
                jnp.zeros((1, fan_out), jnp.float32))

    def dense_stack(n, fan_in, fan_out):
        return (jax.random.normal(next(keys), (n, fan_in, fan_out), jnp.float32) * 0.02,
                jnp.zeros((n, 1, fan_out), jnp.float32))

    p = {}
    p["patch_w"], p["patch_b"] = dense(tubelet_dim, HIDDEN)
    p["cls"] = jax.random.normal(next(keys), (1, HIDDEN), jnp.float32) * 0.02
    p["pos"] = jax.random.normal(next(keys), (seq, HIDDEN), jnp.float32) * 0.02

    p["ln1_g"] = jnp.ones((LAYERS, 1, HIDDEN), jnp.float32)
    p["ln1_b"] = jnp.zeros((LAYERS, 1, HIDDEN), jnp.float32)
    p["wqkv"], p["bqkv"] = dense_stack(LAYERS, HIDDEN, 3 * HIDDEN)     # fused Q/K/V
    p["wo"], p["bo"] = dense_stack(LAYERS, HIDDEN, HIDDEN)
    p["ln2_g"] = jnp.ones((LAYERS, 1, HIDDEN), jnp.float32)
    p["ln2_b"] = jnp.zeros((LAYERS, 1, HIDDEN), jnp.float32)
    p["w1"], p["b1"] = dense_stack(LAYERS, HIDDEN, FFN)
    p["w2"], p["b2"] = dense_stack(LAYERS, FFN, HIDDEN)

    p["lnf_g"] = jnp.ones((1, HIDDEN), jnp.float32)
    p["lnf_b"] = jnp.zeros((1, HIDDEN), jnp.float32)
    p["pool_w"], p["pool_b"] = dense(HIDDEN, HIDDEN)

    # rpm_embedding: Linear(1, 96) -> ReLU -> Linear(96, hidden)
    p["rpm_w1"], p["rpm_b1"] = dense(1, RPM_HIDDEN)                    # stored as (1, 96)
    p["rpm_w2"], p["rpm_b2"] = dense(RPM_HIDDEN, HIDDEN)

    # classifier (see TODO above re: in_features = 2*hidden)
    p["cls_w"], p["cls_b"] = dense(2 * HIDDEN, NUM_CLASSES)
    return p


# ----------------------------- weight packing ---------------------------------
def _pack_params(params, B, s_pad, s_valid):
    """Pack the 27 weight/bias arrays into 5 lane-padded slabs (3x bf16, 2x f32)."""
    f32, bf16 = jnp.float32, jnp.bfloat16
    qscale = jnp.concatenate(
        [jnp.full((1, 1, HIDDEN), 1.0 / math.sqrt(DH), f32),
         jnp.ones((1, 1, 2 * HIDDEN), f32)], axis=-1)            # pre-scale q columns

    # --- bf16 matmul slab, 32 output lanes ---
    cls_w_pad = jnp.pad(params["cls_w"], ((0, 0), (0, HIDDEN - NUM_CLASSES)))
    wm32 = jnp.concatenate(
        [params["patch_w"],
         params["wo"][0], params["wo"][1],
         params["w2"][0], params["w2"][1],
         params["pool_w"], params["rpm_w2"], cls_w_pad], axis=0).astype(bf16)

    # --- bf16 fused-QKV slab (96 lanes), q pre-scaled by 1/sqrt(DH) ---
    wqkv_s = params["wqkv"] * qscale
    wqkv_slab = jnp.concatenate([wqkv_s[0], wqkv_s[1]], axis=0).astype(bf16)

    # --- bf16 FFN-in slab (64 lanes) ---
    w1_slab = jnp.concatenate([params["w1"][0], params["w1"][1]], axis=0).astype(bf16)

    # --- f32 vector slab, 32 lanes: fused CLS/pos/patch-bias rows + LN params + biases ---
    pos = params["pos"]
    biaspos = jnp.concatenate(
        [params["cls"] + pos[0:1],                               # row 0: CLS + pos[0]
         params["patch_b"] + pos[1:s_valid],                     # patch rows
         jnp.zeros((s_pad - s_valid, HIDDEN), f32)], axis=0)     # pad rows
    rows = [jnp.tile(biaspos, (B, 1))]                           # (B*s_pad, H)
    for l in range(LAYERS):
        rows += [params["ln1_g"][l], params["ln1_b"][l]]
    rows += [params["bo"][0], params["bo"][1]]
    for l in range(LAYERS):
        rows += [params["ln2_g"][l], params["ln2_b"][l]]
    rows += [params["b2"][0], params["b2"][1],
             params["lnf_g"], params["lnf_b"], params["pool_b"], params["rpm_b2"],
             jnp.pad(params["cls_b"], ((0, 0), (0, HIDDEN - NUM_CLASSES)))]
    vec32 = jnp.concatenate(rows, axis=0).astype(f32)
    vec32 = jnp.pad(vec32, ((0, (-vec32.shape[0]) % 8), (0, 0)))

    # --- f32 vector slab, 96 lanes: qkv biases (q pre-scaled), rpm layer-1, FFN bias-1 ---
    bqkv_s = params["bqkv"] * qscale
    b1_pad = jnp.pad(params["b1"], ((0, 0), (0, 0), (0, RPM_HIDDEN - FFN)))
    vec96 = jnp.concatenate(
        [bqkv_s[0], bqkv_s[1], params["rpm_w1"], params["rpm_b1"],
         b1_pad[0], b1_pad[1]], axis=0).astype(f32)
    vec96 = jnp.pad(vec96, ((0, (-vec96.shape[0]) % 8), (0, 0)))

    return wm32, wqkv_slab, w1_slab, vec32, vec96


# ----------------------------- forward pass -----------------------------------
@jax.jit
def _fused_forward(params, video, rpm):
    """video: (B, T, C, H, W), rpm: (B,) -> (feats (B, 2*HIDDEN), logits (B, 5))."""
    B, T, C, H, W = video.shape
    nt, nh, nw = T // TUBELET_T, H // TUBELET_P, W // TUBELET_P
    num_patches = nt * nh * nw
    s_valid = num_patches + 1
    s_pad = max(8, ((s_valid + 7) // 8) * 8)                      # sublane-align tokens
    tub_dim = TUBELET_T * C * TUBELET_P * TUBELET_P               # lane axis (mult of 128)
    BS = B * s_pad

    # tubelet extraction (layout glue): all samples stacked on the sublane axis with a
    # zero CLS slot and zero pad rows per sample; tokens fed to the MXU in bf16.
    x = video.reshape(B, nt, TUBELET_T, C, nh, TUBELET_P, nw, TUBELET_P)
    x = x.transpose(0, 1, 4, 6, 2, 3, 5, 7).reshape(B, num_patches, tub_dim)
    tok = jnp.pad(x, ((0, 0), (1, s_pad - s_valid), (0, 0)))
    tok = tok.reshape(BS, tub_dim).astype(jnp.bfloat16)

    rpm2 = rpm.reshape(B, 1).astype(jnp.float32)

    # block-diagonal attention-key mask (same-sample keys only, padded keys off),
    # baked as a compile-time constant additive bias.
    qi = np.arange(BS)[:, None]
    kj = np.arange(BS)[None, :]
    ok = (qi // s_pad == kj // s_pad) & ((kj % s_pad) < s_valid)
    mask_bias = jnp.asarray(np.where(ok, 0.0, -1e30), jnp.float32)

    wm32, wqkv_slab, w1_slab, vec32, vec96 = _pack_params(params, B, s_pad, s_valid)

    kernel = functools.partial(_fused_kernel, B=B, s_pad=s_pad, tub_dim=tub_dim)

    def full(a):
        return pl.BlockSpec(a.shape, lambda i: (0,) * a.ndim)

    inputs = (rpm2, tok, mask_bias, wm32, wqkv_slab, w1_slab, vec32, vec96)

    # grid=(1,): whole stacked batch in a single step (no per-sample grid overhead).
    # On v7x with larger batches, grid=(2,) "parallel" with B/2 samples per step keeps
    # both TensorCores loaded.
    feats, logits = pl.pallas_call(
        kernel,
        grid=(1,),
        in_specs=[full(a) for a in inputs],
        out_specs=(pl.BlockSpec((B, 2 * HIDDEN), lambda i: (0, 0)),
                   pl.BlockSpec((B, NUM_CLASSES), lambda i: (0, 0))),
        out_shape=(jax.ShapeDtypeStruct((B, 2 * HIDDEN), jnp.float32),
                   jax.ShapeDtypeStruct((B, NUM_CLASSES), jnp.float32)),
        compiler_params=pltpu.CompilerParams(dimension_semantics=("arbitrary",)),
    )(*inputs)

    return feats, logits


def transformer_vanilla_forward(params, video, rpm, flow_bool=False):
    """video: (B, T, C, H, W), rpm: (B,)."""
    feats, logits = _fused_forward(params, video, rpm)
    return feats if flow_bool else logits


# ----------------------------- main -------------------------------------------
if __name__ == "__main__":
    key = jax.random.PRNGKey(0)
    k_video, k_rpm, k_params = jax.random.split(key, 3)

    B, T, C, H, W = 2, 4, 3, 16, 16
    video = jax.random.normal(k_video, (B, T, C, H, W), jnp.float32)
    rpm = jax.random.uniform(k_rpm, (B,), jnp.float32)

    params = init_params(k_params, num_frames=T, channels=C, image_size=H)

    out = transformer_vanilla_forward(params, video, rpm, flow_bool=False)
    out = jax.block_until_ready(out)
    assert out.shape == (B, NUM_CLASSES), out.shape
    assert bool(jnp.all(jnp.isfinite(out))), "non-finite logits"

    # also exercise the flow_bool=True branch (returns the concat features)
    feats = jax.block_until_ready(
        transformer_vanilla_forward(params, video, rpm, flow_bool=True))
    assert feats.shape == (B, 2 * HIDDEN), feats.shape
    assert bool(jnp.all(jnp.isfinite(feats))), "non-finite features"

    print("KERNEL_OK")
</pallas_src>

<mosaic_0001>
module attributes {stable_mosaic.version = 11 : i64} {
  func.func @_fused_kernel(%arg0: i32, %arg1: memref<2x1xf32, #tpu.memory_space<vmem>>, %arg2: memref<32x384xbf16, #tpu.memory_space<vmem>>, %arg3: memref<32x32xf32, #tpu.memory_space<vmem>>, %arg4: memref<768x32xbf16, #tpu.memory_space<vmem>>, %arg5: memref<64x96xbf16, #tpu.memory_space<vmem>>, %arg6: memref<64x64xbf16, #tpu.memory_space<vmem>>, %arg7: memref<56x32xf32, #tpu.memory_space<vmem>>, %arg8: memref<8x96xf32, #tpu.memory_space<vmem>>, %arg9: memref<2x64xf32, #tpu.memory_space<vmem>>, %arg10: memref<2x5xf32, #tpu.memory_space<vmem>>) attributes {dimension_semantics = [#tpu.dimension_semantics<arbitrary>], iteration_bounds = array<i64: 1>, scalar_prefetch = 0 : i64, scratch_operands = 0 : i64, tpu.core_type = #tpu.core_type<tc>, window_params = [{pipeline_mode = #tpu.pipeline_mode<synchronous>, transform_indices = @transform_0, window_bounds = array<i64: 2, 1>}, {pipeline_mode = #tpu.pipeline_mode<synchronous>, transform_indices = @transform_1, window_bounds = array<i64: 32, 384>}, {pipeline_mode = #tpu.pipeline_mode<synchronous>, transform_indices = @transform_2, window_bounds = array<i64: 32, 32>}, {pipeline_mode = #tpu.pipeline_mode<synchronous>, transform_indices = @transform_3, window_bounds = array<i64: 768, 32>}, {pipeline_mode = #tpu.pipeline_mode<synchronous>, transform_indices = @transform_4, window_bounds = array<i64: 64, 96>}, {pipeline_mode = #tpu.pipeline_mode<synchronous>, transform_indices = @transform_5, window_bounds = array<i64: 64, 64>}, {pipeline_mode = #tpu.pipeline_mode<synchronous>, transform_indices = @transform_6, window_bounds = array<i64: 56, 32>}, {pipeline_mode = #tpu.pipeline_mode<synchronous>, transform_indices = @transform_7, window_bounds = array<i64: 8, 96>}, {pipeline_mode = #tpu.pipeline_mode<synchronous>, transform_indices = @transform_8, window_bounds = array<i64: 2, 64>}, {pipeline_mode = #tpu.pipeline_mode<synchronous>, transform_indices = @transform_9, window_bounds = array<i64: 2, 5>}]} {
    %c0 = arith.constant 0 : index
    %c0_0 = arith.constant 0 : index
    %0 = vector.load %arg2[%c0, %c0_0] : memref<32x384xbf16, #tpu.memory_space<vmem>>, vector<32x384xbf16>
    %c0_1 = arith.constant 0 : index
    %c0_2 = arith.constant 0 : index
    %1 = vector.load %arg4[%c0_1, %c0_2] : memref<768x32xbf16, #tpu.memory_space<vmem>>, vector<384x32xbf16>
    %cst = arith.constant dense<0.000000e+00> : vector<32x32xf32>
    %2 = tpu.matmul %0, %1, %cst {dimension_numbers = #tpu.dot_dimension_numbers<[1], [0], [0], [1], [0, 0, 1, 1], [], []>} : vector<32x384xbf16>, vector<384x32xbf16>, vector<32x32xf32> -> vector<32x32xf32>
    %c0_3 = arith.constant 0 : index
    %c0_4 = arith.constant 0 : index
    %3 = vector.load %arg7[%c0_3, %c0_4] : memref<56x32xf32, #tpu.memory_space<vmem>>, vector<32x32xf32>
    %4 = arith.addf %2, %3 : vector<32x32xf32>
    %c0_5 = arith.constant 0 : index
    %c0_6 = arith.constant 0 : index
    %5 = vector.load %arg3[%c0_5, %c0_6] : memref<32x32xf32, #tpu.memory_space<vmem>>, vector<32x32xf32>
    %c32 = arith.constant 32 : index
    %c0_7 = arith.constant 0 : index
    %6 = vector.load %arg7[%c32, %c0_7] : memref<56x32xf32, #tpu.memory_space<vmem>>, vector<1x32xf32>
    %c33 = arith.constant 33 : index
    %c0_8 = arith.constant 0 : index
    %7 = vector.load %arg7[%c33, %c0_8] : memref<56x32xf32, #tpu.memory_space<vmem>>, vector<1x32xf32>
    %cst_9 = arith.constant dense<0.000000e+00> : vector<32xf32>
    %8 = vector.multi_reduction <add>, %4, %cst_9 [1] : vector<32x32xf32> to vector<32xf32>
    %9 = vector.shape_cast %8 : vector<32xf32> to vector<32x1xf32>
    %cst_10 = arith.constant 3.200000e+01 : f32
    %10 = vector.broadcast %cst_10 : f32 to vector<32x1xf32>
    %11 = arith.divf %9, %10 : vector<32x1xf32>
    %12 = vector.broadcast %11 : vector<32x1xf32> to vector<32x32xf32>
    %13 = arith.subf %4, %12 : vector<32x32xf32>
    %14 = arith.mulf %13, %13 : vector<32x32xf32>
    %cst_11 = arith.constant dense<0.000000e+00> : vector<32xf32>
    %15 = vector.multi_reduction <add>, %14, %cst_11 [1] : vector<32x32xf32> to vector<32xf32>
    %16 = vector.shape_cast %15 : vector<32xf32> to vector<32x1xf32>
    %cst_12 = arith.constant 3.200000e+01 : f32
    %17 = vector.broadcast %cst_12 : f32 to vector<32x1xf32>
    %18 = arith.divf %16, %17 : vector<32x1xf32>
    %cst_13 = arith.constant 9.99999997E-7 : f32
    %19 = vector.broadcast %cst_13 : f32 to vector<32x1xf32>
    %20 = arith.addf %18, %19 : vector<32x1xf32>
    %21 = math.rsqrt %20 : vector<32x1xf32>
    %22 = vector.broadcast %21 : vector<32x1xf32> to vector<32x32xf32>
    %23 = arith.mulf %13, %22 : vector<32x32xf32>
    %24 = vector.broadcast %6 : vector<1x32xf32> to vector<32x32xf32>
    %25 = arith.mulf %23, %24 : vector<32x32xf32>
    %26 = vector.broadcast %7 : vector<1x32xf32> to vector<32x32xf32>
    %27 = arith.addf %25, %26 : vector<32x32xf32>
    %28 = arith.truncf %27 : vector<32x32xf32> to vector<32x32xbf16>
    %c0_14 = arith.constant 0 : index
    %c0_15 = arith.constant 0 : index
    %29 = vector.load %arg5[%c0_14, %c0_15] : memref<64x96xbf16, #tpu.memory_space<vmem>>, vector<32x96xbf16>
    %cst_16 = arith.constant dense<0.000000e+00> : vector<32x96xf32>
    %30 = tpu.matmul %28, %29, %cst_16 {dimension_numbers = #tpu.dot_dimension_numbers<[1], [0], [0], [1], [0, 0, 1, 1], [], []>} : vector<32x32xbf16>, vector<32x96xbf16>, vector<32x96xf32> -> vector<32x96xf32>
    %c0_17 = arith.constant 0 : index
    %c0_18 = arith.constant 0 : index
    %31 = vector.load %arg8[%c0_17, %c0_18] : memref<8x96xf32, #tpu.memory_space<vmem>>, vector<1x96xf32>
    %32 = vector.broadcast %31 : vector<1x96xf32> to vector<32x96xf32>
    %33 = arith.addf %30, %32 : vector<32x96xf32>
    %34 = arith.truncf %33 : vector<32x96xf32> to vector<32x96xbf16>
    %35 = vector.extract_strided_slice %34 {offsets = [0, 0], sizes = [32, 8], strides = [1, 1]} : vector<32x96xbf16> to vector<32x8xbf16>
    %36 = vector.extract_strided_slice %34 {offsets = [0, 32], sizes = [32, 8], strides = [1, 1]} : vector<32x96xbf16> to vector<32x8xbf16>
    %37 = vector.extract_strided_slice %34 {offsets = [0, 64], sizes = [32, 8], strides = [1, 1]} : vector<32x96xbf16> to vector<32x8xbf16>
    %cst_19 = arith.constant dense<0.000000e+00> : vector<32x32xf32>
    %38 = tpu.matmul %35, %36, %cst_19 {dimension_numbers = #tpu.dot_dimension_numbers<[1], [1], [0], [0], [0, 0, 1, 0], [], []>} : vector<32x8xbf16>, vector<32x8xbf16>, vector<32x32xf32> -> vector<32x32xf32>
    %39 = arith.addf %38, %5 : vector<32x32xf32>
    %cst_20 = arith.constant dense<0xFF800000> : vector<32xf32>
    %40 = vector.multi_reduction <maximumf>, %39, %cst_20 [1] : vector<32x32xf32> to vector<32xf32>
    %41 = vector.shape_cast %40 : vector<32xf32> to vector<32x1xf32>
    %42 = vector.broadcast %41 : vector<32x1xf32> to vector<32x32xf32>
    %43 = arith.subf %39, %42 : vector<32x32xf32>
    %44 = math.exp %43 : vector<32x32xf32>
    %cst_21 = arith.constant dense<0.000000e+00> : vector<32xf32>
    %45 = vector.multi_reduction <add>, %44, %cst_21 [1] : vector<32x32xf32> to vector<32xf32>
    %46 = vector.shape_cast %45 : vector<32xf32> to vector<32x1xf32>
    %47 = tpu.reciprocal %46 {approx = true} : vector<32x1xf32> -> vector<32x1xf32>
    %48 = vector.broadcast %47 : vector<32x1xf32> to vector<32x32xf32>
    %49 = arith.mulf %44, %48 : vector<32x32xf32>
    %50 = arith.truncf %49 : vector<32x32xf32> to vector<32x32xbf16>
    %cst_22 = arith.constant dense<0.000000e+00> : vector<32x8xf32>
    %51 = tpu.matmul %50, %37, %cst_22 {dimension_numbers = #tpu.dot_dimension_numbers<[1], [0], [0], [1], [0, 0, 1, 1], [], []>} : vector<32x32xbf16>, vector<32x8xbf16>, vector<32x8xf32> -> vector<32x8xf32>
    %52 = vector.extract_strided_slice %34 {offsets = [0, 8], sizes = [32, 8], strides = [1, 1]} : vector<32x96xbf16> to vector<32x8xbf16>
    %53 = vector.extract_strided_slice %34 {offsets = [0, 40], sizes = [32, 8], strides = [1, 1]} : vector<32x96xbf16> to vector<32x8xbf16>
    %54 = vector.extract_strided_slice %34 {offsets = [0, 72], sizes = [32, 8], strides = [1, 1]} : vector<32x96xbf16> to vector<32x8xbf16>
    %cst_23 = arith.constant dense<0.000000e+00> : vector<32x32xf32>
    %55 = tpu.matmul %52, %53, %cst_23 {dimension_numbers = #tpu.dot_dimension_numbers<[1], [1], [0], [0], [0, 0, 1, 0], [], []>} : vector<32x8xbf16>, vector<32x8xbf16>, vector<32x32xf32> -> vector<32x32xf32>
    %56 = arith.addf %55, %5 : vector<32x32xf32>
    %cst_24 = arith.constant dense<0xFF800000> : vector<32xf32>
    %57 = vector.multi_reduction <maximumf>, %56, %cst_24 [1] : vector<32x32xf32> to vector<32xf32>
    %58 = vector.shape_cast %57 : vector<32xf32> to vector<32x1xf32>
    %59 = vector.broadcast %58 : vector<32x1xf32> to vector<32x32xf32>
    %60 = arith.subf %56, %59 : vector<32x32xf32>
    %61 = math.exp %60 : vector<32x32xf32>
    %cst_25 = arith.constant dense<0.000000e+00> : vector<32xf32>
    %62 = vector.multi_reduction <add>, %61, %cst_25 [1] : vector<32x32xf32> to vector<32xf32>
    %63 = vector.shape_cast %62 : vector<32xf32> to vector<32x1xf32>
    %64 = tpu.reciprocal %63 {approx = true} : vector<32x1xf32> -> vector<32x1xf32>
    %65 = vector.broadcast %64 : vector<32x1xf32> to vector<32x32xf32>
    %66 = arith.mulf %61, %65 : vector<32x32xf32>
    %67 = arith.truncf %66 : vector<32x32xf32> to vector<32x32xbf16>
    %cst_26 = arith.constant dense<0.000000e+00> : vector<32x8xf32>
    %68 = tpu.matmul %67, %54, %cst_26 {dimension_numbers = #tpu.dot_dimension_numbers<[1], [0], [0], [1], [0, 0, 1, 1], [], []>} : vector<32x32xbf16>, vector<32x8xbf16>, vector<32x8xf32> -> vector<32x8xf32>
    %69 = vector.extract_strided_slice %34 {offsets = [0, 16], sizes = [32, 8], strides = [1, 1]} : vector<32x96xbf16> to vector<32x8xbf16>
    %70 = vector.extract_strided_slice %34 {offsets = [0, 48], sizes = [32, 8], strides = [1, 1]} : vector<32x96xbf16> to vector<32x8xbf16>
    %71 = vector.extract_strided_slice %34 {offsets = [0, 80], sizes = [32, 8], strides = [1, 1]} : vector<32x96xbf16> to vector<32x8xbf16>
    %cst_27 = arith.constant dense<0.000000e+00> : vector<32x32xf32>
    %72 = tpu.matmul %69, %70, %cst_27 {dimension_numbers = #tpu.dot_dimension_numbers<[1], [1], [0], [0], [0, 0, 1, 0], [], []>} : vector<32x8xbf16>, vector<32x8xbf16>, vector<32x32xf32> -> vector<32x32xf32>
    %73 = arith.addf %72, %5 : vector<32x32xf32>
    %cst_28 = arith.constant dense<0xFF800000> : vector<32xf32>
    %74 = vector.multi_reduction <maximumf>, %73, %cst_28 [1] : vector<32x32xf32> to vector<32xf32>
    %75 = vector.shape_cast %74 : vector<32xf32> to vector<32x1xf32>
    %76 = vector.broadcast %75 : vector<32x1xf32> to vector<32x32xf32>
    %77 = arith.subf %73, %76 : vector<32x32xf32>
    %78 = math.exp %77 : vector<32x32xf32>
    %cst_29 = arith.constant dense<0.000000e+00> : vector<32xf32>
    %79 = vector.multi_reduction <add>, %78, %cst_29 [1] : vector<32x32xf32> to vector<32xf32>
    %80 = vector.shape_cast %79 : vector<32xf32> to vector<32x1xf32>
    %81 = tpu.reciprocal %80 {approx = true} : vector<32x1xf32> -> vector<32x1xf32>
    %82 = vector.broadcast %81 : vector<32x1xf32> to vector<32x32xf32>
    %83 = arith.mulf %78, %82 : vector<32x32xf32>
    %84 = arith.truncf %83 : vector<32x32xf32> to vector<32x32xbf16>
    %cst_30 = arith.constant dense<0.000000e+00> : vector<32x8xf32>
    %85 = tpu.matmul %84, %71, %cst_30 {dimension_numbers = #tpu.dot_dimension_numbers<[1], [0], [0], [1], [0, 0, 1, 1], [], []>} : vector<32x32xbf16>, vector<32x8xbf16>, vector<32x8xf32> -> vector<32x8xf32>
    %86 = vector.extract_strided_slice %34 {offsets = [0, 24], sizes = [32, 8], strides = [1, 1]} : vector<32x96xbf16> to vector<32x8xbf16>
    %87 = vector.extract_strided_slice %34 {offsets = [0, 56], sizes = [32, 8], strides = [1, 1]} : vector<32x96xbf16> to vector<32x8xbf16>
    %88 = vector.extract_strided_slice %34 {offsets = [0, 88], sizes = [32, 8], strides = [1, 1]} : vector<32x96xbf16> to vector<32x8xbf16>
    %cst_31 = arith.constant dense<0.000000e+00> : vector<32x32xf32>
    %89 = tpu.matmul %86, %87, %cst_31 {dimension_numbers = #tpu.dot_dimension_numbers<[1], [1], [0], [0], [0, 0, 1, 0], [], []>} : vector<32x8xbf16>, vector<32x8xbf16>, vector<32x32xf32> -> vector<32x32xf32>
    %90 = arith.addf %89, %5 : vector<32x32xf32>
    %cst_32 = arith.constant dense<0xFF800000> : vector<32xf32>
    %91 = vector.multi_reduction <maximumf>, %90, %cst_32 [1] : vector<32x32xf32> to vector<32xf32>
    %92 = vector.shape_cast %91 : vector<32xf32> to vector<32x1xf32>
    %93 = vector.broadcast %92 : vector<32x1xf32> to vector<32x32xf32>
    %94 = arith.subf %90, %93 : vector<32x32xf32>
    %95 = math.exp %94 : vector<32x32xf32>
    %cst_33 = arith.constant dense<0.000000e+00> : vector<32xf32>
    %96 = vector.multi_reduction <add>, %95, %cst_33 [1] : vector<32x32xf32> to vector<32xf32>
    %97 = vector.shape_cast %96 : vector<32xf32> to vector<32x1xf32>
    %98 = tpu.reciprocal %97 {approx = true} : vector<32x1xf32> -> vector<32x1xf32>
    %99 = vector.broadcast %98 : vector<32x1xf32> to vector<32x32xf32>
    %100 = arith.mulf %95, %99 : vector<32x32xf32>
    %101 = arith.truncf %100 : vector<32x32xf32> to vector<32x32xbf16>
    %cst_34 = arith.constant dense<0.000000e+00> : vector<32x8xf32>
    %102 = tpu.matmul %101, %88, %cst_34 {dimension_numbers = #tpu.dot_dimension_numbers<[1], [0], [0], [1], [0, 0, 1, 1], [], []>} : vector<32x32xbf16>, vector<32x8xbf16>, vector<32x8xf32> -> vector<32x8xf32>
    %103 = tpu.concatenate %51, %68, %85, %102 in 1 : vector<32x8xf32>, vector<32x8xf32>, vector<32x8xf32>, vector<32x8xf32> -> vector<32x32xf32>
    %104 = arith.truncf %103 : vector<32x32xf32> to vector<32x32xbf16>
    %c384 = arith.constant 384 : index
    %c0_35 = arith.constant 0 : index
    %105 = vector.load %arg4[%c384, %c0_35] : memref<768x32xbf16, #tpu.memory_space<vmem>>, vector<32x32xbf16>
    %cst_36 = arith.constant dense<0.000000e+00> : vector<32x32xf32>
    %106 = tpu.matmul %104, %105, %cst_36 {dimension_numbers = #tpu.dot_dimension_numbers<[1], [0], [0], [1], [0, 0, 1, 1], [], []>} : vector<32x32xbf16>, vector<32x32xbf16>, vector<32x32xf32> -> vector<32x32xf32>
    %107 = arith.addf %4, %106 : vector<32x32xf32>
    %c36 = arith.constant 36 : index
    %c0_37 = arith.constant 0 : index
    %108 = vector.load %arg7[%c36, %c0_37] : memref<56x32xf32, #tpu.memory_space<vmem>>, vector<1x32xf32>
    %109 = vector.broadcast %108 : vector<1x32xf32> to vector<32x32xf32>
    %110 = arith.addf %107, %109 : vector<32x32xf32>
    %c38 = arith.constant 38 : index
    %c0_38 = arith.constant 0 : index
    %111 = vector.load %arg7[%c38, %c0_38] : memref<56x32xf32, #tpu.memory_space<vmem>>, vector<1x32xf32>
    %c39 = arith.constant 39 : index
    %c0_39 = arith.constant 0 : index
    %112 = vector.load %arg7[%c39, %c0_39] : memref<56x32xf32, #tpu.memory_space<vmem>>, vector<1x32xf32>
    %cst_40 = arith.constant dense<0.000000e+00> : vector<32xf32>
    %113 = vector.multi_reduction <add>, %110, %cst_40 [1] : vector<32x32xf32> to vector<32xf32>
    %114 = vector.shape_cast %113 : vector<32xf32> to vector<32x1xf32>
    %cst_41 = arith.constant 3.200000e+01 : f32
    %115 = vector.broadcast %cst_41 : f32 to vector<32x1xf32>
    %116 = arith.divf %114, %115 : vector<32x1xf32>
    %117 = vector.broadcast %116 : vector<32x1xf32> to vector<32x32xf32>
    %118 = arith.subf %110, %117 : vector<32x32xf32>
    %119 = arith.mulf %118, %118 : vector<32x32xf32>
    %cst_42 = arith.constant dense<0.000000e+00> : vector<32xf32>
    %120 = vector.multi_reduction <add>, %119, %cst_42 [1] : vector<32x32xf32> to vector<32xf32>
    %121 = vector.shape_cast %120 : vector<32xf32> to vector<32x1xf32>
    %cst_43 = arith.constant 3.200000e+01 : f32
    %122 = vector.broadcast %cst_43 : f32 to vector<32x1xf32>
    %123 = arith.divf %121, %122 : vector<32x1xf32>
    %cst_44 = arith.constant 9.99999997E-7 : f32
    %124 = vector.broadcast %cst_44 : f32 to vector<32x1xf32>
    %125 = arith.addf %123, %124 : vector<32x1xf32>
    %126 = math.rsqrt %125 : vector<32x1xf32>
    %127 = vector.broadcast %126 : vector<32x1xf32> to vector<32x32xf32>
    %128 = arith.mulf %118, %127 : vector<32x32xf32>
    %129 = vector.broadcast %111 : vector<1x32xf32> to vector<32x32xf32>
    %130 = arith.mulf %128, %129 : vector<32x32xf32>
    %131 = vector.broadcast %112 : vector<1x32xf32> to vector<32x32xf32>
    %132 = arith.addf %130, %131 : vector<32x32xf32>
    %133 = arith.truncf %132 : vector<32x32xf32> to vector<32x32xbf16>
    %c0_45 = arith.constant 0 : index
    %c0_46 = arith.constant 0 : index
    %134 = vector.load %arg6[%c0_45, %c0_46] : memref<64x64xbf16, #tpu.memory_space<vmem>>, vector<32x64xbf16>
    %cst_47 = arith.constant dense<0.000000e+00> : vector<32x64xf32>
    %135 = tpu.matmul %133, %134, %cst_47 {dimension_numbers = #tpu.dot_dimension_numbers<[1], [0], [0], [1], [0, 0, 1, 1], [], []>} : vector<32x32xbf16>, vector<32x64xbf16>, vector<32x64xf32> -> vector<32x64xf32>
    %c4 = arith.constant 4 : index
    %c0_48 = arith.constant 0 : index
    %136 = vector.load %arg8[%c4, %c0_48] : memref<8x96xf32, #tpu.memory_space<vmem>>, vector<1x64xf32>
    %137 = vector.broadcast %136 : vector<1x64xf32> to vector<32x64xf32>
    %138 = arith.addf %135, %137 : vector<32x64xf32>
    %139 = arith.mulf %138, %138 : vector<32x64xf32>
    %140 = arith.mulf %138, %139 : vector<32x64xf32>
    %cst_49 = arith.constant 4.471500e-02 : f32
    %141 = vector.broadcast %cst_49 : f32 to vector<32x64xf32>
    %142 = arith.mulf %141, %140 : vector<32x64xf32>
    %143 = arith.addf %138, %142 : vector<32x64xf32>
    %cst_50 = arith.constant 0.797884583 : f32
    %144 = vector.broadcast %cst_50 : f32 to vector<32x64xf32>
    %145 = arith.mulf %144, %143 : vector<32x64xf32>
    %146 = math.tanh %145 : vector<32x64xf32>
    %cst_51 = arith.constant 1.000000e+00 : f32
    %147 = vector.broadcast %cst_51 : f32 to vector<32x64xf32>
    %148 = arith.addf %147, %146 : vector<32x64xf32>
    %cst_52 = arith.constant 5.000000e-01 : f32
    %149 = vector.broadcast %cst_52 : f32 to vector<32x64xf32>
    %150 = arith.mulf %149, %148 : vector<32x64xf32>
    %151 = arith.mulf %138, %150 : vector<32x64xf32>
    %152 = arith.truncf %151 : vector<32x64xf32> to vector<32x64xbf16>
    %c448 = arith.constant 448 : index
    %c0_53 = arith.constant 0 : index
    %153 = vector.load %arg4[%c448, %c0_53] : memref<768x32xbf16, #tpu.memory_space<vmem>>, vector<64x32xbf16>
    %cst_54 = arith.constant dense<0.000000e+00> : vector<32x32xf32>
    %154 = tpu.matmul %152, %153, %cst_54 {dimension_numbers = #tpu.dot_dimension_numbers<[1], [0], [0], [1], [0, 0, 1, 1], [], []>} : vector<32x64xbf16>, vector<64x32xbf16>, vector<32x32xf32> -> vector<32x32xf32>
    %155 = arith.addf %110, %154 : vector<32x32xf32>
    %c42 = arith.constant 42 : index
    %c0_55 = arith.constant 0 : index
    %156 = vector.load %arg7[%c42, %c0_55] : memref<56x32xf32, #tpu.memory_space<vmem>>, vector<1x32xf32>
    %157 = vector.broadcast %156 : vector<1x32xf32> to vector<32x32xf32>
    %158 = arith.addf %155, %157 : vector<32x32xf32>
    %c34 = arith.constant 34 : index
    %c0_56 = arith.constant 0 : index
    %159 = vector.load %arg7[%c34, %c0_56] : memref<56x32xf32, #tpu.memory_space<vmem>>, vector<1x32xf32>
    %c35 = arith.constant 35 : index
    %c0_57 = arith.constant 0 : index
    %160 = vector.load %arg7[%c35, %c0_57] : memref<56x32xf32, #tpu.memory_space<vmem>>, vector<1x32xf32>
    %cst_58 = arith.constant dense<0.000000e+00> : vector<32xf32>
    %161 = vector.multi_reduction <add>, %158, %cst_58 [1] : vector<32x32xf32> to vector<32xf32>
    %162 = vector.shape_cast %161 : vector<32xf32> to vector<32x1xf32>
    %cst_59 = arith.constant 3.200000e+01 : f32
    %163 = vector.broadcast %cst_59 : f32 to vector<32x1xf32>
    %164 = arith.divf %162, %163 : vector<32x1xf32>
    %165 = vector.broadcast %164 : vector<32x1xf32> to vector<32x32xf32>
    %166 = arith.subf %158, %165 : vector<32x32xf32>
    %167 = arith.mulf %166, %166 : vector<32x32xf32>
    %cst_60 = arith.constant dense<0.000000e+00> : vector<32xf32>
    %168 = vector.multi_reduction <add>, %167, %cst_60 [1] : vector<32x32xf32> to vector<32xf32>
    %169 = vector.shape_cast %168 : vector<32xf32> to vector<32x1xf32>
    %cst_61 = arith.constant 3.200000e+01 : f32
    %170 = vector.broadcast %cst_61 : f32 to vector<32x1xf32>
    %171 = arith.divf %169, %170 : vector<32x1xf32>
    %cst_62 = arith.constant 9.99999997E-7 : f32
    %172 = vector.broadcast %cst_62 : f32 to vector<32x1xf32>
    %173 = arith.addf %171, %172 : vector<32x1xf32>
    %174 = math.rsqrt %173 : vector<32x1xf32>
    %175 = vector.broadcast %174 : vector<32x1xf32> to vector<32x32xf32>
    %176 = arith.mulf %166, %175 : vector<32x32xf32>
    %177 = vector.broadcast %159 : vector<1x32xf32> to vector<32x32xf32>
    %178 = arith.mulf %176, %177 : vector<32x32xf32>
    %179 = vector.broadcast %160 : vector<1x32xf32> to vector<32x32xf32>
    %180 = arith.addf %178, %179 : vector<32x32xf32>
    %181 = arith.truncf %180 : vector<32x32xf32> to vector<32x32xbf16>
    %c32_63 = arith.constant 32 : index
    %c0_64 = arith.constant 0 : index
    %182 = vector.load %arg5[%c32_63, %c0_64] : memref<64x96xbf16, #tpu.memory_space<vmem>>, vector<32x96xbf16>
    %cst_65 = arith.constant dense<0.000000e+00> : vector<32x96xf32>
    %183 = tpu.matmul %181, %182, %cst_65 {dimension_numbers = #tpu.dot_dimension_numbers<[1], [0], [0], [1], [0, 0, 1, 1], [], []>} : vector<32x32xbf16>, vector<32x96xbf16>, vector<32x96xf32> -> vector<32x96xf32>
    %c1 = arith.constant 1 : index
    %c0_66 = arith.constant 0 : index
    %184 = vector.load %arg8[%c1, %c0_66] : memref<8x96xf32, #tpu.memory_space<vmem>>, vector<1x96xf32>
    %185 = vector.broadcast %184 : vector<1x96xf32> to vector<32x96xf32>
    %186 = arith.addf %183, %185 : vector<32x96xf32>
    %187 = arith.truncf %186 : vector<32x96xf32> to vector<32x96xbf16>
    %188 = vector.extract_strided_slice %187 {offsets = [0, 0], sizes = [32, 8], strides = [1, 1]} : vector<32x96xbf16> to vector<32x8xbf16>
    %189 = vector.extract_strided_slice %187 {offsets = [0, 32], sizes = [32, 8], strides = [1, 1]} : vector<32x96xbf16> to vector<32x8xbf16>
    %190 = vector.extract_strided_slice %187 {offsets = [0, 64], sizes = [32, 8], strides = [1, 1]} : vector<32x96xbf16> to vector<32x8xbf16>
    %cst_67 = arith.constant dense<0.000000e+00> : vector<32x32xf32>
    %191 = tpu.matmul %188, %189, %cst_67 {dimension_numbers = #tpu.dot_dimension_numbers<[1], [1], [0], [0], [0, 0, 1, 0], [], []>} : vector<32x8xbf16>, vector<32x8xbf16>, vector<32x32xf32> -> vector<32x32xf32>
    %192 = arith.addf %191, %5 : vector<32x32xf32>
    %cst_68 = arith.constant dense<0xFF800000> : vector<32xf32>
    %193 = vector.multi_reduction <maximumf>, %192, %cst_68 [1] : vector<32x32xf32> to vector<32xf32>
    %194 = vector.shape_cast %193 : vector<32xf32> to vector<32x1xf32>
    %195 = vector.broadcast %194 : vector<32x1xf32> to vector<32x32xf32>
    %196 = arith.subf %192, %195 : vector<32x32xf32>
    %197 = math.exp %196 : vector<32x32xf32>
    %cst_69 = arith.constant dense<0.000000e+00> : vector<32xf32>
    %198 = vector.multi_reduction <add>, %197, %cst_69 [1] : vector<32x32xf32> to vector<32xf32>
    %199 = vector.shape_cast %198 : vector<32xf32> to vector<32x1xf32>
    %200 = tpu.reciprocal %199 {approx = true} : vector<32x1xf32> -> vector<32x1xf32>
    %201 = vector.broadcast %200 : vector<32x1xf32> to vector<32x32xf32>
    %202 = arith.mulf %197, %201 : vector<32x32xf32>
    %203 = arith.truncf %202 : vector<32x32xf32> to vector<32x32xbf16>
    %cst_70 = arith.constant dense<0.000000e+00> : vector<32x8xf32>
    %204 = tpu.matmul %203, %190, %cst_70 {dimension_numbers = #tpu.dot_dimension_numbers<[1], [0], [0], [1], [0, 0, 1, 1], [], []>} : vector<32x32xbf16>, vector<32x8xbf16>, vector<32x8xf32> -> vector<32x8xf32>
    %205 = vector.extract_strided_slice %187 {offsets = [0, 8], sizes = [32, 8], strides = [1, 1]} : vector<32x96xbf16> to vector<32x8xbf16>
    %206 = vector.extract_strided_slice %187 {offsets = [0, 40], sizes = [32, 8], strides = [1, 1]} : vector<32x96xbf16> to vector<32x8xbf16>
    %207 = vector.extract_strided_slice %187 {offsets = [0, 72], sizes = [32, 8], strides = [1, 1]} : vector<32x96xbf16> to vector<32x8xbf16>
    %cst_71 = arith.constant dense<0.000000e+00> : vector<32x32xf32>
    %208 = tpu.matmul %205, %206, %cst_71 {dimension_numbers = #tpu.dot_dimension_numbers<[1], [1], [0], [0], [0, 0, 1, 0], [], []>} : vector<32x8xbf16>, vector<32x8xbf16>, vector<32x32xf32> -> vector<32x32xf32>
    %209 = arith.addf %208, %5 : vector<32x32xf32>
    %cst_72 = arith.constant dense<0xFF800000> : vector<32xf32>
    %210 = vector.multi_reduction <maximumf>, %209, %cst_72 [1] : vector<32x32xf32> to vector<32xf32>
    %211 = vector.shape_cast %210 : vector<32xf32> to vector<32x1xf32>
    %212 = vector.broadcast %211 : vector<32x1xf32> to vector<32x32xf32>
    %213 = arith.subf %209, %212 : vector<32x32xf32>
    %214 = math.exp %213 : vector<32x32xf32>
    %cst_73 = arith.constant dense<0.000000e+00> : vector<32xf32>
    %215 = vector.multi_reduction <add>, %214, %cst_73 [1] : vector<32x32xf32> to vector<32xf32>
    %216 = vector.shape_cast %215 : vector<32xf32> to vector<32x1xf32>
    %217 = tpu.reciprocal %216 {approx = true} : vector<32x1xf32> -> vector<32x1xf32>
    %218 = vector.broadcast %217 : vector<32x1xf32> to vector<32x32xf32>
    %219 = arith.mulf %214, %218 : vector<32x32xf32>
    %220 = arith.truncf %219 : vector<32x32xf32> to vector<32x32xbf16>
    %cst_74 = arith.constant dense<0.000000e+00> : vector<32x8xf32>
    %221 = tpu.matmul %220, %207, %cst_74 {dimension_numbers = #tpu.dot_dimension_numbers<[1], [0], [0], [1], [0, 0, 1, 1], [], []>} : vector<32x32xbf16>, vector<32x8xbf16>, vector<32x8xf32> -> vector<32x8xf32>
    %222 = vector.extract_strided_slice %187 {offsets = [0, 16], sizes = [32, 8], strides = [1, 1]} : vector<32x96xbf16> to vector<32x8xbf16>
    %223 = vector.extract_strided_slice %187 {offsets = [0, 48], sizes = [32, 8], strides = [1, 1]} : vector<32x96xbf16> to vector<32x8xbf16>
    %224 = vector.extract_strided_slice %187 {offsets = [0, 80], sizes = [32, 8], strides = [1, 1]} : vector<32x96xbf16> to vector<32x8xbf16>
    %cst_75 = arith.constant dense<0.000000e+00> : vector<32x32xf32>
    %225 = tpu.matmul %222, %223, %cst_75 {dimension_numbers = #tpu.dot_dimension_numbers<[1], [1], [0], [0], [0, 0, 1, 0], [], []>} : vector<32x8xbf16>, vector<32x8xbf16>, vector<32x32xf32> -> vector<32x32xf32>
    %226 = arith.addf %225, %5 : vector<32x32xf32>
    %cst_76 = arith.constant dense<0xFF800000> : vector<32xf32>
    %227 = vector.multi_reduction <maximumf>, %226, %cst_76 [1] : vector<32x32xf32> to vector<32xf32>
    %228 = vector.shape_cast %227 : vector<32xf32> to vector<32x1xf32>
    %229 = vector.broadcast %228 : vector<32x1xf32> to vector<32x32xf32>
    %230 = arith.subf %226, %229 : vector<32x32xf32>
    %231 = math.exp %230 : vector<32x32xf32>
    %cst_77 = arith.constant dense<0.000000e+00> : vector<32xf32>
    %232 = vector.multi_reduction <add>, %231, %cst_77 [1] : vector<32x32xf32> to vector<32xf32>
    %233 = vector.shape_cast %232 : vector<32xf32> to vector<32x1xf32>
    %234 = tpu.reciprocal %233 {approx = true} : vector<32x1xf32> -> vector<32x1xf32>
    %235 = vector.broadcast %234 : vector<32x1xf32> to vector<32x32xf32>
    %236 = arith.mulf %231, %235 : vector<32x32xf32>
    %237 = arith.truncf %236 : vector<32x32xf32> to vector<32x32xbf16>
    %cst_78 = arith.constant dense<0.000000e+00> : vector<32x8xf32>
    %238 = tpu.matmul %237, %224, %cst_78 {dimension_numbers = #tpu.dot_dimension_numbers<[1], [0], [0], [1], [0, 0, 1, 1], [], []>} : vector<32x32xbf16>, vector<32x8xbf16>, vector<32x8xf32> -> vector<32x8xf32>
    %239 = vector.extract_strided_slice %187 {offsets = [0, 24], sizes = [32, 8], strides = [1, 1]} : vector<32x96xbf16> to vector<32x8xbf16>
    %240 = vector.extract_strided_slice %187 {offsets = [0, 56], sizes = [32, 8], strides = [1, 1]} : vector<32x96xbf16> to vector<32x8xbf16>
    %241 = vector.extract_strided_slice %187 {offsets = [0, 88], sizes = [32, 8], strides = [1, 1]} : vector<32x96xbf16> to vector<32x8xbf16>
    %cst_79 = arith.constant dense<0.000000e+00> : vector<32x32xf32>
    %242 = tpu.matmul %239, %240, %cst_79 {dimension_numbers = #tpu.dot_dimension_numbers<[1], [1], [0], [0], [0, 0, 1, 0], [], []>} : vector<32x8xbf16>, vector<32x8xbf16>, vector<32x32xf32> -> vector<32x32xf32>
    %243 = arith.addf %242, %5 : vector<32x32xf32>
    %cst_80 = arith.constant dense<0xFF800000> : vector<32xf32>
    %244 = vector.multi_reduction <maximumf>, %243, %cst_80 [1] : vector<32x32xf32> to vector<32xf32>
    %245 = vector.shape_cast %244 : vector<32xf32> to vector<32x1xf32>
    %246 = vector.broadcast %245 : vector<32x1xf32> to vector<32x32xf32>
    %247 = arith.subf %243, %246 : vector<32x32xf32>
    %248 = math.exp %247 : vector<32x32xf32>
    %cst_81 = arith.constant dense<0.000000e+00> : vector<32xf32>
    %249 = vector.multi_reduction <add>, %248, %cst_81 [1] : vector<32x32xf32> to vector<32xf32>
    %250 = vector.shape_cast %249 : vector<32xf32> to vector<32x1xf32>
    %251 = tpu.reciprocal %250 {approx = true} : vector<32x1xf32> -> vector<32x1xf32>
    %252 = vector.broadcast %251 : vector<32x1xf32> to vector<32x32xf32>
    %253 = arith.mulf %248, %252 : vector<32x32xf32>
    %254 = arith.truncf %253 : vector<32x32xf32> to vector<32x32xbf16>
    %cst_82 = arith.constant dense<0.000000e+00> : vector<32x8xf32>
    %255 = tpu.matmul %254, %241, %cst_82 {dimension_numbers = #tpu.dot_dimension_numbers<[1], [0], [0], [1], [0, 0, 1, 1], [], []>} : vector<32x32xbf16>, vector<32x8xbf16>, vector<32x8xf32> -> vector<32x8xf32>
    %256 = tpu.concatenate %204, %221, %238, %255 in 1 : vector<32x8xf32>, vector<32x8xf32>, vector<32x8xf32>, vector<32x8xf32> -> vector<32x32xf32>
    %257 = arith.truncf %256 : vector<32x32xf32> to vector<32x32xbf16>
    %c416 = arith.constant 416 : index
    %c0_83 = arith.constant 0 : index
    %258 = vector.load %arg4[%c416, %c0_83] : memref<768x32xbf16, #tpu.memory_space<vmem>>, vector<32x32xbf16>
    %cst_84 = arith.constant dense<0.000000e+00> : vector<32x32xf32>
    %259 = tpu.matmul %257, %258, %cst_84 {dimension_numbers = #tpu.dot_dimension_numbers<[1], [0], [0], [1], [0, 0, 1, 1], [], []>} : vector<32x32xbf16>, vector<32x32xbf16>, vector<32x32xf32> -> vector<32x32xf32>
    %260 = arith.addf %158, %259 : vector<32x32xf32>
    %c37 = arith.constant 37 : index
    %c0_85 = arith.constant 0 : index
    %261 = vector.load %arg7[%c37, %c0_85] : memref<56x32xf32, #tpu.memory_space<vmem>>, vector<1x32xf32>
    %262 = vector.broadcast %261 : vector<1x32xf32> to vector<32x32xf32>
    %263 = arith.addf %260, %262 : vector<32x32xf32>
    %c40 = arith.constant 40 : index
    %c0_86 = arith.constant 0 : index
    %264 = vector.load %arg7[%c40, %c0_86] : memref<56x32xf32, #tpu.memory_space<vmem>>, vector<1x32xf32>
    %c41 = arith.constant 41 : index
    %c0_87 = arith.constant 0 : index
    %265 = vector.load %arg7[%c41, %c0_87] : memref<56x32xf32, #tpu.memory_space<vmem>>, vector<1x32xf32>
    %cst_88 = arith.constant dense<0.000000e+00> : vector<32xf32>
    %266 = vector.multi_reduction <add>, %263, %cst_88 [1] : vector<32x32xf32> to vector<32xf32>
    %267 = vector.shape_cast %266 : vector<32xf32> to vector<32x1xf32>
    %cst_89 = arith.constant 3.200000e+01 : f32
    %268 = vector.broadcast %cst_89 : f32 to vector<32x1xf32>
    %269 = arith.divf %267, %268 : vector<32x1xf32>
    %270 = vector.broadcast %269 : vector<32x1xf32> to vector<32x32xf32>
    %271 = arith.subf %263, %270 : vector<32x32xf32>
    %272 = arith.mulf %271, %271 : vector<32x32xf32>
    %cst_90 = arith.constant dense<0.000000e+00> : vector<32xf32>
    %273 = vector.multi_reduction <add>, %272, %cst_90 [1] : vector<32x32xf32> to vector<32xf32>
    %274 = vector.shape_cast %273 : vector<32xf32> to vector<32x1xf32>
    %cst_91 = arith.constant 3.200000e+01 : f32
    %275 = vector.broadcast %cst_91 : f32 to vector<32x1xf32>
    %276 = arith.divf %274, %275 : vector<32x1xf32>
    %cst_92 = arith.constant 9.99999997E-7 : f32
    %277 = vector.broadcast %cst_92 : f32 to vector<32x1xf32>
    %278 = arith.addf %276, %277 : vector<32x1xf32>
    %279 = math.rsqrt %278 : vector<32x1xf32>
    %280 = vector.broadcast %279 : vector<32x1xf32> to vector<32x32xf32>
    %281 = arith.mulf %271, %280 : vector<32x32xf32>
    %282 = vector.broadcast %264 : vector<1x32xf32> to vector<32x32xf32>
    %283 = arith.mulf %281, %282 : vector<32x32xf32>
    %284 = vector.broadcast %265 : vector<1x32xf32> to vector<32x32xf32>
    %285 = arith.addf %283, %284 : vector<32x32xf32>
    %286 = arith.truncf %285 : vector<32x32xf32> to vector<32x32xbf16>
    %c32_93 = arith.constant 32 : index
    %c0_94 = arith.constant 0 : index
    %287 = vector.load %arg6[%c32_93, %c0_94] : memref<64x64xbf16, #tpu.memory_space<vmem>>, vector<32x64xbf16>
    %cst_95 = arith.constant dense<0.000000e+00> : vector<32x64xf32>
    %288 = tpu.matmul %286, %287, %cst_95 {dimension_numbers = #tpu.dot_dimension_numbers<[1], [0], [0], [1], [0, 0, 1, 1], [], []>} : vector<32x32xbf16>, vector<32x64xbf16>, vector<32x64xf32> -> vector<32x64xf32>
    %c5 = arith.constant 5 : index
    %c0_96 = arith.constant 0 : index
    %289 = vector.load %arg8[%c5, %c0_96] : memref<8x96xf32, #tpu.memory_space<vmem>>, vector<1x64xf32>
    %290 = vector.broadcast %289 : vector<1x64xf32> to vector<32x64xf32>
    %291 = arith.addf %288, %290 : vector<32x64xf32>
    %292 = arith.mulf %291, %291 : vector<32x64xf32>
    %293 = arith.mulf %291, %292 : vector<32x64xf32>
    %cst_97 = arith.constant 4.471500e-02 : f32
    %294 = vector.broadcast %cst_97 : f32 to vector<32x64xf32>
    %295 = arith.mulf %294, %293 : vector<32x64xf32>
    %296 = arith.addf %291, %295 : vector<32x64xf32>
    %cst_98 = arith.constant 0.797884583 : f32
    %297 = vector.broadcast %cst_98 : f32 to vector<32x64xf32>
    %298 = arith.mulf %297, %296 : vector<32x64xf32>
    %299 = math.tanh %298 : vector<32x64xf32>
    %cst_99 = arith.constant 1.000000e+00 : f32
    %300 = vector.broadcast %cst_99 : f32 to vector<32x64xf32>
    %301 = arith.addf %300, %299 : vector<32x64xf32>
    %cst_100 = arith.constant 5.000000e-01 : f32
    %302 = vector.broadcast %cst_100 : f32 to vector<32x64xf32>
    %303 = arith.mulf %302, %301 : vector<32x64xf32>
    %304 = arith.mulf %291, %303 : vector<32x64xf32>
    %305 = arith.truncf %304 : vector<32x64xf32> to vector<32x64xbf16>
    %c512 = arith.constant 512 : index
    %c0_101 = arith.constant 0 : index
    %306 = vector.load %arg4[%c512, %c0_101] : memref<768x32xbf16, #tpu.memory_space<vmem>>, vector<64x32xbf16>
    %cst_102 = arith.constant dense<0.000000e+00> : vector<32x32xf32>
    %307 = tpu.matmul %305, %306, %cst_102 {dimension_numbers = #tpu.dot_dimension_numbers<[1], [0], [0], [1], [0, 0, 1, 1], [], []>} : vector<32x64xbf16>, vector<64x32xbf16>, vector<32x32xf32> -> vector<32x32xf32>
    %308 = arith.addf %263, %307 : vector<32x32xf32>
    %c43 = arith.constant 43 : index
    %c0_103 = arith.constant 0 : index
    %309 = vector.load %arg7[%c43, %c0_103] : memref<56x32xf32, #tpu.memory_space<vmem>>, vector<1x32xf32>
    %310 = vector.broadcast %309 : vector<1x32xf32> to vector<32x32xf32>
    %311 = arith.addf %308, %310 : vector<32x32xf32>
    %c44 = arith.constant 44 : index
    %c0_104 = arith.constant 0 : index
    %312 = vector.load %arg7[%c44, %c0_104] : memref<56x32xf32, #tpu.memory_space<vmem>>, vector<1x32xf32>
    %c45 = arith.constant 45 : index
    %c0_105 = arith.constant 0 : index
    %313 = vector.load %arg7[%c45, %c0_105] : memref<56x32xf32, #tpu.memory_space<vmem>>, vector<1x32xf32>
    %cst_106 = arith.constant dense<0.000000e+00> : vector<32xf32>
    %314 = vector.multi_reduction <add>, %311, %cst_106 [1] : vector<32x32xf32> to vector<32xf32>
    %315 = vector.shape_cast %314 : vector<32xf32> to vector<32x1xf32>
    %cst_107 = arith.constant 3.200000e+01 : f32
    %316 = vector.broadcast %cst_107 : f32 to vector<32x1xf32>
    %317 = arith.divf %315, %316 : vector<32x1xf32>
    %318 = vector.broadcast %317 : vector<32x1xf32> to vector<32x32xf32>
    %319 = arith.subf %311, %318 : vector<32x32xf32>
    %320 = arith.mulf %319, %319 : vector<32x32xf32>
    %cst_108 = arith.constant dense<0.000000e+00> : vector<32xf32>
    %321 = vector.multi_reduction <add>, %320, %cst_108 [1] : vector<32x32xf32> to vector<32xf32>
    %322 = vector.shape_cast %321 : vector<32xf32> to vector<32x1xf32>
    %cst_109 = arith.constant 3.200000e+01 : f32
    %323 = vector.broadcast %cst_109 : f32 to vector<32x1xf32>
    %324 = arith.divf %322, %323 : vector<32x1xf32>
    %cst_110 = arith.constant 9.99999997E-7 : f32
    %325 = vector.broadcast %cst_110 : f32 to vector<32x1xf32>
    %326 = arith.addf %324, %325 : vector<32x1xf32>
    %327 = math.rsqrt %326 : vector<32x1xf32>
    %328 = vector.broadcast %327 : vector<32x1xf32> to vector<32x32xf32>
    %329 = arith.mulf %319, %328 : vector<32x32xf32>
    %330 = vector.broadcast %312 : vector<1x32xf32> to vector<32x32xf32>
    %331 = arith.mulf %329, %330 : vector<32x32xf32>
    %332 = vector.broadcast %313 : vector<1x32xf32> to vector<32x32xf32>
    %333 = arith.addf %331, %332 : vector<32x32xf32>
    %334 = vector.extract_strided_slice %333 {offsets = [0, 0], sizes = [1, 32], strides = [1, 1]} : vector<32x32xf32> to vector<1x32xf32>
    %335 = vector.extract_strided_slice %333 {offsets = [16, 0], sizes = [1, 32], strides = [1, 1]} : vector<32x32xf32> to vector<1x32xf32>
    %336 = tpu.concatenate %334, %335 in 0 : vector<1x32xf32>, vector<1x32xf32> -> vector<2x32xf32>
    %337 = arith.truncf %336 : vector<2x32xf32> to vector<2x32xbf16>
    %c576 = arith.constant 576 : index
    %c0_111 = arith.constant 0 : index
    %338 = vector.load %arg4[%c576, %c0_111] : memref<768x32xbf16, #tpu.memory_space<vmem>>, vector<32x32xbf16>
    %cst_112 = arith.constant dense<0.000000e+00> : vector<2x32xf32>
    %339 = tpu.matmul %337, %338, %cst_112 {dimension_numbers = #tpu.dot_dimension_numbers<[1], [0], [0], [1], [0, 0, 1, 1], [], []>} : vector<2x32xbf16>, vector<32x32xbf16>, vector<2x32xf32> -> vector<2x32xf32>
    %c46 = arith.constant 46 : index
    %c0_113 = arith.constant 0 : index
    %340 = vector.load %arg7[%c46, %c0_113] : memref<56x32xf32, #tpu.memory_space<vmem>>, vector<1x32xf32>
    %341 = vector.broadcast %340 : vector<1x32xf32> to vector<2x32xf32>
    %342 = arith.addf %339, %341 : vector<2x32xf32>
    %343 = math.tanh %342 : vector<2x32xf32>
    %c0_114 = arith.constant 0 : index
    %c0_115 = arith.constant 0 : index
    %344 = vector.load %arg1[%c0_114, %c0_115] : memref<2x1xf32, #tpu.memory_space<vmem>>, vector<2x1xf32>
    %c2 = arith.constant 2 : index
    %c0_116 = arith.constant 0 : index
    %345 = vector.load %arg8[%c2, %c0_116] : memref<8x96xf32, #tpu.memory_space<vmem>>, vector<1x96xf32>
    %346 = vector.broadcast %344 : vector<2x1xf32> to vector<2x96xf32>
    %347 = vector.broadcast %345 : vector<1x96xf32> to vector<2x96xf32>
    %348 = arith.mulf %346, %347 : vector<2x96xf32>
    %c3 = arith.constant 3 : index
    %c0_117 = arith.constant 0 : index
    %349 = vector.load %arg8[%c3, %c0_117] : memref<8x96xf32, #tpu.memory_space<vmem>>, vector<1x96xf32>
    %350 = vector.broadcast %349 : vector<1x96xf32> to vector<2x96xf32>
    %351 = arith.addf %348, %350 : vector<2x96xf32>
    %cst_118 = arith.constant 0.000000e+00 : f32
    %352 = vector.broadcast %cst_118 : f32 to vector<2x96xf32>
    %353 = arith.maximumf %351, %352 : vector<2x96xf32>
    %354 = arith.truncf %353 : vector<2x96xf32> to vector<2x96xbf16>
    %c608 = arith.constant 608 : index
    %c0_119 = arith.constant 0 : index
    %355 = vector.load %arg4[%c608, %c0_119] : memref<768x32xbf16, #tpu.memory_space<vmem>>, vector<96x32xbf16>
    %cst_120 = arith.constant dense<0.000000e+00> : vector<2x32xf32>
    %356 = tpu.matmul %354, %355, %cst_120 {dimension_numbers = #tpu.dot_dimension_numbers<[1], [0], [0], [1], [0, 0, 1, 1], [], []>} : vector<2x96xbf16>, vector<96x32xbf16>, vector<2x32xf32> -> vector<2x32xf32>
    %c47 = arith.constant 47 : index
    %c0_121 = arith.constant 0 : index
    %357 = vector.load %arg7[%c47, %c0_121] : memref<56x32xf32, #tpu.memory_space<vmem>>, vector<1x32xf32>
    %358 = vector.broadcast %357 : vector<1x32xf32> to vector<2x32xf32>
    %359 = arith.addf %356, %358 : vector<2x32xf32>
    %360 = tpu.concatenate %343, %359 in 1 : vector<2x32xf32>, vector<2x32xf32> -> vector<2x64xf32>
    %c0_122 = arith.constant 0 : index
    %c0_123 = arith.constant 0 : index
    %361 = vector.load %arg9[%c0_122, %c0_123] : memref<2x64xf32, #tpu.memory_space<vmem>>, vector<2x64xf32>
    tpu.vector_store %arg9[%c0_122, %c0_123], %360 {strides = array<i32>} : memref<2x64xf32, #tpu.memory_space<vmem>>, vector<2x64xf32>,
    %362 = arith.truncf %360 : vector<2x64xf32> to vector<2x64xbf16>
    %c704 = arith.constant 704 : index
    %c0_124 = arith.constant 0 : index
    %363 = vector.load %arg4[%c704, %c0_124] : memref<768x32xbf16, #tpu.memory_space<vmem>>, vector<64x32xbf16>
    %cst_125 = arith.constant dense<0.000000e+00> : vector<2x32xf32>
    %364 = tpu.matmul %362, %363, %cst_125 {dimension_numbers = #tpu.dot_dimension_numbers<[1], [0], [0], [1], [0, 0, 1, 1], [], []>} : vector<2x64xbf16>, vector<64x32xbf16>, vector<2x32xf32> -> vector<2x32xf32>
    %c48 = arith.constant 48 : index
    %c0_126 = arith.constant 0 : index
    %365 = vector.load %arg7[%c48, %c0_126] : memref<56x32xf32, #tpu.memory_space<vmem>>, vector<1x32xf32>
    %366 = vector.broadcast %365 : vector<1x32xf32> to vector<2x32xf32>
    %367 = arith.addf %364, %366 : vector<2x32xf32>
    %368 = vector.extract_strided_slice %367 {offsets = [0, 0], sizes = [2, 5], strides = [1, 1]} : vector<2x32xf32> to vector<2x5xf32>
    %c0_127 = arith.constant 0 : index
    %c0_128 = arith.constant 0 : index
    %369 = vector.load %arg10[%c0_127, %c0_128] : memref<2x5xf32, #tpu.memory_space<vmem>>, vector<2x5xf32>
    tpu.vector_store %arg10[%c0_127, %c0_128], %368 {strides = array<i32>} : memref<2x5xf32, #tpu.memory_space<vmem>>, vector<2x5xf32>,
    return
  }
  func.func @transform_0(%arg0: i32) -> (i32, i32) {
    %c0_i32 = arith.constant 0 : i32
    %c0_i32_0 = arith.constant 0 : i32
    %c0_i32_1 = arith.constant 0 : i32
    return %c0_i32, %c0_i32_0 : i32, i32
  }
  func.func @transform_1(%arg0: i32) -> (i32, i32) {
    %c0_i32 = arith.constant 0 : i32
    %c0_i32_0 = arith.constant 0 : i32
    %c0_i32_1 = arith.constant 0 : i32
    return %c0_i32, %c0_i32_0 : i32, i32
  }
  func.func @transform_2(%arg0: i32) -> (i32, i32) {
    %c0_i32 = arith.constant 0 : i32
    %c0_i32_0 = arith.constant 0 : i32
    %c0_i32_1 = arith.constant 0 : i32
    return %c0_i32, %c0_i32_0 : i32, i32
  }
  func.func @transform_3(%arg0: i32) -> (i32, i32) {
    %c0_i32 = arith.constant 0 : i32
    %c0_i32_0 = arith.constant 0 : i32
    %c0_i32_1 = arith.constant 0 : i32
    return %c0_i32, %c0_i32_0 : i32, i32
  }
  func.func @transform_4(%arg0: i32) -> (i32, i32) {
    %c0_i32 = arith.constant 0 : i32
    %c0_i32_0 = arith.constant 0 : i32
    %c0_i32_1 = arith.constant 0 : i32
    return %c0_i32, %c0_i32_0 : i32, i32
  }
  func.func @transform_5(%arg0: i32) -> (i32, i32) {
    %c0_i32 = arith.constant 0 : i32
    %c0_i32_0 = arith.constant 0 : i32
    %c0_i32_1 = arith.constant 0 : i32
    return %c0_i32, %c0_i32_0 : i32, i32
  }
  func.func @transform_6(%arg0: i32) -> (i32, i32) {
    %c0_i32 = arith.constant 0 : i32
    %c0_i32_0 = arith.constant 0 : i32
    %c0_i32_1 = arith.constant 0 : i32
    return %c0_i32, %c0_i32_0 : i32, i32
  }
  func.func @transform_7(%arg0: i32) -> (i32, i32) {
    %c0_i32 = arith.constant 0 : i32
    %c0_i32_0 = arith.constant 0 : i32
    %c0_i32_1 = arith.constant 0 : i32
    return %c0_i32, %c0_i32_0 : i32, i32
  }
  func.func @transform_8(%arg0: i32) -> (i32, i32) {
    %c0_i32 = arith.constant 0 : i32
    %c0_i32_0 = arith.constant 0 : i32
    %c0_i32_1 = arith.constant 0 : i32
    return %c0_i32, %c0_i32_0 : i32, i32
  }
  func.func @transform_9(%arg0: i32) -> (i32, i32) {
    %c0_i32 = arith.constant 0 : i32
    %c0_i32_0 = arith.constant 0 : i32
    %c0_i32_1 = arith.constant 0 : i32
    return %c0_i32, %c0_i32_0 : i32, i32
  }
}

</mosaic_0001>

<llo_original>
// kernel: _fused_forward.1
$region0: #{_fused_forward.1}
  #allocation0 [shape = 'u32[]', space=smem, size = 0x4, offset = 0x4, fixed_abs, tag = 'smem constant byte address 0x4 - core index']
  #allocation1 [shape = 'u32[144,128]{1,0:T(1,128)}', space=vmem, size = 0x12000, scoped, tag = 'internal scratch']
  %s0 = inlined_call_operand.vmem [shape: f32[2,1], index: 0, kind: input, shape index: {}]
  %s1 = inlined_call_operand.vmem [shape: bf16[32,384], index: 1, kind: input, shape index: {}]
  %s2 = inlined_call_operand.vmem [shape: f32[32,32], index: 2, kind: input, shape index: {}]
  %s3 = inlined_call_operand.vmem [shape: bf16[768,32], index: 3, kind: input, shape index: {}]
  %s4 = inlined_call_operand.vmem [shape: bf16[64,96], index: 4, kind: input, shape index: {}]
  %s5 = inlined_call_operand.vmem [shape: bf16[64,64], index: 5, kind: input, shape index: {}]
  %s6 = inlined_call_operand.vmem [shape: f32[56,32], index: 6, kind: input, shape index: {}]
  %s7 = inlined_call_operand.vmem [shape: f32[8,96], index: 7, kind: input, shape index: {}]
  %s8 = inlined_call_operand.hbm [shape: f32[2,64], index: 8, kind: output, shape index: {0}]
  %s9 = inlined_call_operand.hbm [shape: f32[2,5], index: 9, kind: output, shape index: {1}]
  %10 = xla_tuple %s8, %s9
  %s11 = sld [smem:[#allocation0]]
  $region50: #{_fused_forward.1} parent=0
    _
  %s13 = ssub.s32 1, %s11
  %s14 = scalar_select 0, %s13, %s11
  $region1: #{_fused_forward.1} parent=0
    #allocation2 [shape = 'u8[1024]{0}', space=vmem, size = 0x400, scoped, tag = 'output window, operand 0, single buffered']
    #allocation3 [shape = 's32[1]{0}', space=sflag, size = 0x4, scoped, tag = 'scoped memory for _fused_forward.1']
    #allocation4 [shape = 'u8[1024]{0}', space=vmem, size = 0x400, scoped, tag = 'output window, operand 1, single buffered']
    #allocation5 [shape = 's32[1]{0}', space=sflag, size = 0x4, scoped, tag = 'scoped memory for _fused_forward.1']
    %15 = vsyncpa [#allocation3], 0
    %16 = vsyncpa [#allocation5], 0
    // Predicated region
    $region2: #{_fused_forward.1} parent=1 // pred_check
      _
    $region3: #{_fused_forward.1} parent=1 // pred_check_branch
      %18 = sbr.rel (0) target = $region5
    $region4: #{_fused_forward.1} parent=1 // pred_region
      _
    $region5: #{_fused_forward.1} parent=1 // pred_fallthru
      _
    // Predicated region
    $region6: #{_fused_forward.1} parent=1 // pred_check
      _
    $region7: #{_fused_forward.1} parent=1 // pred_check_branch
      %20 = sbr.rel (0) target = $region9
    $region8: #{_fused_forward.1} parent=1 // pred_region
      _
    $region9: #{_fused_forward.1} parent=1 // pred_fallthru
      _
    // Predicated region
    $region10: #{_fused_forward.1} parent=1 // pred_check
      _
    $region11: #{_fused_forward.1} parent=1 // pred_check_branch
      %22 = sbr.rel (0) target = $region13
    $region12: #{_fused_forward.1} parent=1 // pred_region
      _
    $region13: #{_fused_forward.1} parent=1 // pred_fallthru
      _
    // Predicated region
    $region14: #{_fused_forward.1} parent=1 // pred_check
      _
    $region15: #{_fused_forward.1} parent=1 // pred_check_branch
      %24 = sbr.rel (0) target = $region17
    $region16: #{_fused_forward.1} parent=1 // pred_region
      _
    $region17: #{_fused_forward.1} parent=1 // pred_fallthru
      _
    // Predicated region
    $region18: #{_fused_forward.1} parent=1 // pred_check
      _
    $region19: #{_fused_forward.1} parent=1 // pred_check_branch
      %26 = sbr.rel (0) target = $region21
    $region20: #{_fused_forward.1} parent=1 // pred_region
      _
    $region21: #{_fused_forward.1} parent=1 // pred_fallthru
      _
    // Predicated region
    $region22: #{_fused_forward.1} parent=1 // pred_check
      _
    $region23: #{_fused_forward.1} parent=1 // pred_check_branch
      %28 = sbr.rel (0) target = $region25
    $region24: #{_fused_forward.1} parent=1 // pred_region
      _
    $region25: #{_fused_forward.1} parent=1 // pred_fallthru
      _
    // Predicated region
    $region26: #{_fused_forward.1} parent=1 // pred_check
      _
    $region27: #{_fused_forward.1} parent=1 // pred_check_branch
      %30 = sbr.rel (0) target = $region29
    $region28: #{_fused_forward.1} parent=1 // pred_region
      _
    $region29: #{_fused_forward.1} parent=1 // pred_fallthru
      _
    // Predicated region
    $region30: #{_fused_forward.1} parent=1 // pred_check
      _
    $region31: #{_fused_forward.1} parent=1 // pred_check_branch
      %32 = sbr.rel (0) target = $region33
    $region32: #{_fused_forward.1} parent=1 // pred_region
      _
    $region33: #{_fused_forward.1} parent=1 // pred_fallthru
      _
    %v34 = vld [vmem:[%s1] sm:$0xff]
    %v35 = vld [vmem:[%s1 + $0x8] sm:$0xf]
    %v36 = vld [vmem:[%s1 + $0xc] sm:$0xff]
    %v37 = vld [vmem:[%s1 + $0x14] sm:$0xf]
    %v38 = vld [vmem:[%s1 + $0x18] sm:$0xff]
    %v39 = vld [vmem:[%s1 + $0x20] sm:$0xf]
    %v40 = vld [vmem:[%s1 + $0x24] sm:$0xff]
    %v41 = vld [vmem:[%s1 + $0x2c] sm:$0xf]
    %v42 = vld [vmem:[%s3] sm:$0xf]
    %v43 = vld [vmem:[%s3 + $0x4] sm:$0xf]
    %v44 = vld [vmem:[%s3 + $0x8] sm:$0xf]
    %v45 = vld [vmem:[%s3 + $0xc] sm:$0xf]
    %v46 = vld [vmem:[%s3 + $0x10] sm:$0xf]
    %v47 = vld [vmem:[%s3 + $0x14] sm:$0xf]
    %v48 = vld [vmem:[%s3 + $0x18] sm:$0xf]
    %v49 = vld [vmem:[%s3 + $0x1c] sm:$0xf]
    %v50 = vld [vmem:[%s3 + $0x20] sm:$0xf]
    %v51 = vld [vmem:[%s3 + $0x24] sm:$0xf]
    %v52 = vld [vmem:[%s3 + $0x28] sm:$0xf]
    %v53 = vld [vmem:[%s3 + $0x2c] sm:$0xf]
    %v54 = vld [vmem:[%s3 + $0x30] sm:$0xf]
    %v55 = vld [vmem:[%s3 + $0x34] sm:$0xf]
    %v56 = vld [vmem:[%s3 + $0x38] sm:$0xf]
    %v57 = vld [vmem:[%s3 + $0x3c] sm:$0xf]
    %v58 = vld [vmem:[%s3 + $0x40] sm:$0xf]
    %v59 = vld [vmem:[%s3 + $0x44] sm:$0xf]
    %v60 = vld [vmem:[%s3 + $0x48] sm:$0xf]
    %v61 = vld [vmem:[%s3 + $0x4c] sm:$0xf]
    %v62 = vld [vmem:[%s3 + $0x50] sm:$0xf]
    %v63 = vld [vmem:[%s3 + $0x54] sm:$0xf]
    %v64 = vld [vmem:[%s3 + $0x58] sm:$0xf]
    %v65 = vld [vmem:[%s3 + $0x5c] sm:$0xf]
    %v66 = vld [vmem:[%s3 + $0x60] sm:$0xf]
    %v67 = vld [vmem:[%s3 + $0x64] sm:$0xf]
    %v68 = vld [vmem:[%s3 + $0x68] sm:$0xf]
    %v69 = vld [vmem:[%s3 + $0x6c] sm:$0xf]
    %v70 = vld [vmem:[%s3 + $0x70] sm:$0xf]
    %v71 = vld [vmem:[%s3 + $0x74] sm:$0xf]
    %v72 = vld [vmem:[%s3 + $0x78] sm:$0xf]
    %v73 = vld [vmem:[%s3 + $0x7c] sm:$0xf]
    %v74 = vld [vmem:[%s3 + $0x80] sm:$0xf]
    %v75 = vld [vmem:[%s3 + $0x84] sm:$0xf]
    %v76 = vld [vmem:[%s3 + $0x88] sm:$0xf]
    %v77 = vld [vmem:[%s3 + $0x8c] sm:$0xf]
    %v78 = vld [vmem:[%s3 + $0x90] sm:$0xf]
    %v79 = vld [vmem:[%s3 + $0x94] sm:$0xf]
    %v80 = vld [vmem:[%s3 + $0x98] sm:$0xf]
    %v81 = vld [vmem:[%s3 + $0x9c] sm:$0xf]
    %v82 = vld [vmem:[%s3 + $0xa0] sm:$0xf]
    %v83 = vld [vmem:[%s3 + $0xa4] sm:$0xf]
    %v84 = vld [vmem:[%s3 + $0xa8] sm:$0xf]
    %v85 = vld [vmem:[%s3 + $0xac] sm:$0xf]
    %v86 = vld [vmem:[%s3 + $0xb0] sm:$0xf]
    %v87 = vld [vmem:[%s3 + $0xb4] sm:$0xf]
    %v88 = vld [vmem:[%s3 + $0xb8] sm:$0xf]
    %v89 = vld [vmem:[%s3 + $0xbc] sm:$0xf]
    %v90 = vld [vmem:[%s6] sm:$0xff]
    %v91 = vld [vmem:[%s6 + $0x8] sm:$0xff]
    %v92 = vld [vmem:[%s6 + $0x10] sm:$0xff]
    %v93 = vld [vmem:[%s6 + $0x18] sm:$0xff]
    %v102 = vunpack.c.l.b16 %v34
    %v103 = vunpack.c.h.b16 %v34
    %v104 = vunpack.c.l.b16 %v35
    %v105 = vunpack.c.l.b16 %v36
    %v106 = vunpack.c.h.b16 %v36
    %v107 = vunpack.c.l.b16 %v37
    %v108 = vunpack.c.l.b16 %v38
    %v109 = vunpack.c.h.b16 %v38
    %v110 = vunpack.c.l.b16 %v39
    %v111 = vunpack.c.l.b16 %v40
    %v112 = vunpack.c.h.b16 %v40
    %v113 = vunpack.c.l.b16 %v41
    %v114 = vpack.c.b16 %v105, %v102
    %v115 = vpack.c.b16 %v106, %v103
    %v116 = vpack.c.b16 %v107, %v104
    %v117 = vpack.c.b16 %v111, %v108
    %v118 = vpack.c.b16 %v112, %v109
    %v119 = vpack.c.b16 %v113, %v110
    %v174 = vunpack.c.l.b16 %v42
    %v175 = vunpack.c.l.b16 %v43
    %v176 = vunpack.c.l.b16 %v44
    %v177 = vunpack.c.l.b16 %v45
    %v178 = vunpack.c.l.b16 %v46
    %v179 = vunpack.c.l.b16 %v47
    %v180 = vunpack.c.l.b16 %v48
    %v181 = vunpack.c.l.b16 %v49
    %v182 = vunpack.c.l.b16 %v50
    %v183 = vunpack.c.l.b16 %v51
    %v184 = vunpack.c.l.b16 %v52
    %v185 = vunpack.c.l.b16 %v53
    %v186 = vunpack.c.l.b16 %v54
    %v187 = vunpack.c.l.b16 %v55
    %v188 = vunpack.c.l.b16 %v56
    %v189 = vunpack.c.l.b16 %v57
    %v190 = vunpack.c.l.b16 %v58
    %v191 = vunpack.c.l.b16 %v59
    %v192 = vunpack.c.l.b16 %v60
    %v193 = vunpack.c.l.b16 %v61
    %v194 = vunpack.c.l.b16 %v62
    %v195 = vunpack.c.l.b16 %v63
    %v196 = vunpack.c.l.b16 %v64
    %v197 = vunpack.c.l.b16 %v65
    %v198 = vunpack.c.l.b16 %v66
    %v199 = vunpack.c.l.b16 %v67
    %v200 = vunpack.c.l.b16 %v68
    %v201 = vunpack.c.l.b16 %v69
    %v202 = vunpack.c.l.b16 %v70
    %v203 = vunpack.c.l.b16 %v71
    %v204 = vunpack.c.l.b16 %v72
    %v205 = vunpack.c.l.b16 %v73
    %v206 = vunpack.c.l.b16 %v74
    %v207 = vunpack.c.l.b16 %v75
    %v208 = vunpack.c.l.b16 %v76
    %v209 = vunpack.c.l.b16 %v77
    %v210 = vunpack.c.l.b16 %v78
    %v211 = vunpack.c.l.b16 %v79
    %v212 = vunpack.c.l.b16 %v80
    %v213 = vunpack.c.l.b16 %v81
    %v214 = vunpack.c.l.b16 %v82
    %v215 = vunpack.c.l.b16 %v83
    %v216 = vunpack.c.l.b16 %v84
    %v217 = vunpack.c.l.b16 %v85
    %v218 = vunpack.c.l.b16 %v86
    %v219 = vunpack.c.l.b16 %v87
    %v220 = vunpack.c.l.b16 %v88
    %v221 = vunpack.c.l.b16 %v89
    %v222 = vpack.c.b16 %v175, %v174
    %v223 = vpack.c.b16 %v177, %v176
    %v224 = vpack.c.b16 %v179, %v178
    %v225 = vpack.c.b16 %v181, %v180
    %v226 = vpack.c.b16 %v183, %v182
    %v227 = vpack.c.b16 %v185, %v184
    %v228 = vpack.c.b16 %v187, %v186
    %v229 = vpack.c.b16 %v189, %v188
    %v230 = vpack.c.b16 %v191, %v190
    %v231 = vpack.c.b16 %v193, %v192
    %v232 = vpack.c.b16 %v195, %v194
    %v233 = vpack.c.b16 %v197, %v196
    %v234 = vpack.c.b16 %v199, %v198
    %v235 = vpack.c.b16 %v201, %v200
    %v236 = vpack.c.b16 %v203, %v202
    %v237 = vpack.c.b16 %v205, %v204
    %v238 = vpack.c.b16 %v207, %v206
    %v239 = vpack.c.b16 %v209, %v208
    %v240 = vpack.c.b16 %v211, %v210
    %v241 = vpack.c.b16 %v213, %v212
    %v242 = vpack.c.b16 %v215, %v214
    %v243 = vpack.c.b16 %v217, %v216
    %v244 = vpack.c.b16 %v219, %v218
    %v245 = vpack.c.b16 %v221, %v220
    %270 = vmatprep.subr.bf16.mxu0 0
    %271 = vmatpush1.bf16.msra.mxu0 %v222
    %272 = vmatprep.subr.bf16.mxu0 0
    %273 = vmatpush1.bf16.msra.mxu0 %v223
    %274 = vmatprep.subr.bf16.mxu0 0
    %275 = vmatpush1.bf16.msra.mxu0 %v224
    %276 = vmatprep.subr.bf16.mxu0 0
    %277 = vmatpush1.bf16.msra.mxu0 %v225
    %278 = vmatprep.subr.bf16.mxu0 0
    %279 = vmatpush1.bf16.msra.mxu0 %v226
    %280 = vmatprep.subr.bf16.mxu0 0
    %281 = vmatpush1.bf16.msra.mxu0 %v227
    %282 = vmatprep.subr.bf16.mxu0 0
    %283 = vmatpush1.bf16.msra.mxu0 %v228
    %284 = vmatprep.subr.bf16.mxu0 0
    %285 = vmatpush1.bf16.msra.mxu0 %v229
    %286 = vmatprep.subr.bf16.mxu0 0
    %287 = vmatpush1.bf16.msra.mxu0 %v230
    %288 = vmatprep.subr.bf16.mxu0 0
    %289 = vmatpush1.bf16.msra.mxu0 %v231
    %290 = vmatprep.subr.bf16.mxu0 0
    %291 = vmatpush1.bf16.msra.mxu0 %v232
    %292 = vmatprep.subr.bf16.mxu0 0
    %293 = vmatpush1.bf16.msra.mxu0 %v233
    %294 = vmatprep.subr.bf16.mxu0 0
    %295 = vmatpush1.bf16.msra.mxu0 %v234
    %296 = vmatprep.subr.bf16.mxu0 0
    %297 = vmatpush1.bf16.msra.mxu0 %v235
    %298 = vmatprep.subr.bf16.mxu0 0
    %299 = vmatpush1.bf16.msra.mxu0 %v236
    %300 = vmatprep.subr.bf16.mxu0 0
    %301 = vmatpush1.bf16.msra.mxu0 %v237
    %302 = vmatprep.mubr.bf16.mxu0 %v115
    %303 = vmatmul.mubr.bf16.gmra.mrb[0].mxu0 %v114
    %v304 = vpop.f32.mrb[0].mxu0
    %v305 = vadd.f32 %v90, %v304
    %v306 = vpop.f32.mrb[0].mxu0
    %v307 = vpop.f32.mrb[0].mxu0
    %v308 = vadd.f32 %v91, %v307
    %v309 = vpop.f32.mrb[0].mxu0
    %310 = vmatprep.mubr.bf16.mxu0 %v118
    %311 = vmatmul.mubr.bf16.gmra.mrb[0].mxu0 %v117
    %v312 = vpop.f32.mrb[0].mxu0
    %v313 = vadd.f32 %v92, %v312
    %v314 = vpop.f32.mrb[0].mxu0
    %v315 = vpop.f32.mrb[0].mxu0
    %v316 = vadd.f32 %v93, %v315
    %v317 = vpop.f32.mrb[0].mxu0
    %318 = vdwg.mxu0
    %319 = vmatprep.subr.bf16.mxu0 0
    %320 = vmatpush1.bf16.msra.mxu0 %v238
    %321 = vmatprep.subr.bf16.mxu0 0
    %322 = vmatpush1.bf16.msra.mxu0 %v239
    %323 = vmatprep.subr.bf16.mxu0 0
    %324 = vmatpush1.bf16.msra.mxu0 %v240
    %325 = vmatprep.subr.bf16.mxu0 0
    %326 = vmatpush1.bf16.msra.mxu0 %v241
    %327 = vmatprep.subr.bf16.mxu0 0
    %328 = vmatpush1.bf16.msra.mxu0 %v242
    %329 = vmatprep.subr.bf16.mxu0 0
    %330 = vmatpush1.bf16.msra.mxu0 %v243
    %331 = vmatprep.subr.bf16.mxu0 0
    %332 = vmatpush1.bf16.msra.mxu0 %v244
    %333 = vmatprep.subr.bf16.mxu0 0
    %334 = vmatpush1.bf16.msra.mxu0 %v245
    %335 = vmatprep.subr.bf16.mxu0 0
    %336 = vmatpush1.bf16.msra.mxu0 0
    %337 = vmatprep.subr.bf16.mxu0 0
    %338 = vmatpush1.bf16.msra.mxu0 0
    %339 = vmatprep.subr.bf16.mxu0 0
    %340 = vmatpush1.bf16.msra.mxu0 0
    %341 = vmatprep.subr.bf16.mxu0 0
    %342 = vmatpush1.bf16.msra.mxu0 0
    %343 = vmatprep.subr.bf16.mxu0 0
    %344 = vmatpush1.bf16.msra.mxu0 0
    %345 = vmatprep.subr.bf16.mxu0 0
    %346 = vmatpush1.bf16.msra.mxu0 0
    %347 = vmatprep.subr.bf16.mxu0 0
    %348 = vmatpush1.bf16.msra.mxu0 0
    %349 = vmatprep.subr.bf16.mxu0 0
    %350 = vmatpush1.bf16.msra.mxu0 0
    %351 = vmatprep.mubr.bf16.mxu0 0
    %352 = vmatmul.mubr.bf16.gmra.mrb[0].mxu0 %v116
    %v353 = vpop.f32.mrb[0].mxu0
    %v354 = vadd.f32 %v305, %v353
    %v355 = vpop.f32.mrb[0].mxu0
    %v356 = vpop.f32.mrb[0].mxu0
    %v357 = vadd.f32 %v308, %v356
    %v358 = vpop.f32.mrb[0].mxu0
    %359 = vmatprep.mubr.bf16.mxu0 0
    %360 = vmatmul.mubr.bf16.gmra.mrb[0].mxu0 %v119
    %v361 = vpop.f32.mrb[0].mxu0
    %v362 = vadd.f32 %v313, %v361
    %v363 = vpop.f32.mrb[0].mxu0
    %v364 = vpop.f32.mrb[0].mxu0
    %v365 = vadd.f32 %v316, %v364
    %v366 = vpop.f32.mrb[0].mxu0
    %367 = vdwg.mxu0
    %v368 = vld [vmem:[%s2] sm:$0xff]
    %v369 = vld [vmem:[%s2 + $0x8] sm:$0xff]
    %v370 = vld [vmem:[%s2 + $0x10] sm:$0xff]
    %v371 = vld [vmem:[%s2 + $0x18] sm:$0xff]
    %v372 = vld [vmem:[%s6 + $0x20] sm:$0x1]
    %v373 = vld [vmem:[%s6 + $0x21] sm:$0x1]
    %vm374 = vcmask 261120
    %v375 = vsel %vm374, %v354, 0.0
    %376 = vadd.xlane.f32.xlu0 %v375
    %v377 = vpop.xlane.xlu0 %376
    %v378 = vsel %vm374, %v357, 0.0
    %379 = vadd.xlane.f32.xlu0 %v378
    %v380 = vpop.xlane.xlu0 %379
    %v381 = vsel %vm374, %v362, 0.0
    %382 = vadd.xlane.f32.xlu0 %v381
    %v383 = vpop.xlane.xlu0 %382
    %v384 = vsel %vm374, %v365, 0.0
    %385 = vadd.xlane.f32.xlu0 %v384
    %v386 = vpop.xlane.xlu0 %385
    %v387 = vrcp.pop 32.0
    %v388 = vmul.f32 %v377, %v387
    %v389 = vmul.f32 %v380, %v387
    %v390 = vmul.f32 %v383, %v387
    %v391 = vmul.f32 %v386, %v387
    %v392 = vsub.f32 %v354, %v388
    %v393 = vsub.f32 %v357, %v389
    %v394 = vsub.f32 %v362, %v390
    %v395 = vsub.f32 %v365, %v391
    %v396 = vmul.f32 %v392, %v392
    %v397 = vmul.f32 %v393, %v393
    %v398 = vmul.f32 %v394, %v394
    %v399 = vmul.f32 %v395, %v395
    %v400 = vsel %vm374, %v396, 0.0
    %401 = vadd.xlane.f32.xlu0 %v400
    %v402 = vpop.xlane.xlu0 %401
    %v403 = vsel %vm374, %v397, 0.0
    %404 = vadd.xlane.f32.xlu0 %v403
    %v405 = vpop.xlane.xlu0 %404
    %v406 = vsel %vm374, %v398, 0.0
    %407 = vadd.xlane.f32.xlu0 %v406
    %v408 = vpop.xlane.xlu0 %407
    %v409 = vsel %vm374, %v399, 0.0
    %410 = vadd.xlane.f32.xlu0 %v409
    %v411 = vpop.xlane.xlu0 %410
    %v412 = vmul.f32 %v402, %v387
    %v413 = vmul.f32 %v405, %v387
    %v414 = vmul.f32 %v408, %v387
    %v415 = vmul.f32 %v411, %v387
    %v416 = vadd.f32 %v412, 1e-06
    %v417 = vadd.f32 %v413, 1e-06
    %v418 = vadd.f32 %v414, 1e-06
    %v419 = vadd.f32 %v415, 1e-06
    %v420 = vrsqrt.pop %v416
    %v421 = vrsqrt.pop %v417
    %v422 = vrsqrt.pop %v418
    %v423 = vrsqrt.pop %v419
    %v424 = vmul.f32 %v392, %v420
    %v425 = vmul.f32 %v393, %v421
    %v426 = vmul.f32 %v394, %v422
    %v427 = vmul.f32 %v395, %v423
    %v428 = vlaneseq
    %v429 = vshrl.u32 %v428, 7
    %v430 = vsub.s32 0, %v429
    %v431 = vrot.slane %v372, %v430
    %v432 = vmul.f32 %v424, %v431
    %v433 = vmul.f32 %v425, %v431
    %v434 = vmul.f32 %v426, %v431
    %v435 = vmul.f32 %v427, %v431
    %v436 = vlaneseq
    %v437 = vshrl.u32 %v436, 7
    %v438 = vsub.s32 0, %v437
    %v439 = vrot.slane %v373, %v438
    %v440 = vadd.f32 %v432, %v439
    %v441 = vadd.f32 %v433, %v439
    %v442 = vadd.f32 %v434, %v439
    %v443 = vadd.f32 %v435, %v439
    %v444 = vpack.c.bf16 %v441, %v440
    %v445 = vpack.c.bf16 %v443, %v442
    %v446 = vld [vmem:[%s4] sm:$0xf]
    %v447 = vld [vmem:[%s4 + $0x4] sm:$0xf]
    %v448 = vld [vmem:[%s4 + $0x8] sm:$0xf]
    %v449 = vld [vmem:[%s4 + $0xc] sm:$0xf]
    %v450 = vld [vmem:[%s7] sm:$0x1]
    %v451 = vlaneseq
    %v452 = vshrl.u32 %v451, 7
    %v453 = vsub.s32 0, %v452
    %v454 = vrot.slane %v450, %v453
    %v459 = vunpack.c.l.b16 %v446
    %v460 = vunpack.c.l.b16 %v447
    %v461 = vunpack.c.l.b16 %v448
    %v462 = vunpack.c.l.b16 %v449
    %v463 = vpack.c.b16 %v460, %v459
    %v464 = vpack.c.b16 %v462, %v461
    %v468 = vsel %vm374, %v444, 0
    %v471 = vsel %vm374, %v445, 0
    %473 = vmatprep.subr.bf16.mxu0 0
    %474 = vmatpush1.bf16.msra.mxu0 %v463
    %475 = vmatprep.subr.bf16.mxu0 0
    %476 = vmatpush1.bf16.msra.mxu0 %v464
    %477 = vmatprep.subr.bf16.mxu0 0
    %478 = vmatpush1.bf16.msra.mxu0 0
    %479 = vmatprep.subr.bf16.mxu0 0
    %480 = vmatpush1.bf16.msra.mxu0 0
    %481 = vmatprep.subr.bf16.mxu0 0
    %482 = vmatpush1.bf16.msra.mxu0 0
    %483 = vmatprep.subr.bf16.mxu0 0
    %484 = vmatpush1.bf16.msra.mxu0 0
    %485 = vmatprep.subr.bf16.mxu0 0
    %486 = vmatpush1.bf16.msra.mxu0 0
    %487 = vmatprep.subr.bf16.mxu0 0
    %488 = vmatpush1.bf16.msra.mxu0 0
    %489 = vmatprep.subr.bf16.mxu0 0
    %490 = vmatpush1.bf16.msra.mxu0 0
    %491 = vmatprep.subr.bf16.mxu0 0
    %492 = vmatpush1.bf16.msra.mxu0 0
    %493 = vmatprep.subr.bf16.mxu0 0
    %494 = vmatpush1.bf16.msra.mxu0 0
    %495 = vmatprep.subr.bf16.mxu0 0
    %496 = vmatpush1.bf16.msra.mxu0 0
    %497 = vmatprep.subr.bf16.mxu0 0
    %498 = vmatpush1.bf16.msra.mxu0 0
    %499 = vmatprep.subr.bf16.mxu0 0
    %500 = vmatpush1.bf16.msra.mxu0 0
    %501 = vmatprep.subr.bf16.mxu0 0
    %502 = vmatpush1.bf16.msra.mxu0 0
    %503 = vmatprep.subr.bf16.mxu0 0
    %504 = vmatpush1.bf16.msra.mxu0 0
    %505 = vmatprep.mubr.bf16.mxu0 0
    %506 = vmatmul.mubr.bf16.gmra.mrb[0].mxu0 %v468
    %v507 = vpop.f32.mrb[0].mxu0
    %v508 = vadd.f32 %v454, %v507
    %v509 = vpop.f32.mrb[0].mxu0
    %v510 = vpop.f32.mrb[0].mxu0
    %v511 = vadd.f32 %v454, %v510
    %v512 = vpop.f32.mrb[0].mxu0
    %513 = vmatprep.mubr.bf16.mxu0 0
    %514 = vmatmul.mubr.bf16.gmra.mrb[0].mxu0 %v471
    %v515 = vpop.f32.mrb[0].mxu0
    %v516 = vadd.f32 %v454, %v515
    %v517 = vpop.f32.mrb[0].mxu0
    %v518 = vpop.f32.mrb[0].mxu0
    %v519 = vadd.f32 %v454, %v518
    %v520 = vpop.f32.mrb[0].mxu0
    %521 = vdwg.mxu0
    %v522 = vpack.c.bf16 %v511, %v508
    %v523 = vpack.c.bf16 %v519, %v516
    %526 = vrot.lane.b32.xlu0 %v522, 96
    %v527 = vpop.permute.xlu0 %526
    %528 = vrot.lane.b32.xlu0 %v523, 96
    %v529 = vpop.permute.xlu0 %528
    %vm530 = vcmask 64512
    %v532 = vsel %vm530, %v522, 0
    %v535 = vsel %vm530, %v523, 0
    %v538 = vsel %vm530, %v527, 0
    %v541 = vsel %vm530, %v529, 0
    %543 = vmatprep.subr.bf16.mxu0 0
    %544 = vmatpush1.bf16.xpose.msra.mxu0 %v538
    %545 = vmatprep.subr.bf16.mxu0 0
    %546 = vmatpush1.bf16.xpose.msra.mxu0 %v541
    %547 = vmatprep.subr.bf16.mxu0 0
    %548 = vmatpush1.bf16.xpose.msra.mxu0 0
    %549 = vmatprep.subr.bf16.mxu0 0
    %550 = vmatpush1.bf16.xpose.msra.mxu0 0
    %551 = vmatprep.subr.bf16.mxu0 0
    %552 = vmatpush1.bf16.xpose.msra.mxu0 0
    %553 = vmatprep.subr.bf16.mxu0 0
    %554 = vmatpush1.bf16.xpose.msra.mxu0 0
    %555 = vmatprep.subr.bf16.mxu0 0
    %556 = vmatpush1.bf16.xpose.msra.mxu0 0
    %557 = vmatprep.subr.bf16.mxu0 0
    %558 = vmatpush1.bf16.xpose.msra.mxu0 0
    %559 = vmatprep.subr.bf16.mxu0 0
    %560 = vmatpush1.bf16.xpose.msra.mxu0 0
    %561 = vmatprep.subr.bf16.mxu0 0
    %562 = vmatpush1.bf16.xpose.msra.mxu0 0
    %563 = vmatprep.subr.bf16.mxu0 0
    %564 = vmatpush1.bf16.xpose.msra.mxu0 0
    %565 = vmatprep.subr.bf16.mxu0 0
    %566 = vmatpush1.bf16.xpose.msra.mxu0 0
    %567 = vmatprep.subr.bf16.mxu0 0
    %568 = vmatpush1.bf16.xpose.msra.mxu0 0
    %569 = vmatprep.subr.bf16.mxu0 0
    %570 = vmatpush1.bf16.xpose.msra.mxu0 0
    %571 = vmatprep.subr.bf16.mxu0 0
    %572 = vmatpush1.bf16.xpose.msra.mxu0 0
    %573 = vmatprep.subr.bf16.mxu0 0
    %574 = vmatpush1.bf16.xpose.msra.mxu0 0
    %575 = vmatprep.mubr.bf16.mxu0 0
    %576 = vmatmul.mubr.bf16.gmra.mrb[0].mxu0 %v532
    %v577 = vpop.f32.mrb[0].mxu0
    %v578 = vadd.f32 %v368, %v577
    %v579 = vpop.f32.mrb[0].mxu0
    %v580 = vpop.f32.mrb[0].mxu0
    %v581 = vadd.f32 %v369, %v580
    %v582 = vpop.f32.mrb[0].mxu0
    %583 = vmatprep.mubr.bf16.mxu0 0
    %584 = vmatmul.mubr.bf16.gmra.mrb[0].mxu0 %v535
    %v585 = vpop.f32.mrb[0].mxu0
    %v586 = vadd.f32 %v370, %v585
    %v587 = vpop.f32.mrb[0].mxu0
    %v588 = vpop.f32.mrb[0].mxu0
    %v589 = vadd.f32 %v371, %v588
    %v590 = vpop.f32.mrb[0].mxu0
    %591 = vdwg.mxu0
    %v592 = vsel %vm374, %v578, -inf
    %593 = vmax.xlane.f32.xlu0 %v592
    %v594 = vpop.xlane.xlu0 %593
    %v595 = vsel %vm374, %v581, -inf
    %596 = vmax.xlane.f32.xlu0 %v595
    %v597 = vpop.xlane.xlu0 %596
    %v598 = vsel %vm374, %v586, -inf
    %599 = vmax.xlane.f32.xlu0 %v598
    %v600 = vpop.xlane.xlu0 %599
    %v601 = vsel %vm374, %v589, -inf
    %602 = vmax.xlane.f32.xlu0 %v601
    %v603 = vpop.xlane.xlu0 %602
    %v604 = vsub.f32 %v578, %v594
    %v605 = vsub.f32 %v581, %v597
    %v606 = vsub.f32 %v586, %v600
    %v607 = vsub.f32 %v589, %v603
    %v608 = vmul.f32 %v604, 1.442695
    %v609 = vpow.pop %v608
    %v610 = vmul.f32 %v605, 1.442695
    %v611 = vpow.pop %v610
    %v612 = vmul.f32 %v606, 1.442695
    %v613 = vpow.pop %v612
    %v614 = vmul.f32 %v607, 1.442695
    %v615 = vpow.pop %v614
    %v616 = vsel %vm374, %v609, 0.0
    %617 = vadd.xlane.f32.xlu0 %v616
    %v618 = vpop.xlane.xlu0 %617
    %v619 = vsel %vm374, %v611, 0.0
    %620 = vadd.xlane.f32.xlu0 %v619
    %v621 = vpop.xlane.xlu0 %620
    %v622 = vsel %vm374, %v613, 0.0
    %623 = vadd.xlane.f32.xlu0 %v622
    %v624 = vpop.xlane.xlu0 %623
    %v625 = vsel %vm374, %v615, 0.0
    %626 = vadd.xlane.f32.xlu0 %v625
    %v627 = vpop.xlane.xlu0 %626
    %v628 = vrcp.pop %v618
    %v629 = vrcp.pop %v621
    %v630 = vrcp.pop %v624
    %v631 = vrcp.pop %v627
    %v632 = vmul.f32 %v609, %v628
    %v633 = vmul.f32 %v611, %v629
    %v634 = vmul.f32 %v613, %v630
    %v635 = vmul.f32 %v615, %v631
    %v636 = vpack.c.bf16 %v633, %v632
    %v637 = vpack.c.bf16 %v635, %v634
    %638 = vrot.lane.b32.xlu0 %v522, 64
    %v639 = vpop.permute.xlu0 %638
    %640 = vrot.lane.b32.xlu0 %v523, 64
    %v641 = vpop.permute.xlu0 %640
    %v645 = vsel %vm374, %v636, 0
    %v648 = vsel %vm374, %v637, 0
    %650 = vmatprep.subr.bf16.mxu0 0
    %651 = vmatpush1.bf16.msra.mxu0 %v639
    %652 = vmatprep.subr.bf16.mxu0 0
    %653 = vmatpush1.bf16.msra.mxu0 %v641
    %654 = vmatprep.subr.bf16.mxu0 0
    %655 = vmatpush1.bf16.msra.mxu0 0
    %656 = vmatprep.subr.bf16.mxu0 0
    %657 = vmatpush1.bf16.msra.mxu0 0
    %658 = vmatprep.subr.bf16.mxu0 0
    %659 = vmatpush1.bf16.msra.mxu0 0
    %660 = vmatprep.subr.bf16.mxu0 0
    %661 = vmatpush1.bf16.msra.mxu0 0
    %662 = vmatprep.subr.bf16.mxu0 0
    %663 = vmatpush1.bf16.msra.mxu0 0
    %664 = vmatprep.subr.bf16.mxu0 0
    %665 = vmatpush1.bf16.msra.mxu0 0
    %666 = vmatprep.subr.bf16.mxu0 0
    %667 = vmatpush1.bf16.msra.mxu0 0
    %668 = vmatprep.subr.bf16.mxu0 0
    %669 = vmatpush1.bf16.msra.mxu0 0
    %670 = vmatprep.subr.bf16.mxu0 0
    %671 = vmatpush1.bf16.msra.mxu0 0
    %672 = vmatprep.subr.bf16.mxu0 0
    %673 = vmatpush1.bf16.msra.mxu0 0
    %674 = vmatprep.subr.bf16.mxu0 0
    %675 = vmatpush1.bf16.msra.mxu0 0
    %676 = vmatprep.subr.bf16.mxu0 0
    %677 = vmatpush1.bf16.msra.mxu0 0
    %678 = vmatprep.subr.bf16.mxu0 0
    %679 = vmatpush1.bf16.msra.mxu0 0
    %680 = vmatprep.subr.bf16.mxu0 0
    %681 = vmatpush1.bf16.msra.mxu0 0
    %682 = vmatprep.mubr.bf16.mxu0 0
    %683 = vmatmul.mubr.bf16.gmra.mrb[0].mxu0 %v645
    %v684 = vpop.f32.mrb[0].mxu0
    %v685 = vadd.f32 0.0, %v684
    %v686 = vpop.f32.mrb[0].mxu0
    %v687 = vpop.f32.mrb[0].mxu0
    %v688 = vadd.f32 0.0, %v687
    %v689 = vpop.f32.mrb[0].mxu0
    %690 = vmatprep.mubr.bf16.mxu0 0
    %691 = vmatmul.mubr.bf16.gmra.mrb[0].mxu0 %v648
    %v692 = vpop.f32.mrb[0].mxu0
    %v693 = vadd.f32 0.0, %v692
    %v694 = vpop.f32.mrb[0].mxu0
    %v695 = vpop.f32.mrb[0].mxu0
    %v696 = vadd.f32 0.0, %v695
    %v697 = vpop.f32.mrb[0].mxu0
    %698 = vdwg.mxu0
    %699 = vrot.lane.b32.xlu0 %v522, 120
    %v700 = vpop.permute.xlu0 %699
    %701 = vrot.lane.b32.xlu0 %v523, 120
    %v702 = vpop.permute.xlu0 %701
    %703 = vrot.lane.b32.xlu0 %v522, 88
    %v704 = vpop.permute.xlu0 %703
    %705 = vrot.lane.b32.xlu0 %v523, 88
    %v706 = vpop.permute.xlu0 %705
    %v708 = vsel %vm530, %v700, 0
    %v711 = vsel %vm530, %v702, 0
    %v714 = vsel %vm530, %v704, 0
    %v717 = vsel %vm530, %v706, 0
    %719 = vmatprep.subr.bf16.mxu0 0
    %720 = vmatpush1.bf16.xpose.msra.mxu0 %v714
    %721 = vmatprep.subr.bf16.mxu0 0
    %722 = vmatpush1.bf16.xpose.msra.mxu0 %v717
    %723 = vmatprep.subr.bf16.mxu0 0
    %724 = vmatpush1.bf16.xpose.msra.mxu0 0
    %725 = vmatprep.subr.bf16.mxu0 0
    %726 = vmatpush1.bf16.xpose.msra.mxu0 0
    %727 = vmatprep.subr.bf16.mxu0 0
    %728 = vmatpush1.bf16.xpose.msra.mxu0 0
    %729 = vmatprep.subr.bf16.mxu0 0
    %730 = vmatpush1.bf16.xpose.msra.mxu0 0
    %731 = vmatprep.subr.bf16.mxu0 0
    %732 = vmatpush1.bf16.xpose.msra.mxu0 0
    %733 = vmatprep.subr.bf16.mxu0 0
    %734 = vmatpush1.bf16.xpose.msra.mxu0 0
    %735 = vmatprep.subr.bf16.mxu0 0
    %736 = vmatpush1.bf16.xpose.msra.mxu0 0
    %737 = vmatprep.subr.bf16.mxu0 0
    %738 = vmatpush1.bf16.xpose.msra.mxu0 0
    %739 = vmatprep.subr.bf16.mxu0 0
    %740 = vmatpush1.bf16.xpose.msra.mxu0 0
    %741 = vmatprep.subr.bf16.mxu0 0
    %742 = vmatpush1.bf16.xpose.msra.mxu0 0
    %743 = vmatprep.subr.bf16.mxu0 0
    %744 = vmatpush1.bf16.xpose.msra.mxu0 0
    %745 = vmatprep.subr.bf16.mxu0 0
    %746 = vmatpush1.bf16.xpose.msra.mxu0 0
    %747 = vmatprep.subr.bf16.mxu0 0
    %748 = vmatpush1.bf16.xpose.msra.mxu0 0
    %749 = vmatprep.subr.bf16.mxu0 0
    %750 = vmatpush1.bf16.xpose.msra.mxu0 0
    %751 = vmatprep.mubr.bf16.mxu0 0
    %752 = vmatmul.mubr.bf16.gmra.mrb[0].mxu0 %v708
    %v753 = vpop.f32.mrb[0].mxu0
    %v754 = vadd.f32 %v368, %v753
    %v755 = vpop.f32.mrb[0].mxu0
    %v756 = vpop.f32.mrb[0].mxu0
    %v757 = vadd.f32 %v369, %v756
    %v758 = vpop.f32.mrb[0].mxu0
    %759 = vmatprep.mubr.bf16.mxu0 0
    %760 = vmatmul.mubr.bf16.gmra.mrb[0].mxu0 %v711
    %v761 = vpop.f32.mrb[0].mxu0
    %v762 = vadd.f32 %v370, %v761
    %v763 = vpop.f32.mrb[0].mxu0
    %v764 = vpop.f32.mrb[0].mxu0
    %v765 = vadd.f32 %v371, %v764
    %v766 = vpop.f32.mrb[0].mxu0
    %767 = vdwg.mxu0
    %v768 = vsel %vm374, %v754, -inf
    %769 = vmax.xlane.f32.xlu0 %v768
    %v770 = vpop.xlane.xlu0 %769
    %v771 = vsel %vm374, %v757, -inf
    %772 = vmax.xlane.f32.xlu0 %v771
    %v773 = vpop.xlane.xlu0 %772
    %v774 = vsel %vm374, %v762, -inf
    %775 = vmax.xlane.f32.xlu0 %v774
    %v776 = vpop.xlane.xlu0 %775
    %v777 = vsel %vm374, %v765, -inf
    %778 = vmax.xlane.f32.xlu0 %v777
    %v779 = vpop.xlane.xlu0 %778
    %v780 = vsub.f32 %v754, %v770
    %v781 = vsub.f32 %v757, %v773
    %v782 = vsub.f32 %v762, %v776
    %v783 = vsub.f32 %v765, %v779
    %v784 = vmul.f32 %v780, 1.442695
    %v785 = vpow.pop %v784
    %v786 = vmul.f32 %v781, 1.442695
    %v787 = vpow.pop %v786
    %v788 = vmul.f32 %v782, 1.442695
    %v789 = vpow.pop %v788
    %v790 = vmul.f32 %v783, 1.442695
    %v791 = vpow.pop %v790
    %v792 = vsel %vm374, %v785, 0.0
    %793 = vadd.xlane.f32.xlu0 %v792
    %v794 = vpop.xlane.xlu0 %793
    %v795 = vsel %vm374, %v787, 0.0
    %796 = vadd.xlane.f32.xlu0 %v795
    %v797 = vpop.xlane.xlu0 %796
    %v798 = vsel %vm374, %v789, 0.0
    %799 = vadd.xlane.f32.xlu0 %v798
    %v800 = vpop.xlane.xlu0 %799
    %v801 = vsel %vm374, %v791, 0.0
    %802 = vadd.xlane.f32.xlu0 %v801
    %v803 = vpop.xlane.xlu0 %802
    %v804 = vrcp.pop %v794
    %v805 = vrcp.pop %v797
    %v806 = vrcp.pop %v800
    %v807 = vrcp.pop %v803
    %v808 = vmul.f32 %v785, %v804
    %v809 = vmul.f32 %v787, %v805
    %v810 = vmul.f32 %v789, %v806
    %v811 = vmul.f32 %v791, %v807
    %v812 = vpack.c.bf16 %v809, %v808
    %v813 = vpack.c.bf16 %v811, %v810
    %814 = vrot.lane.b32.xlu0 %v522, 56
    %v815 = vpop.permute.xlu0 %814
    %816 = vrot.lane.b32.xlu0 %v523, 56
    %v817 = vpop.permute.xlu0 %816
    %v821 = vsel %vm374, %v812, 0
    %v824 = vsel %vm374, %v813, 0
    %826 = vmatprep.subr.bf16.mxu0 0
    %827 = vmatpush1.bf16.msra.mxu0 %v815
    %828 = vmatprep.subr.bf16.mxu0 0
    %829 = vmatpush1.bf16.msra.mxu0 %v817
    %830 = vmatprep.subr.bf16.mxu0 0
    %831 = vmatpush1.bf16.msra.mxu0 0
    %832 = vmatprep.subr.bf16.mxu0 0
    %833 = vmatpush1.bf16.msra.mxu0 0
    %834 = vmatprep.subr.bf16.mxu0 0
    %835 = vmatpush1.bf16.msra.mxu0 0
    %836 = vmatprep.subr.bf16.mxu0 0
    %837 = vmatpush1.bf16.msra.mxu0 0
    %838 = vmatprep.subr.bf16.mxu0 0
    %839 = vmatpush1.bf16.msra.mxu0 0
    %840 = vmatprep.subr.bf16.mxu0 0
    %841 = vmatpush1.bf16.msra.mxu0 0
    %842 = vmatprep.subr.bf16.mxu0 0
    %843 = vmatpush1.bf16.msra.mxu0 0
    %844 = vmatprep.subr.bf16.mxu0 0
    %845 = vmatpush1.bf16.msra.mxu0 0
    %846 = vmatprep.subr.bf16.mxu0 0
    %847 = vmatpush1.bf16.msra.mxu0 0
    %848 = vmatprep.subr.bf16.mxu0 0
    %849 = vmatpush1.bf16.msra.mxu0 0
    %850 = vmatprep.subr.bf16.mxu0 0
    %851 = vmatpush1.bf16.msra.mxu0 0
    %852 = vmatprep.subr.bf16.mxu0 0
    %853 = vmatpush1.bf16.msra.mxu0 0
    %854 = vmatprep.subr.bf16.mxu0 0
    %855 = vmatpush1.bf16.msra.mxu0 0
    %856 = vmatprep.subr.bf16.mxu0 0
    %857 = vmatpush1.bf16.msra.mxu0 0
    %858 = vmatprep.mubr.bf16.mxu0 0
    %859 = vmatmul.mubr.bf16.gmra.mrb[0].mxu0 %v821
    %v860 = vpop.f32.mrb[0].mxu0
    %v861 = vadd.f32 0.0, %v860
    %v862 = vpop.f32.mrb[0].mxu0
    %v863 = vpop.f32.mrb[0].mxu0
    %v864 = vadd.f32 0.0, %v863
    %v865 = vpop.f32.mrb[0].mxu0
    %866 = vmatprep.mubr.bf16.mxu0 0
    %867 = vmatmul.mubr.bf16.gmra.mrb[0].mxu0 %v824
    %v868 = vpop.f32.mrb[0].mxu0
    %v869 = vadd.f32 0.0, %v868
    %v870 = vpop.f32.mrb[0].mxu0
    %v871 = vpop.f32.mrb[0].mxu0
    %v872 = vadd.f32 0.0, %v871
    %v873 = vpop.f32.mrb[0].mxu0
    %874 = vdwg.mxu0
    %875 = vrot.lane.b32.xlu0 %v522, 112
    %v876 = vpop.permute.xlu0 %875
    %877 = vrot.lane.b32.xlu0 %v523, 112
    %v878 = vpop.permute.xlu0 %877
    %879 = vrot.lane.b32.xlu0 %v522, 80
    %v880 = vpop.permute.xlu0 %879
    %881 = vrot.lane.b32.xlu0 %v523, 80
    %v882 = vpop.permute.xlu0 %881
    %v884 = vsel %vm530, %v876, 0
    %v887 = vsel %vm530, %v878, 0
    %v890 = vsel %vm530, %v880, 0
    %v893 = vsel %vm530, %v882, 0
    %895 = vmatprep.subr.bf16.mxu0 0
    %896 = vmatpush1.bf16.xpose.msra.mxu0 %v890
    %897 = vmatprep.subr.bf16.mxu0 0
    %898 = vmatpush1.bf16.xpose.msra.mxu0 %v893
    %899 = vmatprep.subr.bf16.mxu0 0
    %900 = vmatpush1.bf16.xpose.msra.mxu0 0
    %901 = vmatprep.subr.bf16.mxu0 0
    %902 = vmatpush1.bf16.xpose.msra.mxu0 0
    %903 = vmatprep.subr.bf16.mxu0 0
    %904 = vmatpush1.bf16.xpose.msra.mxu0 0
    %905 = vmatprep.subr.bf16.mxu0 0
    %906 = vmatpush1.bf16.xpose.msra.mxu0 0
    %907 = vmatprep.subr.bf16.mxu0 0
    %908 = vmatpush1.bf16.xpose.msra.mxu0 0
    %909 = vmatprep.subr.bf16.mxu0 0
    %910 = vmatpush1.bf16.xpose.msra.mxu0 0
    %911 = vmatprep.subr.bf16.mxu0 0
    %912 = vmatpush1.bf16.xpose.msra.mxu0 0
    %913 = vmatprep.subr.bf16.mxu0 0
    %914 = vmatpush1.bf16.xpose.msra.mxu0 0
    %915 = vmatprep.subr.bf16.mxu0 0
    %916 = vmatpush1.bf16.xpose.msra.mxu0 0
    %917 = vmatprep.subr.bf16.mxu0 0
    %918 = vmatpush1.bf16.xpose.msra.mxu0 0
    %919 = vmatprep.subr.bf16.mxu0 0
    %920 = vmatpush1.bf16.xpose.msra.mxu0 0
    %921 = vmatprep.subr.bf16.mxu0 0
    %922 = vmatpush1.bf16.xpose.msra.mxu0 0
    %923 = vmatprep.subr.bf16.mxu0 0
    %924 = vmatpush1.bf16.xpose.msra.mxu0 0
    %925 = vmatprep.subr.bf16.mxu0 0
    %926 = vmatpush1.bf16.xpose.msra.mxu0 0
    %927 = vmatprep.mubr.bf16.mxu0 0
    %928 = vmatmul.mubr.bf16.gmra.mrb[0].mxu0 %v884
    %v929 = vpop.f32.mrb[0].mxu0
    %v930 = vadd.f32 %v368, %v929
    %v931 = vpop.f32.mrb[0].mxu0
    %v932 = vpop.f32.mrb[0].mxu0
    %v933 = vadd.f32 %v369, %v932
    %v934 = vpop.f32.mrb[0].mxu0
    %935 = vmatprep.mubr.bf16.mxu0 0
    %936 = vmatmul.mubr.bf16.gmra.mrb[0].mxu0 %v887
    %v937 = vpop.f32.mrb[0].mxu0
    %v938 = vadd.f32 %v370, %v937
    %v939 = vpop.f32.mrb[0].mxu0
    %v940 = vpop.f32.mrb[0].mxu0
    %v941 = vadd.f32 %v371, %v940
    %v942 = vpop.f32.mrb[0].mxu0
    %943 = vdwg.mxu0
    %v944 = vsel %vm374, %v930, -inf
    %945 = vmax.xlane.f32.xlu0 %v944
    %v946 = vpop.xlane.xlu0 %945
    %v947 = vsel %vm374, %v933, -inf
    %948 = vmax.xlane.f32.xlu0 %v947
    %v949 = vpop.xlane.xlu0 %948
    %v950 = vsel %vm374, %v938, -inf
    %951 = vmax.xlane.f32.xlu0 %v950
    %v952 = vpop.xlane.xlu0 %951
    %v953 = vsel %vm374, %v941, -inf
    %954 = vmax.xlane.f32.xlu0 %v953
    %v955 = vpop.xlane.xlu0 %954
    %v956 = vsub.f32 %v930, %v946
    %v957 = vsub.f32 %v933, %v949
    %v958 = vsub.f32 %v938, %v952
    %v959 = vsub.f32 %v941, %v955
    %v960 = vmul.f32 %v956, 1.442695
    %v961 = vpow.pop %v960
    %v962 = vmul.f32 %v957, 1.442695
    %v963 = vpow.pop %v962
    %v964 = vmul.f32 %v958, 1.442695
    %v965 = vpow.pop %v964
    %v966 = vmul.f32 %v959, 1.442695
    %v967 = vpow.pop %v966
    %v968 = vsel %vm374, %v961, 0.0
    %969 = vadd.xlane.f32.xlu0 %v968
    %v970 = vpop.xlane.xlu0 %969
    %v971 = vsel %vm374, %v963, 0.0
    %972 = vadd.xlane.f32.xlu0 %v971
    %v973 = vpop.xlane.xlu0 %972
    %v974 = vsel %vm374, %v965, 0.0
    %975 = vadd.xlane.f32.xlu0 %v974
    %v976 = vpop.xlane.xlu0 %975
    %v977 = vsel %vm374, %v967, 0.0
    %978 = vadd.xlane.f32.xlu0 %v977
    %v979 = vpop.xlane.xlu0 %978
    %v980 = vrcp.pop %v970
    %v981 = vrcp.pop %v973
    %v982 = vrcp.pop %v976
    %v983 = vrcp.pop %v979
    %v984 = vmul.f32 %v961, %v980
    %v985 = vmul.f32 %v963, %v981
    %v986 = vmul.f32 %v965, %v982
    %v987 = vmul.f32 %v967, %v983
    %v988 = vpack.c.bf16 %v985, %v984
    %v989 = vpack.c.bf16 %v987, %v986
    %990 = vrot.lane.b32.xlu0 %v522, 48
    %v991 = vpop.permute.xlu0 %990
    %992 = vrot.lane.b32.xlu0 %v523, 48
    %v993 = vpop.permute.xlu0 %992
    %v997 = vsel %vm374, %v988, 0
    %v1000 = vsel %vm374, %v989, 0
    %1002 = vmatprep.subr.bf16.mxu0 0
    %1003 = vmatpush1.bf16.msra.mxu0 %v991
    %1004 = vmatprep.subr.bf16.mxu0 0
    %1005 = vmatpush1.bf16.msra.mxu0 %v993
    %1006 = vmatprep.subr.bf16.mxu0 0
    %1007 = vmatpush1.bf16.msra.mxu0 0
    %1008 = vmatprep.subr.bf16.mxu0 0
    %1009 = vmatpush1.bf16.msra.mxu0 0
    %1010 = vmatprep.subr.bf16.mxu0 0
    %1011 = vmatpush1.bf16.msra.mxu0 0
    %1012 = vmatprep.subr.bf16.mxu0 0
    %1013 = vmatpush1.bf16.msra.mxu0 0
    %1014 = vmatprep.subr.bf16.mxu0 0
    %1015 = vmatpush1.bf16.msra.mxu0 0
    %1016 = vmatprep.subr.bf16.mxu0 0
    %1017 = vmatpush1.bf16.msra.mxu0 0
    %1018 = vmatprep.subr.bf16.mxu0 0
    %1019 = vmatpush1.bf16.msra.mxu0 0
    %1020 = vmatprep.subr.bf16.mxu0 0
    %1021 = vmatpush1.bf16.msra.mxu0 0
    %1022 = vmatprep.subr.bf16.mxu0 0
    %1023 = vmatpush1.bf16.msra.mxu0 0
    %1024 = vmatprep.subr.bf16.mxu0 0
    %1025 = vmatpush1.bf16.msra.mxu0 0
    %1026 = vmatprep.subr.bf16.mxu0 0
    %1027 = vmatpush1.bf16.msra.mxu0 0
    %1028 = vmatprep.subr.bf16.mxu0 0
    %1029 = vmatpush1.bf16.msra.mxu0 0
    %1030 = vmatprep.subr.bf16.mxu0 0
    %1031 = vmatpush1.bf16.msra.mxu0 0
    %1032 = vmatprep.subr.bf16.mxu0 0
    %1033 = vmatpush1.bf16.msra.mxu0 0
    %1034 = vmatprep.mubr.bf16.mxu0 0
    %1035 = vmatmul.mubr.bf16.gmra.mrb[0].mxu0 %v997
    %v1036 = vpop.f32.mrb[0].mxu0
    %v1037 = vadd.f32 0.0, %v1036
    %v1038 = vpop.f32.mrb[0].mxu0
    %v1039 = vpop.f32.mrb[0].mxu0
    %v1040 = vadd.f32 0.0, %v1039
    %v1041 = vpop.f32.mrb[0].mxu0
    %1042 = vmatprep.mubr.bf16.mxu0 0
    %1043 = vmatmul.mubr.bf16.gmra.mrb[0].mxu0 %v1000
    %v1044 = vpop.f32.mrb[0].mxu0
    %v1045 = vadd.f32 0.0, %v1044
    %v1046 = vpop.f32.mrb[0].mxu0
    %v1047 = vpop.f32.mrb[0].mxu0
    %v1048 = vadd.f32 0.0, %v1047
    %v1049 = vpop.f32.mrb[0].mxu0
    %1050 = vdwg.mxu0
    %1051 = vrot.lane.b32.xlu0 %v522, 104
    %v1052 = vpop.permute.xlu0 %1051
    %1053 = vrot.lane.b32.xlu0 %v523, 104
    %v1054 = vpop.permute.xlu0 %1053
    %1055 = vrot.lane.b32.xlu0 %v522, 72
    %v1056 = vpop.permute.xlu0 %1055
    %1057 = vrot.lane.b32.xlu0 %v523, 72
    %v1058 = vpop.permute.xlu0 %1057
    %v1060 = vsel %vm530, %v1052, 0
    %v1063 = vsel %vm530, %v1054, 0
    %v1066 = vsel %vm530, %v1056, 0
    %v1069 = vsel %vm530, %v1058, 0
    %1071 = vmatprep.subr.bf16.mxu0 0
    %1072 = vmatpush1.bf16.xpose.msra.mxu0 %v1066
    %1073 = vmatprep.subr.bf16.mxu0 0
    %1074 = vmatpush1.bf16.xpose.msra.mxu0 %v1069
    %1075 = vmatprep.subr.bf16.mxu0 0
    %1076 = vmatpush1.bf16.xpose.msra.mxu0 0
    %1077 = vmatprep.subr.bf16.mxu0 0
    %1078 = vmatpush1.bf16.xpose.msra.mxu0 0
    %1079 = vmatprep.subr.bf16.mxu0 0
    %1080 = vmatpush1.bf16.xpose.msra.mxu0 0
    %1081 = vmatprep.subr.bf16.mxu0 0
    %1082 = vmatpush1.bf16.xpose.msra.mxu0 0
    %1083 = vmatprep.subr.bf16.mxu0 0
    %1084 = vmatpush1.bf16.xpose.msra.mxu0 0
    %1085 = vmatprep.subr.bf16.mxu0 0
    %1086 = vmatpush1.bf16.xpose.msra.mxu0 0
    %1087 = vmatprep.subr.bf16.mxu0 0
    %1088 = vmatpush1.bf16.xpose.msra.mxu0 0
    %1089 = vmatprep.subr.bf16.mxu0 0
    %1090 = vmatpush1.bf16.xpose.msra.mxu0 0
    %1091 = vmatprep.subr.bf16.mxu0 0
    %1092 = vmatpush1.bf16.xpose.msra.mxu0 0
    %1093 = vmatprep.subr.bf16.mxu0 0
    %1094 = vmatpush1.bf16.xpose.msra.mxu0 0
    %1095 = vmatprep.subr.bf16.mxu0 0
    %1096 = vmatpush1.bf16.xpose.msra.mxu0 0
    %1097 = vmatprep.subr.bf16.mxu0 0
    %1098 = vmatpush1.bf16.xpose.msra.mxu0 0
    %1099 = vmatprep.subr.bf16.mxu0 0
    %1100 = vmatpush1.bf16.xpose.msra.mxu0 0
    %1101 = vmatprep.subr.bf16.mxu0 0
    %1102 = vmatpush1.bf16.xpose.msra.mxu0 0
    %1103 = vmatprep.mubr.bf16.mxu0 0
    %1104 = vmatmul.mubr.bf16.gmra.mrb[0].mxu0 %v1060
    %v1105 = vpop.f32.mrb[0].mxu0
    %v1106 = vadd.f32 %v368, %v1105
    %v1107 = vpop.f32.mrb[0].mxu0
    %v1108 = vpop.f32.mrb[0].mxu0
    %v1109 = vadd.f32 %v369, %v1108
    %v1110 = vpop.f32.mrb[0].mxu0
    %1111 = vmatprep.mubr.bf16.mxu0 0
    %1112 = vmatmul.mubr.bf16.gmra.mrb[0].mxu0 %v1063
    %v1113 = vpop.f32.mrb[0].mxu0
    %v1114 = vadd.f32 %v370, %v1113
    %v1115 = vpop.f32.mrb[0].mxu0
    %v1116 = vpop.f32.mrb[0].mxu0
    %v1117 = vadd.f32 %v371, %v1116
    %v1118 = vpop.f32.mrb[0].mxu0
    %1119 = vdwg.mxu0
    %v1120 = vsel %vm374, %v1106, -inf
    %1121 = vmax.xlane.f32.xlu0 %v1120
    %v1122 = vpop.xlane.xlu0 %1121
    %v1123 = vsel %vm374, %v1109, -inf
    %1124 = vmax.xlane.f32.xlu0 %v1123
    %v1125 = vpop.xlane.xlu0 %1124
    %v1126 = vsel %vm374, %v1114, -inf
    %1127 = vmax.xlane.f32.xlu0 %v1126
    %v1128 = vpop.xlane.xlu0 %1127
    %v1129 = vsel %vm374, %v1117, -inf
    %1130 = vmax.xlane.f32.xlu0 %v1129
    %v1131 = vpop.xlane.xlu0 %1130
    %v1132 = vsub.f32 %v1106, %v1122
    %v1133 = vsub.f32 %v1109, %v1125
    %v1134 = vsub.f32 %v1114, %v1128
    %v1135 = vsub.f32 %v1117, %v1131
    %v1136 = vmul.f32 %v1132, 1.442695
    %v1137 = vpow.pop %v1136
    %v1138 = vmul.f32 %v1133, 1.442695
    %v1139 = vpow.pop %v1138
    %v1140 = vmul.f32 %v1134, 1.442695
    %v1141 = vpow.pop %v1140
    %v1142 = vmul.f32 %v1135, 1.442695
    %v1143 = vpow.pop %v1142
    %v1144 = vsel %vm374, %v1137, 0.0
    %1145 = vadd.xlane.f32.xlu0 %v1144
    %v1146 = vpop.xlane.xlu0 %1145
    %v1147 = vsel %vm374, %v1139, 0.0
    %1148 = vadd.xlane.f32.xlu0 %v1147
    %v1149 = vpop.xlane.xlu0 %1148
    %v1150 = vsel %vm374, %v1141, 0.0
    %1151 = vadd.xlane.f32.xlu0 %v1150
    %v1152 = vpop.xlane.xlu0 %1151
    %v1153 = vsel %vm374, %v1143, 0.0
    %1154 = vadd.xlane.f32.xlu0 %v1153
    %v1155 = vpop.xlane.xlu0 %1154
    %v1156 = vrcp.pop %v1146
    %v1157 = vrcp.pop %v1149
    %v1158 = vrcp.pop %v1152
    %v1159 = vrcp.pop %v1155
    %v1160 = vmul.f32 %v1137, %v1156
    %v1161 = vmul.f32 %v1139, %v1157
    %v1162 = vmul.f32 %v1141, %v1158
    %v1163 = vmul.f32 %v1143, %v1159
    %v1164 = vpack.c.bf16 %v1161, %v1160
    %v1165 = vpack.c.bf16 %v1163, %v1162
    %1166 = vrot.lane.b32.xlu0 %v522, 40
    %v1167 = vpop.permute.xlu0 %1166
    %1168 = vrot.lane.b32.xlu0 %v523, 40
    %v1169 = vpop.permute.xlu0 %1168
    %v1173 = vsel %vm374, %v1164, 0
    %v1176 = vsel %vm374, %v1165, 0
    %1178 = vmatprep.subr.bf16.mxu0 0
    %1179 = vmatpush1.bf16.msra.mxu0 %v1167
    %1180 = vmatprep.subr.bf16.mxu0 0
    %1181 = vmatpush1.bf16.msra.mxu0 %v1169
    %1182 = vmatprep.subr.bf16.mxu0 0
    %1183 = vmatpush1.bf16.msra.mxu0 0
    %1184 = vmatprep.subr.bf16.mxu0 0
    %1185 = vmatpush1.bf16.msra.mxu0 0
    %1186 = vmatprep.subr.bf16.mxu0 0
    %1187 = vmatpush1.bf16.msra.mxu0 0
    %1188 = vmatprep.subr.bf16.mxu0 0
    %1189 = vmatpush1.bf16.msra.mxu0 0
    %1190 = vmatprep.subr.bf16.mxu0 0
    %1191 = vmatpush1.bf16.msra.mxu0 0
    %1192 = vmatprep.subr.bf16.mxu0 0
    %1193 = vmatpush1.bf16.msra.mxu0 0
    %1194 = vmatprep.subr.bf16.mxu0 0
    %1195 = vmatpush1.bf16.msra.mxu0 0
    %1196 = vmatprep.subr.bf16.mxu0 0
    %1197 = vmatpush1.bf16.msra.mxu0 0
    %1198 = vmatprep.subr.bf16.mxu0 0
    %1199 = vmatpush1.bf16.msra.mxu0 0
    %1200 = vmatprep.subr.bf16.mxu0 0
    %1201 = vmatpush1.bf16.msra.mxu0 0
    %1202 = vmatprep.subr.bf16.mxu0 0
    %1203 = vmatpush1.bf16.msra.mxu0 0
    %1204 = vmatprep.subr.bf16.mxu0 0
    %1205 = vmatpush1.bf16.msra.mxu0 0
    %1206 = vmatprep.subr.bf16.mxu0 0
    %1207 = vmatpush1.bf16.msra.mxu0 0
    %1208 = vmatprep.subr.bf16.mxu0 0
    %1209 = vmatpush1.bf16.msra.mxu0 0
    %1210 = vmatprep.mubr.bf16.mxu0 0
    %1211 = vmatmul.mubr.bf16.gmra.mrb[0].mxu0 %v1173
    %v1212 = vpop.f32.mrb[0].mxu0
    %v1213 = vadd.f32 0.0, %v1212
    %v1214 = vpop.f32.mrb[0].mxu0
    %v1215 = vpop.f32.mrb[0].mxu0
    %v1216 = vadd.f32 0.0, %v1215
    %v1217 = vpop.f32.mrb[0].mxu0
    %1218 = vmatprep.mubr.bf16.mxu0 0
    %1219 = vmatmul.mubr.bf16.gmra.mrb[0].mxu0 %v1176
    %v1220 = vpop.f32.mrb[0].mxu0
    %v1221 = vadd.f32 0.0, %v1220
    %v1222 = vpop.f32.mrb[0].mxu0
    %v1223 = vpop.f32.mrb[0].mxu0
    %v1224 = vadd.f32 0.0, %v1223
    %v1225 = vpop.f32.mrb[0].mxu0
    %1226 = vdwg.mxu0
    %1231 = vrot.lane.b32.xlu0 %v861, 8
    %v1232 = vpop.permute.xlu0 %1231
    %1233 = vrot.lane.b32.xlu0 %v864, 8
    %v1234 = vpop.permute.xlu0 %1233
    %1235 = vrot.lane.b32.xlu0 %v869, 8
    %v1236 = vpop.permute.xlu0 %1235
    %1237 = vrot.lane.b32.xlu0 %v872, 8
    %v1238 = vpop.permute.xlu0 %1237
    %1247 = vrot.lane.b32.xlu0 %v1037, 16
    %v1248 = vpop.permute.xlu0 %1247
    %1249 = vrot.lane.b32.xlu0 %v1040, 16
    %v1250 = vpop.permute.xlu0 %1249
    %1251 = vrot.lane.b32.xlu0 %v1045, 16
    %v1252 = vpop.permute.xlu0 %1251
    %1253 = vrot.lane.b32.xlu0 %v1048, 16
    %v1254 = vpop.permute.xlu0 %1253
    %1263 = vrot.lane.b32.xlu0 %v1213, 24
    %v1264 = vpop.permute.xlu0 %1263
    %1265 = vrot.lane.b32.xlu0 %v1216, 24
    %v1266 = vpop.permute.xlu0 %1265
    %1267 = vrot.lane.b32.xlu0 %v1221, 24
    %v1268 = vpop.permute.xlu0 %1267
    %1269 = vrot.lane.b32.xlu0 %v1224, 24
    %v1270 = vpop.permute.xlu0 %1269
    %v1275 = vsel %vm530, %v685, %v1232
    %v1276 = vsel %vm530, %v688, %v1234
    %v1277 = vsel %vm530, %v693, %v1236
    %v1278 = vsel %vm530, %v696, %v1238
    %vm1279 = vcmask 130048
    %v1280 = vsel %vm1279, %v1275, %v1248
    %v1281 = vsel %vm1279, %v1276, %v1250
    %v1282 = vsel %vm1279, %v1277, %v1252
    %v1283 = vsel %vm1279, %v1278, %v1254
    %vm1284 = vcmask 195584
    %v1285 = vsel %vm1284, %v1280, %v1264
    %v1286 = vsel %vm1284, %v1281, %v1266
    %v1287 = vsel %vm1284, %v1282, %v1268
    %v1288 = vsel %vm1284, %v1283, %v1270
    %v1289 = vpack.c.bf16 %v1286, %v1285
    %v1290 = vpack.c.bf16 %v1288, %v1287
    %v1291 = vld [vmem:[%s3 + $0xc0] sm:$0xf]
    %v1292 = vld [vmem:[%s3 + $0xc4] sm:$0xf]
    %v1293 = vld [vmem:[%s3 + $0xc8] sm:$0xf]
    %v1294 = vld [vmem:[%s3 + $0xcc] sm:$0xf]
    %v1299 = vunpack.c.l.b16 %v1291
    %v1300 = vunpack.c.l.b16 %v1292
    %v1301 = vunpack.c.l.b16 %v1293
    %v1302 = vunpack.c.l.b16 %v1294
    %v1303 = vpack.c.b16 %v1300, %v1299
    %v1304 = vpack.c.b16 %v1302, %v1301
    %v1308 = vsel %vm374, %v1289, 0
    %v1311 = vsel %vm374, %v1290, 0
    %1313 = vmatprep.subr.bf16.mxu0 0
    %1314 = vmatpush1.bf16.msra.mxu0 %v1303
    %1315 = vmatprep.subr.bf16.mxu0 0
    %1316 = vmatpush1.bf16.msra.mxu0 %v1304
    %1317 = vmatprep.subr.bf16.mxu0 0
    %1318 = vmatpush1.bf16.msra.mxu0 0
    %1319 = vmatprep.subr.bf16.mxu0 0
    %1320 = vmatpush1.bf16.msra.mxu0 0
    %1321 = vmatprep.subr.bf16.mxu0 0
    %1322 = vmatpush1.bf16.msra.mxu0 0
    %1323 = vmatprep.subr.bf16.mxu0 0
    %1324 = vmatpush1.bf16.msra.mxu0 0
    %1325 = vmatprep.subr.bf16.mxu0 0
    %1326 = vmatpush1.bf16.msra.mxu0 0
    %1327 = vmatprep.subr.bf16.mxu0 0
    %1328 = vmatpush1.bf16.msra.mxu0 0
    %1329 = vmatprep.subr.bf16.mxu0 0
    %1330 = vmatpush1.bf16.msra.mxu0 0
    %1331 = vmatprep.subr.bf16.mxu0 0
    %1332 = vmatpush1.bf16.msra.mxu0 0
    %1333 = vmatprep.subr.bf16.mxu0 0
    %1334 = vmatpush1.bf16.msra.mxu0 0
    %1335 = vmatprep.subr.bf16.mxu0 0
    %1336 = vmatpush1.bf16.msra.mxu0 0
    %1337 = vmatprep.subr.bf16.mxu0 0
    %1338 = vmatpush1.bf16.msra.mxu0 0
    %1339 = vmatprep.subr.bf16.mxu0 0
    %1340 = vmatpush1.bf16.msra.mxu0 0
    %1341 = vmatprep.subr.bf16.mxu0 0
    %1342 = vmatpush1.bf16.msra.mxu0 0
    %1343 = vmatprep.subr.bf16.mxu0 0
    %1344 = vmatpush1.bf16.msra.mxu0 0
    %1345 = vmatprep.mubr.bf16.mxu0 0
    %1346 = vmatmul.mubr.bf16.gmra.mrb[0].mxu0 %v1308
    %v1347 = vpop.f32.mrb[0].mxu0
    %v1348 = vadd.f32 0.0, %v1347
    %v1349 = vpop.f32.mrb[0].mxu0
    %v1350 = vpop.f32.mrb[0].mxu0
    %v1351 = vadd.f32 0.0, %v1350
    %v1352 = vpop.f32.mrb[0].mxu0
    %1353 = vmatprep.mubr.bf16.mxu0 0
    %1354 = vmatmul.mubr.bf16.gmra.mrb[0].mxu0 %v1311
    %v1355 = vpop.f32.mrb[0].mxu0
    %v1356 = vadd.f32 0.0, %v1355
    %v1357 = vpop.f32.mrb[0].mxu0
    %v1358 = vpop.f32.mrb[0].mxu0
    %v1359 = vadd.f32 0.0, %v1358
    %v1360 = vpop.f32.mrb[0].mxu0
    %1361 = vdwg.mxu0
    %v1362 = vadd.f32 %v354, %v1348
    %v1363 = vadd.f32 %v357, %v1351
    %v1364 = vadd.f32 %v362, %v1356
    %v1365 = vadd.f32 %v365, %v1359
    %v1366 = vld [vmem:[%s6 + $0x24] sm:$0x1]
    %v1367 = vlaneseq
    %v1368 = vshrl.u32 %v1367, 7
    %v1369 = vsub.s32 0, %v1368
    %v1370 = vrot.slane %v1366, %v1369
    %v1371 = vadd.f32 %v1362, %v1370
    %v1372 = vadd.f32 %v1363, %v1370
    %v1373 = vadd.f32 %v1364, %v1370
    %v1374 = vadd.f32 %v1365, %v1370
    %v1375 = vld [vmem:[%s6 + $0x26] sm:$0x1]
    %v1376 = vld [vmem:[%s6 + $0x27] sm:$0x1]
    %v1377 = vsel %vm374, %v1371, 0.0
    %1378 = vadd.xlane.f32.xlu0 %v1377
    %v1379 = vpop.xlane.xlu0 %1378
    %v1380 = vsel %vm374, %v1372, 0.0
    %1381 = vadd.xlane.f32.xlu0 %v1380
    %v1382 = vpop.xlane.xlu0 %1381
    %v1383 = vsel %vm374, %v1373, 0.0
    %1384 = vadd.xlane.f32.xlu0 %v1383
    %v1385 = vpop.xlane.xlu0 %1384
    %v1386 = vsel %vm374, %v1374, 0.0
    %1387 = vadd.xlane.f32.xlu0 %v1386
    %v1388 = vpop.xlane.xlu0 %1387
    %v1389 = vmul.f32 %v1379, %v387
    %v1390 = vmul.f32 %v1382, %v387
    %v1391 = vmul.f32 %v1385, %v387
    %v1392 = vmul.f32 %v1388, %v387
    %v1393 = vsub.f32 %v1371, %v1389
    %v1394 = vsub.f32 %v1372, %v1390
    %v1395 = vsub.f32 %v1373, %v1391
    %v1396 = vsub.f32 %v1374, %v1392
    %v1397 = vmul.f32 %v1393, %v1393
    %v1398 = vmul.f32 %v1394, %v1394
    %v1399 = vmul.f32 %v1395, %v1395
    %v1400 = vmul.f32 %v1396, %v1396
    %v1401 = vsel %vm374, %v1397, 0.0
    %1402 = vadd.xlane.f32.xlu0 %v1401
    %v1403 = vpop.xlane.xlu0 %1402
    %v1404 = vsel %vm374, %v1398, 0.0
    %1405 = vadd.xlane.f32.xlu0 %v1404
    %v1406 = vpop.xlane.xlu0 %1405
    %v1407 = vsel %vm374, %v1399, 0.0
    %1408 = vadd.xlane.f32.xlu0 %v1407
    %v1409 = vpop.xlane.xlu0 %1408
    %v1410 = vsel %vm374, %v1400, 0.0
    %1411 = vadd.xlane.f32.xlu0 %v1410
    %v1412 = vpop.xlane.xlu0 %1411
    %v1413 = vmul.f32 %v1403, %v387
    %v1414 = vmul.f32 %v1406, %v387
    %v1415 = vmul.f32 %v1409, %v387
    %v1416 = vmul.f32 %v1412, %v387
    %v1417 = vadd.f32 %v1413, 1e-06
    %v1418 = vadd.f32 %v1414, 1e-06
    %v1419 = vadd.f32 %v1415, 1e-06
    %v1420 = vadd.f32 %v1416, 1e-06
    %v1421 = vrsqrt.pop %v1417
    %v1422 = vrsqrt.pop %v1418
    %v1423 = vrsqrt.pop %v1419
    %v1424 = vrsqrt.pop %v1420
    %v1425 = vmul.f32 %v1393, %v1421
    %v1426 = vmul.f32 %v1394, %v1422
    %v1427 = vmul.f32 %v1395, %v1423
    %v1428 = vmul.f32 %v1396, %v1424
    %v1429 = vlaneseq
    %v1430 = vshrl.u32 %v1429, 7
    %v1431 = vsub.s32 0, %v1430
    %v1432 = vrot.slane %v1375, %v1431
    %v1433 = vmul.f32 %v1425, %v1432
    %v1434 = vmul.f32 %v1426, %v1432
    %v1435 = vmul.f32 %v1427, %v1432
    %v1436 = vmul.f32 %v1428, %v1432
    %v1437 = vlaneseq
    %v1438 = vshrl.u32 %v1437, 7
    %v1439 = vsub.s32 0, %v1438
    %v1440 = vrot.slane %v1376, %v1439
    %v1441 = vadd.f32 %v1433, %v1440
    %v1442 = vadd.f32 %v1434, %v1440
    %v1443 = vadd.f32 %v1435, %v1440
    %v1444 = vadd.f32 %v1436, %v1440
    %v1445 = vpack.c.bf16 %v1442, %v1441
    %v1446 = vpack.c.bf16 %v1444, %v1443
    %v1447 = vld [vmem:[%s5] sm:$0xf]
    %v1448 = vld [vmem:[%s5 + $0x4] sm:$0xf]
    %v1449 = vld [vmem:[%s5 + $0x8] sm:$0xf]
    %v1450 = vld [vmem:[%s5 + $0xc] sm:$0xf]
    %v1451 = vld [vmem:[%s7 + $0x4] sm:$0x1]
    %v1452 = vlaneseq
    %v1453 = vshrl.u32 %v1452, 7
    %v1454 = vsub.s32 0, %v1453
    %v1455 = vrot.slane %v1451, %v1454
    %v1460 = vunpack.c.l.b16 %v1447
    %v1461 = vunpack.c.l.b16 %v1448
    %v1462 = vunpack.c.l.b16 %v1449
    %v1463 = vunpack.c.l.b16 %v1450
    %v1464 = vpack.c.b16 %v1461, %v1460
    %v1465 = vpack.c.b16 %v1463, %v1462
    %v1469 = vsel %vm374, %v1445, 0
    %v1472 = vsel %vm374, %v1446, 0
    %1474 = vmatprep.subr.bf16.mxu0 0
    %1475 = vmatpush1.bf16.msra.mxu0 %v1464
    %1476 = vmatprep.subr.bf16.mxu0 0
    %1477 = vmatpush1.bf16.msra.mxu0 %v1465
    %1478 = vmatprep.subr.bf16.mxu0 0
    %1479 = vmatpush1.bf16.msra.mxu0 0
    %1480 = vmatprep.subr.bf16.mxu0 0
    %1481 = vmatpush1.bf16.msra.mxu0 0
    %1482 = vmatprep.subr.bf16.mxu0 0
    %1483 = vmatpush1.bf16.msra.mxu0 0
    %1484 = vmatprep.subr.bf16.mxu0 0
    %1485 = vmatpush1.bf16.msra.mxu0 0
    %1486 = vmatprep.subr.bf16.mxu0 0
    %1487 = vmatpush1.bf16.msra.mxu0 0
    %1488 = vmatprep.subr.bf16.mxu0 0
    %1489 = vmatpush1.bf16.msra.mxu0 0
    %1490 = vmatprep.subr.bf16.mxu0 0
    %1491 = vmatpush1.bf16.msra.mxu0 0
    %1492 = vmatprep.subr.bf16.mxu0 0
    %1493 = vmatpush1.bf16.msra.mxu0 0
    %1494 = vmatprep.subr.bf16.mxu0 0
    %1495 = vmatpush1.bf16.msra.mxu0 0
    %1496 = vmatprep.subr.bf16.mxu0 0
    %1497 = vmatpush1.bf16.msra.mxu0 0
    %1498 = vmatprep.subr.bf16.mxu0 0
    %1499 = vmatpush1.bf16.msra.mxu0 0
    %1500 = vmatprep.subr.bf16.mxu0 0
    %1501 = vmatpush1.bf16.msra.mxu0 0
    %1502 = vmatprep.subr.bf16.mxu0 0
    %1503 = vmatpush1.bf16.msra.mxu0 0
    %1504 = vmatprep.subr.bf16.mxu0 0
    %1505 = vmatpush1.bf16.msra.mxu0 0
    %1506 = vmatprep.mubr.bf16.mxu0 0
    %1507 = vmatmul.mubr.bf16.gmra.mrb[0].mxu0 %v1469
    %v1508 = vpop.f32.mrb[0].mxu0
    %v1509 = vadd.f32 %v1455, %v1508
    %v1510 = vpop.f32.mrb[0].mxu0
    %v1511 = vpop.f32.mrb[0].mxu0
    %v1512 = vadd.f32 %v1455, %v1511
    %v1513 = vpop.f32.mrb[0].mxu0
    %1514 = vmatprep.mubr.bf16.mxu0 0
    %1515 = vmatmul.mubr.bf16.gmra.mrb[0].mxu0 %v1472
    %v1516 = vpop.f32.mrb[0].mxu0
    %v1517 = vadd.f32 %v1455, %v1516
    %v1518 = vpop.f32.mrb[0].mxu0
    %v1519 = vpop.f32.mrb[0].mxu0
    %v1520 = vadd.f32 %v1455, %v1519
    %v1521 = vpop.f32.mrb[0].mxu0
    %1522 = vdwg.mxu0
    %v1523 = vmul.f32 %v1509, %v1509
    %v1524 = vmul.f32 %v1512, %v1512
    %v1525 = vmul.f32 %v1517, %v1517
    %v1526 = vmul.f32 %v1520, %v1520
    %v1527 = vmul.f32 %v1509, %v1523
    %v1528 = vmul.f32 %v1512, %v1524
    %v1529 = vmul.f32 %v1517, %v1525
    %v1530 = vmul.f32 %v1520, %v1526
    %v1531 = vmul.f32 %v1527, 0.044715
    %v1532 = vmul.f32 %v1528, 0.044715
    %v1533 = vmul.f32 %v1529, 0.044715
    %v1534 = vmul.f32 %v1530, 0.044715
    %v1535 = vadd.f32 %v1509, %v1531
    %v1536 = vadd.f32 %v1512, %v1532
    %v1537 = vadd.f32 %v1517, %v1533
    %v1538 = vadd.f32 %v1520, %v1534
    %v1539 = vmul.f32 %v1535, 0.7978846
    %v1540 = vmul.f32 %v1536, 0.7978846
    %v1541 = vmul.f32 %v1537, 0.7978846
    %v1542 = vmul.f32 %v1538, 0.7978846
    %v1543 = vtanh.pop %v1539
    %v1544 = vtanh.pop %v1540
    %v1545 = vtanh.pop %v1541
    %v1546 = vtanh.pop %v1542
    %v1547 = vadd.f32 %v1543, 1.0
    %v1548 = vadd.f32 %v1544, 1.0
    %v1549 = vadd.f32 %v1545, 1.0
    %v1550 = vadd.f32 %v1546, 1.0
    %v1551 = vmul.f32 %v1547, 0.5
    %v1552 = vmul.f32 %v1548, 0.5
    %v1553 = vmul.f32 %v1549, 0.5
    %v1554 = vmul.f32 %v1550, 0.5
    %v1555 = vmul.f32 %v1509, %v1551
    %v1556 = vmul.f32 %v1512, %v1552
    %v1557 = vmul.f32 %v1517, %v1553
    %v1558 = vmul.f32 %v1520, %v1554
    %v1559 = vpack.c.bf16 %v1556, %v1555
    %v1560 = vpack.c.bf16 %v1558, %v1557
    %v1561 = vld [vmem:[%s3 + $0xe0] sm:$0xf]
    %v1562 = vld [vmem:[%s3 + $0xe4] sm:$0xf]
    %v1563 = vld [vmem:[%s3 + $0xe8] sm:$0xf]
    %v1564 = vld [vmem:[%s3 + $0xec] sm:$0xf]
    %v1565 = vld [vmem:[%s3 + $0xf0] sm:$0xf]
    %v1566 = vld [vmem:[%s3 + $0xf4] sm:$0xf]
    %v1567 = vld [vmem:[%s3 + $0xf8] sm:$0xf]
    %v1568 = vld [vmem:[%s3 + $0xfc] sm:$0xf]
    %v1577 = vunpack.c.l.b16 %v1561
    %v1578 = vunpack.c.l.b16 %v1562
    %v1579 = vunpack.c.l.b16 %v1563
    %v1580 = vunpack.c.l.b16 %v1564
    %v1581 = vunpack.c.l.b16 %v1565
    %v1582 = vunpack.c.l.b16 %v1566
    %v1583 = vunpack.c.l.b16 %v1567
    %v1584 = vunpack.c.l.b16 %v1568
    %v1585 = vpack.c.b16 %v1578, %v1577
    %v1586 = vpack.c.b16 %v1580, %v1579
    %v1587 = vpack.c.b16 %v1582, %v1581
    %v1588 = vpack.c.b16 %v1584, %v1583
    %vm1593 = vcmask 523264
    %v1595 = vsel %vm1593, %v1559, 0
    %v1598 = vsel %vm1593, %v1560, 0
    %1600 = vmatprep.subr.bf16.mxu0 0
    %1601 = vmatpush1.bf16.msra.mxu0 %v1585
    %1602 = vmatprep.subr.bf16.mxu0 0
    %1603 = vmatpush1.bf16.msra.mxu0 %v1586
    %1604 = vmatprep.subr.bf16.mxu0 0
    %1605 = vmatpush1.bf16.msra.mxu0 %v1587
    %1606 = vmatprep.subr.bf16.mxu0 0
    %1607 = vmatpush1.bf16.msra.mxu0 %v1588
    %1608 = vmatprep.subr.bf16.mxu0 0
    %1609 = vmatpush1.bf16.msra.mxu0 0
    %1610 = vmatprep.subr.bf16.mxu0 0
    %1611 = vmatpush1.bf16.msra.mxu0 0
    %1612 = vmatprep.subr.bf16.mxu0 0
    %1613 = vmatpush1.bf16.msra.mxu0 0
    %1614 = vmatprep.subr.bf16.mxu0 0
    %1615 = vmatpush1.bf16.msra.mxu0 0
    %1616 = vmatprep.subr.bf16.mxu0 0
    %1617 = vmatpush1.bf16.msra.mxu0 0
    %1618 = vmatprep.subr.bf16.mxu0 0
    %1619 = vmatpush1.bf16.msra.mxu0 0
    %1620 = vmatprep.subr.bf16.mxu0 0
    %1621 = vmatpush1.bf16.msra.mxu0 0
    %1622 = vmatprep.subr.bf16.mxu0 0
    %1623 = vmatpush1.bf16.msra.mxu0 0
    %1624 = vmatprep.subr.bf16.mxu0 0
    %1625 = vmatpush1.bf16.msra.mxu0 0
    %1626 = vmatprep.subr.bf16.mxu0 0
    %1627 = vmatpush1.bf16.msra.mxu0 0
    %1628 = vmatprep.subr.bf16.mxu0 0
    %1629 = vmatpush1.bf16.msra.mxu0 0
    %1630 = vmatprep.subr.bf16.mxu0 0
    %1631 = vmatpush1.bf16.msra.mxu0 0
    %1632 = vmatprep.mubr.bf16.mxu0 0
    %1633 = vmatmul.mubr.bf16.gmra.mrb[0].mxu0 %v1595
    %v1634 = vpop.f32.mrb[0].mxu0
    %v1635 = vadd.f32 0.0, %v1634
    %v1636 = vpop.f32.mrb[0].mxu0
    %v1637 = vpop.f32.mrb[0].mxu0
    %v1638 = vadd.f32 0.0, %v1637
    %v1639 = vpop.f32.mrb[0].mxu0
    %1640 = vmatprep.mubr.bf16.mxu0 0
    %1641 = vmatmul.mubr.bf16.gmra.mrb[0].mxu0 %v1598
    %v1642 = vpop.f32.mrb[0].mxu0
    %v1643 = vadd.f32 0.0, %v1642
    %v1644 = vpop.f32.mrb[0].mxu0
    %v1645 = vpop.f32.mrb[0].mxu0
    %v1646 = vadd.f32 0.0, %v1645
    %v1647 = vpop.f32.mrb[0].mxu0
    %1648 = vdwg.mxu0
    %v1649 = vadd.f32 %v1371, %v1635
    %v1650 = vadd.f32 %v1372, %v1638
    %v1651 = vadd.f32 %v1373, %v1643
    %v1652 = vadd.f32 %v1374, %v1646
    %v1653 = vld [vmem:[%s6 + $0x2a] sm:$0x1]
    %v1654 = vlaneseq
    %v1655 = vshrl.u32 %v1654, 7
    %v1656 = vsub.s32 0, %v1655
    %v1657 = vrot.slane %v1653, %v1656
    %v1658 = vadd.f32 %v1649, %v1657
    %v1659 = vadd.f32 %v1650, %v1657
    %v1660 = vadd.f32 %v1651, %v1657
    %v1661 = vadd.f32 %v1652, %v1657
    %v1662 = vld [vmem:[%s6 + $0x22] sm:$0x1]
    %v1663 = vld [vmem:[%s6 + $0x23] sm:$0x1]
    %v1664 = vsel %vm374, %v1658, 0.0
    %1665 = vadd.xlane.f32.xlu0 %v1664
    %v1666 = vpop.xlane.xlu0 %1665
    %v1667 = vsel %vm374, %v1659, 0.0
    %1668 = vadd.xlane.f32.xlu0 %v1667
    %v1669 = vpop.xlane.xlu0 %1668
    %v1670 = vsel %vm374, %v1660, 0.0
    %1671 = vadd.xlane.f32.xlu0 %v1670
    %v1672 = vpop.xlane.xlu0 %1671
    %v1673 = vsel %vm374, %v1661, 0.0
    %1674 = vadd.xlane.f32.xlu0 %v1673
    %v1675 = vpop.xlane.xlu0 %1674
    %v1676 = vmul.f32 %v1666, %v387
    %v1677 = vmul.f32 %v1669, %v387
    %v1678 = vmul.f32 %v1672, %v387
    %v1679 = vmul.f32 %v1675, %v387
    %v1680 = vsub.f32 %v1658, %v1676
    %v1681 = vsub.f32 %v1659, %v1677
    %v1682 = vsub.f32 %v1660, %v1678
    %v1683 = vsub.f32 %v1661, %v1679
    %v1684 = vmul.f32 %v1680, %v1680
    %v1685 = vmul.f32 %v1681, %v1681
    %v1686 = vmul.f32 %v1682, %v1682
    %v1687 = vmul.f32 %v1683, %v1683
    %v1688 = vsel %vm374, %v1684, 0.0
    %1689 = vadd.xlane.f32.xlu0 %v1688
    %v1690 = vpop.xlane.xlu0 %1689
    %v1691 = vsel %vm374, %v1685, 0.0
    %1692 = vadd.xlane.f32.xlu0 %v1691
    %v1693 = vpop.xlane.xlu0 %1692
    %v1694 = vsel %vm374, %v1686, 0.0
    %1695 = vadd.xlane.f32.xlu0 %v1694
    %v1696 = vpop.xlane.xlu0 %1695
    %v1697 = vsel %vm374, %v1687, 0.0
    %1698 = vadd.xlane.f32.xlu0 %v1697
    %v1699 = vpop.xlane.xlu0 %1698
    %v1700 = vmul.f32 %v1690, %v387
    %v1701 = vmul.f32 %v1693, %v387
    %v1702 = vmul.f32 %v1696, %v387
    %v1703 = vmul.f32 %v1699, %v387
    %v1704 = vadd.f32 %v1700, 1e-06
    %v1705 = vadd.f32 %v1701, 1e-06
    %v1706 = vadd.f32 %v1702, 1e-06
    %v1707 = vadd.f32 %v1703, 1e-06
    %v1708 = vrsqrt.pop %v1704
    %v1709 = vrsqrt.pop %v1705
    %v1710 = vrsqrt.pop %v1706
    %v1711 = vrsqrt.pop %v1707
    %v1712 = vmul.f32 %v1680, %v1708
    %v1713 = vmul.f32 %v1681, %v1709
    %v1714 = vmul.f32 %v1682, %v1710
    %v1715 = vmul.f32 %v1683, %v1711
    %v1716 = vlaneseq
    %v1717 = vshrl.u32 %v1716, 7
    %v1718 = vsub.s32 0, %v1717
    %v1719 = vrot.slane %v1662, %v1718
    %v1720 = vmul.f32 %v1712, %v1719
    %v1721 = vmul.f32 %v1713, %v1719
    %v1722 = vmul.f32 %v1714, %v1719
    %v1723 = vmul.f32 %v1715, %v1719
    %v1724 = vlaneseq
    %v1725 = vshrl.u32 %v1724, 7
    %v1726 = vsub.s32 0, %v1725
    %v1727 = vrot.slane %v1663, %v1726
    %v1728 = vadd.f32 %v1720, %v1727
    %v1729 = vadd.f32 %v1721, %v1727
    %v1730 = vadd.f32 %v1722, %v1727
    %v1731 = vadd.f32 %v1723, %v1727
    %v1732 = vpack.c.bf16 %v1729, %v1728
    %v1733 = vpack.c.bf16 %v1731, %v1730
    %v1734 = vld [vmem:[%s4 + $0x10] sm:$0xf]
    %v1735 = vld [vmem:[%s4 + $0x14] sm:$0xf]
    %v1736 = vld [vmem:[%s4 + $0x18] sm:$0xf]
    %v1737 = vld [vmem:[%s4 + $0x1c] sm:$0xf]
    %v1738 = vld [vmem:[%s7 + $0x1] sm:$0x1]
    %v1739 = vlaneseq
    %v1740 = vshrl.u32 %v1739, 7
    %v1741 = vsub.s32 0, %v1740
    %v1742 = vrot.slane %v1738, %v1741
    %v1747 = vunpack.c.l.b16 %v1734
    %v1748 = vunpack.c.l.b16 %v1735
    %v1749 = vunpack.c.l.b16 %v1736
    %v1750 = vunpack.c.l.b16 %v1737
    %v1751 = vpack.c.b16 %v1748, %v1747
    %v1752 = vpack.c.b16 %v1750, %v1749
    %v1756 = vsel %vm374, %v1732, 0
    %v1759 = vsel %vm374, %v1733, 0
    %1761 = vmatprep.subr.bf16.mxu0 0
    %1762 = vmatpush1.bf16.msra.mxu0 %v1751
    %1763 = vmatprep.subr.bf16.mxu0 0
    %1764 = vmatpush1.bf16.msra.mxu0 %v1752
    %1765 = vmatprep.subr.bf16.mxu0 0
    %1766 = vmatpush1.bf16.msra.mxu0 0
    %1767 = vmatprep.subr.bf16.mxu0 0
    %1768 = vmatpush1.bf16.msra.mxu0 0
    %1769 = vmatprep.subr.bf16.mxu0 0
    %1770 = vmatpush1.bf16.msra.mxu0 0
    %1771 = vmatprep.subr.bf16.mxu0 0
    %1772 = vmatpush1.bf16.msra.mxu0 0
    %1773 = vmatprep.subr.bf16.mxu0 0
    %1774 = vmatpush1.bf16.msra.mxu0 0
    %1775 = vmatprep.subr.bf16.mxu0 0
    %1776 = vmatpush1.bf16.msra.mxu0 0
    %1777 = vmatprep.subr.bf16.mxu0 0
    %1778 = vmatpush1.bf16.msra.mxu0 0
    %1779 = vmatprep.subr.bf16.mxu0 0
    %1780 = vmatpush1.bf16.msra.mxu0 0
    %1781 = vmatprep.subr.bf16.mxu0 0
    %1782 = vmatpush1.bf16.msra.mxu0 0
    %1783 = vmatprep.subr.bf16.mxu0 0
    %1784 = vmatpush1.bf16.msra.mxu0 0
    %1785 = vmatprep.subr.bf16.mxu0 0
    %1786 = vmatpush1.bf16.msra.mxu0 0
    %1787 = vmatprep.subr.bf16.mxu0 0
    %1788 = vmatpush1.bf16.msra.mxu0 0
    %1789 = vmatprep.subr.bf16.mxu0 0
    %1790 = vmatpush1.bf16.msra.mxu0 0
    %1791 = vmatprep.subr.bf16.mxu0 0
    %1792 = vmatpush1.bf16.msra.mxu0 0
    %1793 = vmatprep.mubr.bf16.mxu0 0
    %1794 = vmatmul.mubr.bf16.gmra.mrb[0].mxu0 %v1756
    %v1795 = vpop.f32.mrb[0].mxu0
    %v1796 = vadd.f32 %v1742, %v1795
    %v1797 = vpop.f32.mrb[0].mxu0
    %v1798 = vpop.f32.mrb[0].mxu0
    %v1799 = vadd.f32 %v1742, %v1798
    %v1800 = vpop.f32.mrb[0].mxu0
    %1801 = vmatprep.mubr.bf16.mxu0 0
    %1802 = vmatmul.mubr.bf16.gmra.mrb[0].mxu0 %v1759
    %v1803 = vpop.f32.mrb[0].mxu0
    %v1804 = vadd.f32 %v1742, %v1803
    %v1805 = vpop.f32.mrb[0].mxu0
    %v1806 = vpop.f32.mrb[0].mxu0
    %v1807 = vadd.f32 %v1742, %v1806
    %v1808 = vpop.f32.mrb[0].mxu0
    %1809 = vdwg.mxu0
    %v1810 = vpack.c.bf16 %v1799, %v1796
    %v1811 = vpack.c.bf16 %v1807, %v1804
    %1814 = vrot.lane.b32.xlu0 %v1810, 96
    %v1815 = vpop.permute.xlu0 %1814
    %1816 = vrot.lane.b32.xlu0 %v1811, 96
    %v1817 = vpop.permute.xlu0 %1816
    %v1819 = vsel %vm530, %v1810, 0
    %v1822 = vsel %vm530, %v1811, 0
    %v1825 = vsel %vm530, %v1815, 0
    %v1828 = vsel %vm530, %v1817, 0
    %1830 = vmatprep.subr.bf16.mxu0 0
    %1831 = vmatpush1.bf16.xpose.msra.mxu0 %v1825
    %1832 = vmatprep.subr.bf16.mxu0 0
    %1833 = vmatpush1.bf16.xpose.msra.mxu0 %v1828
    %1834 = vmatprep.subr.bf16.mxu0 0
    %1835 = vmatpush1.bf16.xpose.msra.mxu0 0
    %1836 = vmatprep.subr.bf16.mxu0 0
    %1837 = vmatpush1.bf16.xpose.msra.mxu0 0
    %1838 = vmatprep.subr.bf16.mxu0 0
    %1839 = vmatpush1.bf16.xpose.msra.mxu0 0
    %1840 = vmatprep.subr.bf16.mxu0 0
    %1841 = vmatpush1.bf16.xpose.msra.mxu0 0
    %1842 = vmatprep.subr.bf16.mxu0 0
    %1843 = vmatpush1.bf16.xpose.msra.mxu0 0
    %1844 = vmatprep.subr.bf16.mxu0 0
    %1845 = vmatpush1.bf16.xpose.msra.mxu0 0
    %1846 = vmatprep.subr.bf16.mxu0 0
    %1847 = vmatpush1.bf16.xpose.msra.mxu0 0
    %1848 = vmatprep.subr.bf16.mxu0 0
    %1849 = vmatpush1.bf16.xpose.msra.mxu0 0
    %1850 = vmatprep.subr.bf16.mxu0 0
    %1851 = vmatpush1.bf16.xpose.msra.mxu0 0
    %1852 = vmatprep.subr.bf16.mxu0 0
    %1853 = vmatpush1.bf16.xpose.msra.mxu0 0
    %1854 = vmatprep.subr.bf16.mxu0 0
    %1855 = vmatpush1.bf16.xpose.msra.mxu0 0
    %1856 = vmatprep.subr.bf16.mxu0 0
    %1857 = vmatpush1.bf16.xpose.msra.mxu0 0
    %1858 = vmatprep.subr.bf16.mxu0 0
    %1859 = vmatpush1.bf16.xpose.msra.mxu0 0
    %1860 = vmatprep.subr.bf16.mxu0 0
    %1861 = vmatpush1.bf16.xpose.msra.mxu0 0
    %1862 = vmatprep.mubr.bf16.mxu0 0
    %1863 = vmatmul.mubr.bf16.gmra.mrb[0].mxu0 %v1819
    %v1864 = vpop.f32.mrb[0].mxu0
    %v1865 = vadd.f32 %v368, %v1864
    %v1866 = vpop.f32.mrb[0].mxu0
    %v1867 = vpop.f32.mrb[0].mxu0
    %v1868 = vadd.f32 %v369, %v1867
    %v1869 = vpop.f32.mrb[0].mxu0
    %1870 = vmatprep.mubr.bf16.mxu0 0
    %1871 = vmatmul.mubr.bf16.gmra.mrb[0].mxu0 %v1822
    %v1872 = vpop.f32.mrb[0].mxu0
    %v1873 = vadd.f32 %v370, %v1872
    %v1874 = vpop.f32.mrb[0].mxu0
    %v1875 = vpop.f32.mrb[0].mxu0
    %v1876 = vadd.f32 %v371, %v1875
    %v1877 = vpop.f32.mrb[0].mxu0
    %1878 = vdwg.mxu0
    %v1879 = vsel %vm374, %v1865, -inf
    %1880 = vmax.xlane.f32.xlu0 %v1879
    %v1881 = vpop.xlane.xlu0 %1880
    %v1882 = vsel %vm374, %v1868, -inf
    %1883 = vmax.xlane.f32.xlu0 %v1882
    %v1884 = vpop.xlane.xlu0 %1883
    %v1885 = vsel %vm374, %v1873, -inf
    %1886 = vmax.xlane.f32.xlu0 %v1885
    %v1887 = vpop.xlane.xlu0 %1886
    %v1888 = vsel %vm374, %v1876, -inf
    %1889 = vmax.xlane.f32.xlu0 %v1888
    %v1890 = vpop.xlane.xlu0 %1889
    %v1891 = vsub.f32 %v1865, %v1881
    %v1892 = vsub.f32 %v1868, %v1884
    %v1893 = vsub.f32 %v1873, %v1887
    %v1894 = vsub.f32 %v1876, %v1890
    %v1895 = vmul.f32 %v1891, 1.442695
    %v1896 = vpow.pop %v1895
    %v1897 = vmul.f32 %v1892, 1.442695
    %v1898 = vpow.pop %v1897
    %v1899 = vmul.f32 %v1893, 1.442695
    %v1900 = vpow.pop %v1899
    %v1901 = vmul.f32 %v1894, 1.442695
    %v1902 = vpow.pop %v1901
    %v1903 = vsel %vm374, %v1896, 0.0
    %1904 = vadd.xlane.f32.xlu0 %v1903
    %v1905 = vpop.xlane.xlu0 %1904
    %v1906 = vsel %vm374, %v1898, 0.0
    %1907 = vadd.xlane.f32.xlu0 %v1906
    %v1908 = vpop.xlane.xlu0 %1907
    %v1909 = vsel %vm374, %v1900, 0.0
    %1910 = vadd.xlane.f32.xlu0 %v1909
    %v1911 = vpop.xlane.xlu0 %1910
    %v1912 = vsel %vm374, %v1902, 0.0
    %1913 = vadd.xlane.f32.xlu0 %v1912
    %v1914 = vpop.xlane.xlu0 %1913
    %v1915 = vrcp.pop %v1905
    %v1916 = vrcp.pop %v1908
    %v1917 = vrcp.pop %v1911
    %v1918 = vrcp.pop %v1914
    %v1919 = vmul.f32 %v1896, %v1915
    %v1920 = vmul.f32 %v1898, %v1916
    %v1921 = vmul.f32 %v1900, %v1917
    %v1922 = vmul.f32 %v1902, %v1918
    %v1923 = vpack.c.bf16 %v1920, %v1919
    %v1924 = vpack.c.bf16 %v1922, %v1921
    %1925 = vrot.lane.b32.xlu0 %v1810, 64
    %v1926 = vpop.permute.xlu0 %1925
    %1927 = vrot.lane.b32.xlu0 %v1811, 64
    %v1928 = vpop.permute.xlu0 %1927
    %v1932 = vsel %vm374, %v1923, 0
    %v1935 = vsel %vm374, %v1924, 0
    %1937 = vmatprep.subr.bf16.mxu0 0
    %1938 = vmatpush1.bf16.msra.mxu0 %v1926
    %1939 = vmatprep.subr.bf16.mxu0 0
    %1940 = vmatpush1.bf16.msra.mxu0 %v1928
    %1941 = vmatprep.subr.bf16.mxu0 0
    %1942 = vmatpush1.bf16.msra.mxu0 0
    %1943 = vmatprep.subr.bf16.mxu0 0
    %1944 = vmatpush1.bf16.msra.mxu0 0
    %1945 = vmatprep.subr.bf16.mxu0 0
    %1946 = vmatpush1.bf16.msra.mxu0 0
    %1947 = vmatprep.subr.bf16.mxu0 0
    %1948 = vmatpush1.bf16.msra.mxu0 0
    %1949 = vmatprep.subr.bf16.mxu0 0
    %1950 = vmatpush1.bf16.msra.mxu0 0
    %1951 = vmatprep.subr.bf16.mxu0 0
    %1952 = vmatpush1.bf16.msra.mxu0 0
    %1953 = vmatprep.subr.bf16.mxu0 0
    %1954 = vmatpush1.bf16.msra.mxu0 0
    %1955 = vmatprep.subr.bf16.mxu0 0
    %1956 = vmatpush1.bf16.msra.mxu0 0
    %1957 = vmatprep.subr.bf16.mxu0 0
    %1958 = vmatpush1.bf16.msra.mxu0 0
    %1959 = vmatprep.subr.bf16.mxu0 0
    %1960 = vmatpush1.bf16.msra.mxu0 0
    %1961 = vmatprep.subr.bf16.mxu0 0
    %1962 = vmatpush1.bf16.msra.mxu0 0
    %1963 = vmatprep.subr.bf16.mxu0 0
    %1964 = vmatpush1.bf16.msra.mxu0 0
    %1965 = vmatprep.subr.bf16.mxu0 0
    %1966 = vmatpush1.bf16.msra.mxu0 0
    %1967 = vmatprep.subr.bf16.mxu0 0
    %1968 = vmatpush1.bf16.msra.mxu0 0
    %1969 = vmatprep.mubr.bf16.mxu0 0
    %1970 = vmatmul.mubr.bf16.gmra.mrb[0].mxu0 %v1932
    %v1971 = vpop.f32.mrb[0].mxu0
    %v1972 = vadd.f32 0.0, %v1971
    %v1973 = vpop.f32.mrb[0].mxu0
    %v1974 = vpop.f32.mrb[0].mxu0
    %v1975 = vadd.f32 0.0, %v1974
    %v1976 = vpop.f32.mrb[0].mxu0
    %1977 = vmatprep.mubr.bf16.mxu0 0
    %1978 = vmatmul.mubr.bf16.gmra.mrb[0].mxu0 %v1935
    %v1979 = vpop.f32.mrb[0].mxu0
    %v1980 = vadd.f32 0.0, %v1979
    %v1981 = vpop.f32.mrb[0].mxu0
    %v1982 = vpop.f32.mrb[0].mxu0
    %v1983 = vadd.f32 0.0, %v1982
    %v1984 = vpop.f32.mrb[0].mxu0
    %1985 = vdwg.mxu0
    %1986 = vrot.lane.b32.xlu0 %v1810, 120
    %v1987 = vpop.permute.xlu0 %1986
    %1988 = vrot.lane.b32.xlu0 %v1811, 120
    %v1989 = vpop.permute.xlu0 %1988
    %1990 = vrot.lane.b32.xlu0 %v1810, 88
    %v1991 = vpop.permute.xlu0 %1990
    %1992 = vrot.lane.b32.xlu0 %v1811, 88
    %v1993 = vpop.permute.xlu0 %1992
    %v1995 = vsel %vm530, %v1987, 0
    %v1998 = vsel %vm530, %v1989, 0
    %v2001 = vsel %vm530, %v1991, 0
    %v2004 = vsel %vm530, %v1993, 0
    %2006 = vmatprep.subr.bf16.mxu0 0
    %2007 = vmatpush1.bf16.xpose.msra.mxu0 %v2001
    %2008 = vmatprep.subr.bf16.mxu0 0
    %2009 = vmatpush1.bf16.xpose.msra.mxu0 %v2004
    %2010 = vmatprep.subr.bf16.mxu0 0
    %2011 = vmatpush1.bf16.xpose.msra.mxu0 0
    %2012 = vmatprep.subr.bf16.mxu0 0
    %2013 = vmatpush1.bf16.xpose.msra.mxu0 0
    %2014 = vmatprep.subr.bf16.mxu0 0
    %2015 = vmatpush1.bf16.xpose.msra.mxu0 0
    %2016 = vmatprep.subr.bf16.mxu0 0
    %2017 = vmatpush1.bf16.xpose.msra.mxu0 0
    %2018 = vmatprep.subr.bf16.mxu0 0
    %2019 = vmatpush1.bf16.xpose.msra.mxu0 0
    %2020 = vmatprep.subr.bf16.mxu0 0
    %2021 = vmatpush1.bf16.xpose.msra.mxu0 0
    %2022 = vmatprep.subr.bf16.mxu0 0
    %2023 = vmatpush1.bf16.xpose.msra.mxu0 0
    %2024 = vmatprep.subr.bf16.mxu0 0
    %2025 = vmatpush1.bf16.xpose.msra.mxu0 0
    %2026 = vmatprep.subr.bf16.mxu0 0
    %2027 = vmatpush1.bf16.xpose.msra.mxu0 0
    %2028 = vmatprep.subr.bf16.mxu0 0
    %2029 = vmatpush1.bf16.xpose.msra.mxu0 0
    %2030 = vmatprep.subr.bf16.mxu0 0
    %2031 = vmatpush1.bf16.xpose.msra.mxu0 0
    %2032 = vmatprep.subr.bf16.mxu0 0
    %2033 = vmatpush1.bf16.xpose.msra.mxu0 0
    %2034 = vmatprep.subr.bf16.mxu0 0
    %2035 = vmatpush1.bf16.xpose.msra.mxu0 0
    %2036 = vmatprep.subr.bf16.mxu0 0
    %2037 = vmatpush1.bf16.xpose.msra.mxu0 0
    %2038 = vmatprep.mubr.bf16.mxu0 0
    %2039 = vmatmul.mubr.bf16.gmra.mrb[0].mxu0 %v1995
    %v2040 = vpop.f32.mrb[0].mxu0
    %v2041 = vadd.f32 %v368, %v2040
    %v2042 = vpop.f32.mrb[0].mxu0
    %v2043 = vpop.f32.mrb[0].mxu0
    %v2044 = vadd.f32 %v369, %v2043
    %v2045 = vpop.f32.mrb[0].mxu0
    %2046 = vmatprep.mubr.bf16.mxu0 0
    %2047 = vmatmul.mubr.bf16.gmra.mrb[0].mxu0 %v1998
    %v2048 = vpop.f32.mrb[0].mxu0
    %v2049 = vadd.f32 %v370, %v2048
    %v2050 = vpop.f32.mrb[0].mxu0
    %v2051 = vpop.f32.mrb[0].mxu0
    %v2052 = vadd.f32 %v371, %v2051
    %v2053 = vpop.f32.mrb[0].mxu0
    %2054 = vdwg.mxu0
    %v2055 = vsel %vm374, %v2041, -inf
    %2056 = vmax.xlane.f32.xlu0 %v2055
    %v2057 = vpop.xlane.xlu0 %2056
    %v2058 = vsel %vm374, %v2044, -inf
    %2059 = vmax.xlane.f32.xlu0 %v2058
    %v2060 = vpop.xlane.xlu0 %2059
    %v2061 = vsel %vm374, %v2049, -inf
    %2062 = vmax.xlane.f32.xlu0 %v2061
    %v2063 = vpop.xlane.xlu0 %2062
    %v2064 = vsel %vm374, %v2052, -inf
    %2065 = vmax.xlane.f32.xlu0 %v2064
    %v2066 = vpop.xlane.xlu0 %2065
    %v2067 = vsub.f32 %v2041, %v2057
    %v2068 = vsub.f32 %v2044, %v2060
    %v2069 = vsub.f32 %v2049, %v2063
    %v2070 = vsub.f32 %v2052, %v2066
    %v2071 = vmul.f32 %v2067, 1.442695
    %v2072 = vpow.pop %v2071
    %v2073 = vmul.f32 %v2068, 1.442695
    %v2074 = vpow.pop %v2073
    %v2075 = vmul.f32 %v2069, 1.442695
    %v2076 = vpow.pop %v2075
    %v2077 = vmul.f32 %v2070, 1.442695
    %v2078 = vpow.pop %v2077
    %v2079 = vsel %vm374, %v2072, 0.0
    %2080 = vadd.xlane.f32.xlu0 %v2079
    %v2081 = vpop.xlane.xlu0 %2080
    %v2082 = vsel %vm374, %v2074, 0.0
    %2083 = vadd.xlane.f32.xlu0 %v2082
    %v2084 = vpop.xlane.xlu0 %2083
    %v2085 = vsel %vm374, %v2076, 0.0
    %2086 = vadd.xlane.f32.xlu0 %v2085
    %v2087 = vpop.xlane.xlu0 %2086
    %v2088 = vsel %vm374, %v2078, 0.0
    %2089 = vadd.xlane.f32.xlu0 %v2088
    %v2090 = vpop.xlane.xlu0 %2089
    %v2091 = vrcp.pop %v2081
    %v2092 = vrcp.pop %v2084
    %v2093 = vrcp.pop %v2087
    %v2094 = vrcp.pop %v2090
    %v2095 = vmul.f32 %v2072, %v2091
    %v2096 = vmul.f32 %v2074, %v2092
    %v2097 = vmul.f32 %v2076, %v2093
    %v2098 = vmul.f32 %v2078, %v2094
    %v2099 = vpack.c.bf16 %v2096, %v2095
    %v2100 = vpack.c.bf16 %v2098, %v2097
    %2101 = vrot.lane.b32.xlu0 %v1810, 56
    %v2102 = vpop.permute.xlu0 %2101
    %2103 = vrot.lane.b32.xlu0 %v1811, 56
    %v2104 = vpop.permute.xlu0 %2103
    %v2108 = vsel %vm374, %v2099, 0
    %v2111 = vsel %vm374, %v2100, 0
    %2113 = vmatprep.subr.bf16.mxu0 0
    %2114 = vmatpush1.bf16.msra.mxu0 %v2102
    %2115 = vmatprep.subr.bf16.mxu0 0
    %2116 = vmatpush1.bf16.msra.mxu0 %v2104
    %2117 = vmatprep.subr.bf16.mxu0 0
    %2118 = vmatpush1.bf16.msra.mxu0 0
    %2119 = vmatprep.subr.bf16.mxu0 0
    %2120 = vmatpush1.bf16.msra.mxu0 0
    %2121 = vmatprep.subr.bf16.mxu0 0
    %2122 = vmatpush1.bf16.msra.mxu0 0
    %2123 = vmatprep.subr.bf16.mxu0 0
    %2124 = vmatpush1.bf16.msra.mxu0 0
    %2125 = vmatprep.subr.bf16.mxu0 0
    %2126 = vmatpush1.bf16.msra.mxu0 0
    %2127 = vmatprep.subr.bf16.mxu0 0
    %2128 = vmatpush1.bf16.msra.mxu0 0
    %2129 = vmatprep.subr.bf16.mxu0 0
    %2130 = vmatpush1.bf16.msra.mxu0 0
    %2131 = vmatprep.subr.bf16.mxu0 0
    %2132 = vmatpush1.bf16.msra.mxu0 0
    %2133 = vmatprep.subr.bf16.mxu0 0
    %2134 = vmatpush1.bf16.msra.mxu0 0
    %2135 = vmatprep.subr.bf16.mxu0 0
    %2136 = vmatpush1.bf16.msra.mxu0 0
    %2137 = vmatprep.subr.bf16.mxu0 0
    %2138 = vmatpush1.bf16.msra.mxu0 0
    %2139 = vmatprep.subr.bf16.mxu0 0
    %2140 = vmatpush1.bf16.msra.mxu0 0
    %2141 = vmatprep.subr.bf16.mxu0 0
    %2142 = vmatpush1.bf16.msra.mxu0 0
    %2143 = vmatprep.subr.bf16.mxu0 0
    %2144 = vmatpush1.bf16.msra.mxu0 0
    %2145 = vmatprep.mubr.bf16.mxu0 0
    %2146 = vmatmul.mubr.bf16.gmra.mrb[0].mxu0 %v2108
    %v2147 = vpop.f32.mrb[0].mxu0
    %v2148 = vadd.f32 0.0, %v2147
    %v2149 = vpop.f32.mrb[0].mxu0
    %v2150 = vpop.f32.mrb[0].mxu0
    %v2151 = vadd.f32 0.0, %v2150
    %v2152 = vpop.f32.mrb[0].mxu0
    %2153 = vmatprep.mubr.bf16.mxu0 0
    %2154 = vmatmul.mubr.bf16.gmra.mrb[0].mxu0 %v2111
    %v2155 = vpop.f32.mrb[0].mxu0
    %v2156 = vadd.f32 0.0, %v2155
    %v2157 = vpop.f32.mrb[0].mxu0
    %v2158 = vpop.f32.mrb[0].mxu0
    %v2159 = vadd.f32 0.0, %v2158
    %v2160 = vpop.f32.mrb[0].mxu0
    %2161 = vdwg.mxu0
    %2162 = vrot.lane.b32.xlu0 %v1810, 112
    %v2163 = vpop.permute.xlu0 %2162
    %2164 = vrot.lane.b32.xlu0 %v1811, 112
    %v2165 = vpop.permute.xlu0 %2164
    %2166 = vrot.lane.b32.xlu0 %v1810, 80
    %v2167 = vpop.permute.xlu0 %2166
    %2168 = vrot.lane.b32.xlu0 %v1811, 80
    %v2169 = vpop.permute.xlu0 %2168
    %v2171 = vsel %vm530, %v2163, 0
    %v2174 = vsel %vm530, %v2165, 0
    %v2177 = vsel %vm530, %v2167, 0
    %v2180 = vsel %vm530, %v2169, 0
    %2182 = vmatprep.subr.bf16.mxu0 0
    %2183 = vmatpush1.bf16.xpose.msra.mxu0 %v2177
    %2184 = vmatprep.subr.bf16.mxu0 0
    %2185 = vmatpush1.bf16.xpose.msra.mxu0 %v2180
    %2186 = vmatprep.subr.bf16.mxu0 0
    %2187 = vmatpush1.bf16.xpose.msra.mxu0 0
    %2188 = vmatprep.subr.bf16.mxu0 0
    %2189 = vmatpush1.bf16.xpose.msra.mxu0 0
    %2190 = vmatprep.subr.bf16.mxu0 0
    %2191 = vmatpush1.bf16.xpose.msra.mxu0 0
    %2192 = vmatprep.subr.bf16.mxu0 0
    %2193 = vmatpush1.bf16.xpose.msra.mxu0 0
    %2194 = vmatprep.subr.bf16.mxu0 0
    %2195 = vmatpush1.bf16.xpose.msra.mxu0 0
    %2196 = vmatprep.subr.bf16.mxu0 0
    %2197 = vmatpush1.bf16.xpose.msra.mxu0 0
    %2198 = vmatprep.subr.bf16.mxu0 0
    %2199 = vmatpush1.bf16.xpose.msra.mxu0 0
    %2200 = vmatprep.subr.bf16.mxu0 0
    %2201 = vmatpush1.bf16.xpose.msra.mxu0 0
    %2202 = vmatprep.subr.bf16.mxu0 0
    %2203 = vmatpush1.bf16.xpose.msra.mxu0 0
    %2204 = vmatprep.subr.bf16.mxu0 0
    %2205 = vmatpush1.bf16.xpose.msra.mxu0 0
    %2206 = vmatprep.subr.bf16.mxu0 0
    %2207 = vmatpush1.bf16.xpose.msra.mxu0 0
    %2208 = vmatprep.subr.bf16.mxu0 0
    %2209 = vmatpush1.bf16.xpose.msra.mxu0 0
    %2210 = vmatprep.subr.bf16.mxu0 0
    %2211 = vmatpush1.bf16.xpose.msra.mxu0 0
    %2212 = vmatprep.subr.bf16.mxu0 0
    %2213 = vmatpush1.bf16.xpose.msra.mxu0 0
    %2214 = vmatprep.mubr.bf16.mxu0 0
    %2215 = vmatmul.mubr.bf16.gmra.mrb[0].mxu0 %v2171
    %v2216 = vpop.f32.mrb[0].mxu0
    %v2217 = vadd.f32 %v368, %v2216
    %v2218 = vpop.f32.mrb[0].mxu0
    %v2219 = vpop.f32.mrb[0].mxu0
    %v2220 = vadd.f32 %v369, %v2219
    %v2221 = vpop.f32.mrb[0].mxu0
    %2222 = vmatprep.mubr.bf16.mxu0 0
    %2223 = vmatmul.mubr.bf16.gmra.mrb[0].mxu0 %v2174
    %v2224 = vpop.f32.mrb[0].mxu0
    %v2225 = vadd.f32 %v370, %v2224
    %v2226 = vpop.f32.mrb[0].mxu0
    %v2227 = vpop.f32.mrb[0].mxu0
    %v2228 = vadd.f32 %v371, %v2227
    %v2229 = vpop.f32.mrb[0].mxu0
    %2230 = vdwg.mxu0
    %v2231 = vsel %vm374, %v2217, -inf
    %2232 = vmax.xlane.f32.xlu0 %v2231
    %v2233 = vpop.xlane.xlu0 %2232
    %v2234 = vsel %vm374, %v2220, -inf
    %2235 = vmax.xlane.f32.xlu0 %v2234
    %v2236 = vpop.xlane.xlu0 %2235
    %v2237 = vsel %vm374, %v2225, -inf
    %2238 = vmax.xlane.f32.xlu0 %v2237
    %v2239 = vpop.xlane.xlu0 %2238
    %v2240 = vsel %vm374, %v2228, -inf
    %2241 = vmax.xlane.f32.xlu0 %v2240
    %v2242 = vpop.xlane.xlu0 %2241
    %v2243 = vsub.f32 %v2217, %v2233
    %v2244 = vsub.f32 %v2220, %v2236
    %v2245 = vsub.f32 %v2225, %v2239
    %v2246 = vsub.f32 %v2228, %v2242
    %v2247 = vmul.f32 %v2243, 1.442695
    %v2248 = vpow.pop %v2247
    %v2249 = vmul.f32 %v2244, 1.442695
    %v2250 = vpow.pop %v2249
    %v2251 = vmul.f32 %v2245, 1.442695
    %v2252 = vpow.pop %v2251
    %v2253 = vmul.f32 %v2246, 1.442695
    %v2254 = vpow.pop %v2253
    %v2255 = vsel %vm374, %v2248, 0.0
    %2256 = vadd.xlane.f32.xlu0 %v2255
    %v2257 = vpop.xlane.xlu0 %2256
    %v2258 = vsel %vm374, %v2250, 0.0
    %2259 = vadd.xlane.f32.xlu0 %v2258
    %v2260 = vpop.xlane.xlu0 %2259
    %v2261 = vsel %vm374, %v2252, 0.0
    %2262 = vadd.xlane.f32.xlu0 %v2261
    %v2263 = vpop.xlane.xlu0 %2262
    %v2264 = vsel %vm374, %v2254, 0.0
    %2265 = vadd.xlane.f32.xlu0 %v2264
    %v2266 = vpop.xlane.xlu0 %2265
    %v2267 = vrcp.pop %v2257
    %v2268 = vrcp.pop %v2260
    %v2269 = vrcp.pop %v2263
    %v2270 = vrcp.pop %v2266
    %v2271 = vmul.f32 %v2248, %v2267
    %v2272 = vmul.f32 %v2250, %v2268
    %v2273 = vmul.f32 %v2252, %v2269
    %v2274 = vmul.f32 %v2254, %v2270
    %v2275 = vpack.c.bf16 %v2272, %v2271
    %v2276 = vpack.c.bf16 %v2274, %v2273
    %2277 = vrot.lane.b32.xlu0 %v1810, 48
    %v2278 = vpop.permute.xlu0 %2277
    %2279 = vrot.lane.b32.xlu0 %v1811, 48
    %v2280 = vpop.permute.xlu0 %2279
    %v2284 = vsel %vm374, %v2275, 0
    %v2287 = vsel %vm374, %v2276, 0
    %2289 = vmatprep.subr.bf16.mxu0 0
    %2290 = vmatpush1.bf16.msra.mxu0 %v2278
    %2291 = vmatprep.subr.bf16.mxu0 0
    %2292 = vmatpush1.bf16.msra.mxu0 %v2280
    %2293 = vmatprep.subr.bf16.mxu0 0
    %2294 = vmatpush1.bf16.msra.mxu0 0
    %2295 = vmatprep.subr.bf16.mxu0 0
    %2296 = vmatpush1.bf16.msra.mxu0 0
    %2297 = vmatprep.subr.bf16.mxu0 0
    %2298 = vmatpush1.bf16.msra.mxu0 0
    %2299 = vmatprep.subr.bf16.mxu0 0
    %2300 = vmatpush1.bf16.msra.mxu0 0
    %2301 = vmatprep.subr.bf16.mxu0 0
    %2302 = vmatpush1.bf16.msra.mxu0 0
    %2303 = vmatprep.subr.bf16.mxu0 0
    %2304 = vmatpush1.bf16.msra.mxu0 0
    %2305 = vmatprep.subr.bf16.mxu0 0
    %2306 = vmatpush1.bf16.msra.mxu0 0
    %2307 = vmatprep.subr.bf16.mxu0 0
    %2308 = vmatpush1.bf16.msra.mxu0 0
    %2309 = vmatprep.subr.bf16.mxu0 0
    %2310 = vmatpush1.bf16.msra.mxu0 0
    %2311 = vmatprep.subr.bf16.mxu0 0
    %2312 = vmatpush1.bf16.msra.mxu0 0
    %2313 = vmatprep.subr.bf16.mxu0 0
    %2314 = vmatpush1.bf16.msra.mxu0 0
    %2315 = vmatprep.subr.bf16.mxu0 0
    %2316 = vmatpush1.bf16.msra.mxu0 0
    %2317 = vmatprep.subr.bf16.mxu0 0
    %2318 = vmatpush1.bf16.msra.mxu0 0
    %2319 = vmatprep.subr.bf16.mxu0 0
    %2320 = vmatpush1.bf16.msra.mxu0 0
    %2321 = vmatprep.mubr.bf16.mxu0 0
    %2322 = vmatmul.mubr.bf16.gmra.mrb[0].mxu0 %v2284
    %v2323 = vpop.f32.mrb[0].mxu0
    %v2324 = vadd.f32 0.0, %v2323
    %v2325 = vpop.f32.mrb[0].mxu0
    %v2326 = vpop.f32.mrb[0].mxu0
    %v2327 = vadd.f32 0.0, %v2326
    %v2328 = vpop.f32.mrb[0].mxu0
    %2329 = vmatprep.mubr.bf16.mxu0 0
    %2330 = vmatmul.mubr.bf16.gmra.mrb[0].mxu0 %v2287
    %v2331 = vpop.f32.mrb[0].mxu0
    %v2332 = vadd.f32 0.0, %v2331
    %v2333 = vpop.f32.mrb[0].mxu0
    %v2334 = vpop.f32.mrb[0].mxu0
    %v2335 = vadd.f32 0.0, %v2334
    %v2336 = vpop.f32.mrb[0].mxu0
    %2337 = vdwg.mxu0
    %2338 = vrot.lane.b32.xlu0 %v1810, 104
    %v2339 = vpop.permute.xlu0 %2338
    %2340 = vrot.lane.b32.xlu0 %v1811, 104
    %v2341 = vpop.permute.xlu0 %2340
    %2342 = vrot.lane.b32.xlu0 %v1810, 72
    %v2343 = vpop.permute.xlu0 %2342
    %2344 = vrot.lane.b32.xlu0 %v1811, 72
    %v2345 = vpop.permute.xlu0 %2344
    %v2347 = vsel %vm530, %v2339, 0
    %v2350 = vsel %vm530, %v2341, 0
    %v2353 = vsel %vm530, %v2343, 0
    %v2356 = vsel %vm530, %v2345, 0
    %2358 = vmatprep.subr.bf16.mxu0 0
    %2359 = vmatpush1.bf16.xpose.msra.mxu0 %v2353
    %2360 = vmatprep.subr.bf16.mxu0 0
    %2361 = vmatpush1.bf16.xpose.msra.mxu0 %v2356
    %2362 = vmatprep.subr.bf16.mxu0 0
    %2363 = vmatpush1.bf16.xpose.msra.mxu0 0
    %2364 = vmatprep.subr.bf16.mxu0 0
    %2365 = vmatpush1.bf16.xpose.msra.mxu0 0
    %2366 = vmatprep.subr.bf16.mxu0 0
    %2367 = vmatpush1.bf16.xpose.msra.mxu0 0
    %2368 = vmatprep.subr.bf16.mxu0 0
    %2369 = vmatpush1.bf16.xpose.msra.mxu0 0
    %2370 = vmatprep.subr.bf16.mxu0 0
    %2371 = vmatpush1.bf16.xpose.msra.mxu0 0
    %2372 = vmatprep.subr.bf16.mxu0 0
    %2373 = vmatpush1.bf16.xpose.msra.mxu0 0
    %2374 = vmatprep.subr.bf16.mxu0 0
    %2375 = vmatpush1.bf16.xpose.msra.mxu0 0
    %2376 = vmatprep.subr.bf16.mxu0 0
    %2377 = vmatpush1.bf16.xpose.msra.mxu0 0
    %2378 = vmatprep.subr.bf16.mxu0 0
    %2379 = vmatpush1.bf16.xpose.msra.mxu0 0
    %2380 = vmatprep.subr.bf16.mxu0 0
    %2381 = vmatpush1.bf16.xpose.msra.mxu0 0
    %2382 = vmatprep.subr.bf16.mxu0 0
    %2383 = vmatpush1.bf16.xpose.msra.mxu0 0
    %2384 = vmatprep.subr.bf16.mxu0 0
    %2385 = vmatpush1.bf16.xpose.msra.mxu0 0
    %2386 = vmatprep.subr.bf16.mxu0 0
    %2387 = vmatpush1.bf16.xpose.msra.mxu0 0
    %2388 = vmatprep.subr.bf16.mxu0 0
    %2389 = vmatpush1.bf16.xpose.msra.mxu0 0
    %2390 = vmatprep.mubr.bf16.mxu0 0
    %2391 = vmatmul.mubr.bf16.gmra.mrb[0].mxu0 %v2347
    %v2392 = vpop.f32.mrb[0].mxu0
    %v2393 = vadd.f32 %v368, %v2392
    %v2394 = vpop.f32.mrb[0].mxu0
    %v2395 = vpop.f32.mrb[0].mxu0
    %v2396 = vadd.f32 %v369, %v2395
    %v2397 = vpop.f32.mrb[0].mxu0
    %2398 = vmatprep.mubr.bf16.mxu0 0
    %2399 = vmatmul.mubr.bf16.gmra.mrb[0].mxu0 %v2350
    %v2400 = vpop.f32.mrb[0].mxu0
    %v2401 = vadd.f32 %v370, %v2400
    %v2402 = vpop.f32.mrb[0].mxu0
    %v2403 = vpop.f32.mrb[0].mxu0
    %v2404 = vadd.f32 %v371, %v2403
    %v2405 = vpop.f32.mrb[0].mxu0
    %2406 = vdwg.mxu0
    %v2407 = vsel %vm374, %v2393, -inf
    %2408 = vmax.xlane.f32.xlu0 %v2407
    %v2409 = vpop.xlane.xlu0 %2408
    %v2410 = vsel %vm374, %v2396, -inf
    %2411 = vmax.xlane.f32.xlu0 %v2410
    %v2412 = vpop.xlane.xlu0 %2411
    %v2413 = vsel %vm374, %v2401, -inf
    %2414 = vmax.xlane.f32.xlu0 %v2413
    %v2415 = vpop.xlane.xlu0 %2414
    %v2416 = vsel %vm374, %v2404, -inf
    %2417 = vmax.xlane.f32.xlu0 %v2416
    %v2418 = vpop.xlane.xlu0 %2417
    %v2419 = vsub.f32 %v2393, %v2409
    %v2420 = vsub.f32 %v2396, %v2412
    %v2421 = vsub.f32 %v2401, %v2415
    %v2422 = vsub.f32 %v2404, %v2418
    %v2423 = vmul.f32 %v2419, 1.442695
    %v2424 = vpow.pop %v2423
    %v2425 = vmul.f32 %v2420, 1.442695
    %v2426 = vpow.pop %v2425
    %v2427 = vmul.f32 %v2421, 1.442695
    %v2428 = vpow.pop %v2427
    %v2429 = vmul.f32 %v2422, 1.442695
    %v2430 = vpow.pop %v2429
    %v2431 = vsel %vm374, %v2424, 0.0
    %2432 = vadd.xlane.f32.xlu0 %v2431
    %v2433 = vpop.xlane.xlu0 %2432
    %v2434 = vsel %vm374, %v2426, 0.0
    %2435 = vadd.xlane.f32.xlu0 %v2434
    %v2436 = vpop.xlane.xlu0 %2435
    %v2437 = vsel %vm374, %v2428, 0.0
    %2438 = vadd.xlane.f32.xlu0 %v2437
    %v2439 = vpop.xlane.xlu0 %2438
    %v2440 = vsel %vm374, %v2430, 0.0
    %2441 = vadd.xlane.f32.xlu0 %v2440
    %v2442 = vpop.xlane.xlu0 %2441
    %v2443 = vrcp.pop %v2433
    %v2444 = vrcp.pop %v2436
    %v2445 = vrcp.pop %v2439
    %v2446 = vrcp.pop %v2442
    %v2447 = vmul.f32 %v2424, %v2443
    %v2448 = vmul.f32 %v2426, %v2444
    %v2449 = vmul.f32 %v2428, %v2445
    %v2450 = vmul.f32 %v2430, %v2446
    %v2451 = vpack.c.bf16 %v2448, %v2447
    %v2452 = vpack.c.bf16 %v2450, %v2449
    %2453 = vrot.lane.b32.xlu0 %v1810, 40
    %v2454 = vpop.permute.xlu0 %2453
    %2455 = vrot.lane.b32.xlu0 %v1811, 40
    %v2456 = vpop.permute.xlu0 %2455
    %v2460 = vsel %vm374, %v2451, 0
    %v2463 = vsel %vm374, %v2452, 0
    %2465 = vmatprep.subr.bf16.mxu0 0
    %2466 = vmatpush1.bf16.msra.mxu0 %v2454
    %2467 = vmatprep.subr.bf16.mxu0 0
    %2468 = vmatpush1.bf16.msra.mxu0 %v2456
    %2469 = vmatprep.subr.bf16.mxu0 0
    %2470 = vmatpush1.bf16.msra.mxu0 0
    %2471 = vmatprep.subr.bf16.mxu0 0
    %2472 = vmatpush1.bf16.msra.mxu0 0
    %2473 = vmatprep.subr.bf16.mxu0 0
    %2474 = vmatpush1.bf16.msra.mxu0 0
    %2475 = vmatprep.subr.bf16.mxu0 0
    %2476 = vmatpush1.bf16.msra.mxu0 0
    %2477 = vmatprep.subr.bf16.mxu0 0
    %2478 = vmatpush1.bf16.msra.mxu0 0
    %2479 = vmatprep.subr.bf16.mxu0 0
    %2480 = vmatpush1.bf16.msra.mxu0 0
    %2481 = vmatprep.subr.bf16.mxu0 0
    %2482 = vmatpush1.bf16.msra.mxu0 0
    %2483 = vmatprep.subr.bf16.mxu0 0
    %2484 = vmatpush1.bf16.msra.mxu0 0
    %2485 = vmatprep.subr.bf16.mxu0 0
    %2486 = vmatpush1.bf16.msra.mxu0 0
    %2487 = vmatprep.subr.bf16.mxu0 0
    %2488 = vmatpush1.bf16.msra.mxu0 0
    %2489 = vmatprep.subr.bf16.mxu0 0
    %2490 = vmatpush1.bf16.msra.mxu0 0
    %2491 = vmatprep.subr.bf16.mxu0 0
    %2492 = vmatpush1.bf16.msra.mxu0 0
    %2493 = vmatprep.subr.bf16.mxu0 0
    %2494 = vmatpush1.bf16.msra.mxu0 0
    %2495 = vmatprep.subr.bf16.mxu0 0
    %2496 = vmatpush1.bf16.msra.mxu0 0
    %2497 = vmatprep.mubr.bf16.mxu0 0
    %2498 = vmatmul.mubr.bf16.gmra.mrb[0].mxu0 %v2460
    %v2499 = vpop.f32.mrb[0].mxu0
    %v2500 = vadd.f32 0.0, %v2499
    %v2501 = vpop.f32.mrb[0].mxu0
    %v2502 = vpop.f32.mrb[0].mxu0
    %v2503 = vadd.f32 0.0, %v2502
    %v2504 = vpop.f32.mrb[0].mxu0
    %2505 = vmatprep.mubr.bf16.mxu0 0
    %2506 = vmatmul.mubr.bf16.gmra.mrb[0].mxu0 %v2463
    %v2507 = vpop.f32.mrb[0].mxu0
    %v2508 = vadd.f32 0.0, %v2507
    %v2509 = vpop.f32.mrb[0].mxu0
    %v2510 = vpop.f32.mrb[0].mxu0
    %v2511 = vadd.f32 0.0, %v2510
    %v2512 = vpop.f32.mrb[0].mxu0
    %2513 = vdwg.mxu0
    %2518 = vrot.lane.b32.xlu0 %v2148, 8
    %v2519 = vpop.permute.xlu0 %2518
    %2520 = vrot.lane.b32.xlu0 %v2151, 8
    %v2521 = vpop.permute.xlu0 %2520
    %2522 = vrot.lane.b32.xlu0 %v2156, 8
    %v2523 = vpop.permute.xlu0 %2522
    %2524 = vrot.lane.b32.xlu0 %v2159, 8
    %v2525 = vpop.permute.xlu0 %2524
    %2534 = vrot.lane.b32.xlu0 %v2324, 16
    %v2535 = vpop.permute.xlu0 %2534
    %2536 = vrot.lane.b32.xlu0 %v2327, 16
    %v2537 = vpop.permute.xlu0 %2536
    %2538 = vrot.lane.b32.xlu0 %v2332, 16
    %v2539 = vpop.permute.xlu0 %2538
    %2540 = vrot.lane.b32.xlu0 %v2335, 16
    %v2541 = vpop.permute.xlu0 %2540
    %2550 = vrot.lane.b32.xlu0 %v2500, 24
    %v2551 = vpop.permute.xlu0 %2550
    %2552 = vrot.lane.b32.xlu0 %v2503, 24
    %v2553 = vpop.permute.xlu0 %2552
    %2554 = vrot.lane.b32.xlu0 %v2508, 24
    %v2555 = vpop.permute.xlu0 %2554
    %2556 = vrot.lane.b32.xlu0 %v2511, 24
    %v2557 = vpop.permute.xlu0 %2556
    %v2562 = vsel %vm530, %v1972, %v2519
    %v2563 = vsel %vm530, %v1975, %v2521
    %v2564 = vsel %vm530, %v1980, %v2523
    %v2565 = vsel %vm530, %v1983, %v2525
    %v2566 = vsel %vm1279, %v2562, %v2535
    %v2567 = vsel %vm1279, %v2563, %v2537
    %v2568 = vsel %vm1279, %v2564, %v2539
    %v2569 = vsel %vm1279, %v2565, %v2541
    %v2570 = vsel %vm1284, %v2566, %v2551
    %v2571 = vsel %vm1284, %v2567, %v2553
    %v2572 = vsel %vm1284, %v2568, %v2555
    %v2573 = vsel %vm1284, %v2569, %v2557
    %v2574 = vpack.c.bf16 %v2571, %v2570
    %v2575 = vpack.c.bf16 %v2573, %v2572
    %v2576 = vld [vmem:[%s3 + $0xd0] sm:$0xf]
    %v2577 = vld [vmem:[%s3 + $0xd4] sm:$0xf]
    %v2578 = vld [vmem:[%s3 + $0xd8] sm:$0xf]
    %v2579 = vld [vmem:[%s3 + $0xdc] sm:$0xf]
    %v2584 = vunpack.c.l.b16 %v2576
    %v2585 = vunpack.c.l.b16 %v2577
    %v2586 = vunpack.c.l.b16 %v2578
    %v2587 = vunpack.c.l.b16 %v2579
    %v2588 = vpack.c.b16 %v2585, %v2584
    %v2589 = vpack.c.b16 %v2587, %v2586
    %v2593 = vsel %vm374, %v2574, 0
    %v2596 = vsel %vm374, %v2575, 0
    %2598 = vmatprep.subr.bf16.mxu0 0
    %2599 = vmatpush1.bf16.msra.mxu0 %v2588
    %2600 = vmatprep.subr.bf16.mxu0 0
    %2601 = vmatpush1.bf16.msra.mxu0 %v2589
    %2602 = vmatprep.subr.bf16.mxu0 0
    %2603 = vmatpush1.bf16.msra.mxu0 0
    %2604 = vmatprep.subr.bf16.mxu0 0
    %2605 = vmatpush1.bf16.msra.mxu0 0
    %2606 = vmatprep.subr.bf16.mxu0 0
    %2607 = vmatpush1.bf16.msra.mxu0 0
    %2608 = vmatprep.subr.bf16.mxu0 0
    %2609 = vmatpush1.bf16.msra.mxu0 0
    %2610 = vmatprep.subr.bf16.mxu0 0
    %2611 = vmatpush1.bf16.msra.mxu0 0
    %2612 = vmatprep.subr.bf16.mxu0 0
    %2613 = vmatpush1.bf16.msra.mxu0 0
    %2614 = vmatprep.subr.bf16.mxu0 0
    %2615 = vmatpush1.bf16.msra.mxu0 0
    %2616 = vmatprep.subr.bf16.mxu0 0
    %2617 = vmatpush1.bf16.msra.mxu0 0
    %2618 = vmatprep.subr.bf16.mxu0 0
    %2619 = vmatpush1.bf16.msra.mxu0 0
    %2620 = vmatprep.subr.bf16.mxu0 0
    %2621 = vmatpush1.bf16.msra.mxu0 0
    %2622 = vmatprep.subr.bf16.mxu0 0
    %2623 = vmatpush1.bf16.msra.mxu0 0
    %2624 = vmatprep.subr.bf16.mxu0 0
    %2625 = vmatpush1.bf16.msra.mxu0 0
    %2626 = vmatprep.subr.bf16.mxu0 0
    %2627 = vmatpush1.bf16.msra.mxu0 0
    %2628 = vmatprep.subr.bf16.mxu0 0
    %2629 = vmatpush1.bf16.msra.mxu0 0
    %2630 = vmatprep.mubr.bf16.mxu0 0
    %2631 = vmatmul.mubr.bf16.gmra.mrb[0].mxu0 %v2593
    %v2632 = vpop.f32.mrb[0].mxu0
    %v2633 = vadd.f32 0.0, %v2632
    %v2634 = vpop.f32.mrb[0].mxu0
    %v2635 = vpop.f32.mrb[0].mxu0
    %v2636 = vadd.f32 0.0, %v2635
    %v2637 = vpop.f32.mrb[0].mxu0
    %2638 = vmatprep.mubr.bf16.mxu0 0
    %2639 = vmatmul.mubr.bf16.gmra.mrb[0].mxu0 %v2596
    %v2640 = vpop.f32.mrb[0].mxu0
    %v2641 = vadd.f32 0.0, %v2640
    %v2642 = vpop.f32.mrb[0].mxu0
    %v2643 = vpop.f32.mrb[0].mxu0
    %v2644 = vadd.f32 0.0, %v2643
    %v2645 = vpop.f32.mrb[0].mxu0
    %2646 = vdwg.mxu0
    %v2647 = vadd.f32 %v1658, %v2633
    %v2648 = vadd.f32 %v1659, %v2636
    %v2649 = vadd.f32 %v1660, %v2641
    %v2650 = vadd.f32 %v1661, %v2644
    %v2651 = vld [vmem:[%s6 + $0x25] sm:$0x1]
    %v2652 = vlaneseq
    %v2653 = vshrl.u32 %v2652, 7
    %v2654 = vsub.s32 0, %v2653
    %v2655 = vrot.slane %v2651, %v2654
    %v2656 = vadd.f32 %v2647, %v2655
    %v2657 = vadd.f32 %v2648, %v2655
    %v2658 = vadd.f32 %v2649, %v2655
    %v2659 = vadd.f32 %v2650, %v2655
    %v2660 = vld [vmem:[%s6 + $0x28] sm:$0x1]
    %v2661 = vld [vmem:[%s6 + $0x29] sm:$0x1]
    %v2662 = vsel %vm374, %v2656, 0.0
    %2663 = vadd.xlane.f32.xlu0 %v2662
    %v2664 = vpop.xlane.xlu0 %2663
    %v2665 = vsel %vm374, %v2657, 0.0
    %2666 = vadd.xlane.f32.xlu0 %v2665
    %v2667 = vpop.xlane.xlu0 %2666
    %v2668 = vsel %vm374, %v2658, 0.0
    %2669 = vadd.xlane.f32.xlu0 %v2668
    %v2670 = vpop.xlane.xlu0 %2669
    %v2671 = vsel %vm374, %v2659, 0.0
    %2672 = vadd.xlane.f32.xlu0 %v2671
    %v2673 = vpop.xlane.xlu0 %2672
    %v2674 = vmul.f32 %v2664, %v387
    %v2675 = vmul.f32 %v2667, %v387
    %v2676 = vmul.f32 %v2670, %v387
    %v2677 = vmul.f32 %v2673, %v387
    %v2678 = vsub.f32 %v2656, %v2674
    %v2679 = vsub.f32 %v2657, %v2675
    %v2680 = vsub.f32 %v2658, %v2676
    %v2681 = vsub.f32 %v2659, %v2677
    %v2682 = vmul.f32 %v2678, %v2678
    %v2683 = vmul.f32 %v2679, %v2679
    %v2684 = vmul.f32 %v2680, %v2680
    %v2685 = vmul.f32 %v2681, %v2681
    %v2686 = vsel %vm374, %v2682, 0.0
    %2687 = vadd.xlane.f32.xlu0 %v2686
    %v2688 = vpop.xlane.xlu0 %2687
    %v2689 = vsel %vm374, %v2683, 0.0
    %2690 = vadd.xlane.f32.xlu0 %v2689
    %v2691 = vpop.xlane.xlu0 %2690
    %v2692 = vsel %vm374, %v2684, 0.0
    %2693 = vadd.xlane.f32.xlu0 %v2692
    %v2694 = vpop.xlane.xlu0 %2693
    %v2695 = vsel %vm374, %v2685, 0.0
    %2696 = vadd.xlane.f32.xlu0 %v2695
    %v2697 = vpop.xlane.xlu0 %2696
    %v2698 = vmul.f32 %v2688, %v387
    %v2699 = vmul.f32 %v2691, %v387
    %v2700 = vmul.f32 %v2694, %v387
    %v2701 = vmul.f32 %v2697, %v387
    %v2702 = vadd.f32 %v2698, 1e-06
    %v2703 = vadd.f32 %v2699, 1e-06
    %v2704 = vadd.f32 %v2700, 1e-06
    %v2705 = vadd.f32 %v2701, 1e-06
    %v2706 = vrsqrt.pop %v2702
    %v2707 = vrsqrt.pop %v2703
    %v2708 = vrsqrt.pop %v2704
    %v2709 = vrsqrt.pop %v2705
    %v2710 = vmul.f32 %v2678, %v2706
    %v2711 = vmul.f32 %v2679, %v2707
    %v2712 = vmul.f32 %v2680, %v2708
    %v2713 = vmul.f32 %v2681, %v2709
    %v2714 = vlaneseq
    %v2715 = vshrl.u32 %v2714, 7
    %v2716 = vsub.s32 0, %v2715
    %v2717 = vrot.slane %v2660, %v2716
    %v2718 = vmul.f32 %v2710, %v2717
    %v2719 = vmul.f32 %v2711, %v2717
    %v2720 = vmul.f32 %v2712, %v2717
    %v2721 = vmul.f32 %v2713, %v2717
    %v2722 = vlaneseq
    %v2723 = vshrl.u32 %v2722, 7
    %v2724 = vsub.s32 0, %v2723
    %v2725 = vrot.slane %v2661, %v2724
    %v2726 = vadd.f32 %v2718, %v2725
    %v2727 = vadd.f32 %v2719, %v2725
    %v2728 = vadd.f32 %v2720, %v2725
    %v2729 = vadd.f32 %v2721, %v2725
    %v2730 = vpack.c.bf16 %v2727, %v2726
    %v2731 = vpack.c.bf16 %v2729, %v2728
    %v2732 = vld [vmem:[%s5 + $0x10] sm:$0xf]
    %v2733 = vld [vmem:[%s5 + $0x14] sm:$0xf]
    %v2734 = vld [vmem:[%s5 + $0x18] sm:$0xf]
    %v2735 = vld [vmem:[%s5 + $0x1c] sm:$0xf]
    %v2736 = vld [vmem:[%s7 + $0x5] sm:$0x1]
    %v2737 = vlaneseq
    %v2738 = vshrl.u32 %v2737, 7
    %v2739 = vsub.s32 0, %v2738
    %v2740 = vrot.slane %v2736, %v2739
    %v2745 = vunpack.c.l.b16 %v2732
    %v2746 = vunpack.c.l.b16 %v2733
    %v2747 = vunpack.c.l.b16 %v2734
    %v2748 = vunpack.c.l.b16 %v2735
    %v2749 = vpack.c.b16 %v2746, %v2745
    %v2750 = vpack.c.b16 %v2748, %v2747
    %v2754 = vsel %vm374, %v2730, 0
    %v2757 = vsel %vm374, %v2731, 0
    %2759 = vmatprep.subr.bf16.mxu0 0
    %2760 = vmatpush1.bf16.msra.mxu0 %v2749
    %2761 = vmatprep.subr.bf16.mxu0 0
    %2762 = vmatpush1.bf16.msra.mxu0 %v2750
    %2763 = vmatprep.subr.bf16.mxu0 0
    %2764 = vmatpush1.bf16.msra.mxu0 0
    %2765 = vmatprep.subr.bf16.mxu0 0
    %2766 = vmatpush1.bf16.msra.mxu0 0
    %2767 = vmatprep.subr.bf16.mxu0 0
    %2768 = vmatpush1.bf16.msra.mxu0 0
    %2769 = vmatprep.subr.bf16.mxu0 0
    %2770 = vmatpush1.bf16.msra.mxu0 0
    %2771 = vmatprep.subr.bf16.mxu0 0
    %2772 = vmatpush1.bf16.msra.mxu0 0
    %2773 = vmatprep.subr.bf16.mxu0 0
    %2774 = vmatpush1.bf16.msra.mxu0 0
    %2775 = vmatprep.subr.bf16.mxu0 0
    %2776 = vmatpush1.bf16.msra.mxu0 0
    %2777 = vmatprep.subr.bf16.mxu0 0
    %2778 = vmatpush1.bf16.msra.mxu0 0
    %2779 = vmatprep.subr.bf16.mxu0 0
    %2780 = vmatpush1.bf16.msra.mxu0 0
    %2781 = vmatprep.subr.bf16.mxu0 0
    %2782 = vmatpush1.bf16.msra.mxu0 0
    %2783 = vmatprep.subr.bf16.mxu0 0
    %2784 = vmatpush1.bf16.msra.mxu0 0
    %2785 = vmatprep.subr.bf16.mxu0 0
    %2786 = vmatpush1.bf16.msra.mxu0 0
    %2787 = vmatprep.subr.bf16.mxu0 0
    %2788 = vmatpush1.bf16.msra.mxu0 0
    %2789 = vmatprep.subr.bf16.mxu0 0
    %2790 = vmatpush1.bf16.msra.mxu0 0
    %2791 = vmatprep.mubr.bf16.mxu0 0
    %2792 = vmatmul.mubr.bf16.gmra.mrb[0].mxu0 %v2754
    %v2793 = vpop.f32.mrb[0].mxu0
    %v2794 = vadd.f32 %v2740, %v2793
    %v2795 = vpop.f32.mrb[0].mxu0
    %v2796 = vpop.f32.mrb[0].mxu0
    %v2797 = vadd.f32 %v2740, %v2796
    %v2798 = vpop.f32.mrb[0].mxu0
    %2799 = vmatprep.mubr.bf16.mxu0 0
    %2800 = vmatmul.mubr.bf16.gmra.mrb[0].mxu0 %v2757
    %v2801 = vpop.f32.mrb[0].mxu0
    %v2802 = vadd.f32 %v2740, %v2801
    %v2803 = vpop.f32.mrb[0].mxu0
    %v2804 = vpop.f32.mrb[0].mxu0
    %v2805 = vadd.f32 %v2740, %v2804
    %v2806 = vpop.f32.mrb[0].mxu0
    %2807 = vdwg.mxu0
    %v2808 = vmul.f32 %v2794, %v2794
    %v2809 = vmul.f32 %v2797, %v2797
    %v2810 = vmul.f32 %v2802, %v2802
    %v2811 = vmul.f32 %v2805, %v2805
    %v2812 = vmul.f32 %v2794, %v2808
    %v2813 = vmul.f32 %v2797, %v2809
    %v2814 = vmul.f32 %v2802, %v2810
    %v2815 = vmul.f32 %v2805, %v2811
    %v2816 = vmul.f32 %v2812, 0.044715
    %v2817 = vmul.f32 %v2813, 0.044715
    %v2818 = vmul.f32 %v2814, 0.044715
    %v2819 = vmul.f32 %v2815, 0.044715
    %v2820 = vadd.f32 %v2794, %v2816
    %v2821 = vadd.f32 %v2797, %v2817
    %v2822 = vadd.f32 %v2802, %v2818
    %v2823 = vadd.f32 %v2805, %v2819
    %v2824 = vmul.f32 %v2820, 0.7978846
    %v2825 = vmul.f32 %v2821, 0.7978846
    %v2826 = vmul.f32 %v2822, 0.7978846
    %v2827 = vmul.f32 %v2823, 0.7978846
    %v2828 = vtanh.pop %v2824
    %v2829 = vtanh.pop %v2825
    %v2830 = vtanh.pop %v2826
    %v2831 = vtanh.pop %v2827
    %v2832 = vadd.f32 %v2828, 1.0
    %v2833 = vadd.f32 %v2829, 1.0
    %v2834 = vadd.f32 %v2830, 1.0
    %v2835 = vadd.f32 %v2831, 1.0
    %v2836 = vmul.f32 %v2832, 0.5
    %v2837 = vmul.f32 %v2833, 0.5
    %v2838 = vmul.f32 %v2834, 0.5
    %v2839 = vmul.f32 %v2835, 0.5
    %v2840 = vmul.f32 %v2794, %v2836
    %v2841 = vmul.f32 %v2797, %v2837
    %v2842 = vmul.f32 %v2802, %v2838
    %v2843 = vmul.f32 %v2805, %v2839
    %v2844 = vpack.c.bf16 %v2841, %v2840
    %v2845 = vpack.c.bf16 %v2843, %v2842
    %v2846 = vld [vmem:[%s3 + $0x100] sm:$0xf]
    %v2847 = vld [vmem:[%s3 + $0x104] sm:$0xf]
    %v2848 = vld [vmem:[%s3 + $0x108] sm:$0xf]
    %v2849 = vld [vmem:[%s3 + $0x10c] sm:$0xf]
    %v2850 = vld [vmem:[%s3 + $0x110] sm:$0xf]
    %v2851 = vld [vmem:[%s3 + $0x114] sm:$0xf]
    %v2852 = vld [vmem:[%s3 + $0x118] sm:$0xf]
    %v2853 = vld [vmem:[%s3 + $0x11c] sm:$0xf]
    %v2862 = vunpack.c.l.b16 %v2846
    %v2863 = vunpack.c.l.b16 %v2847
    %v2864 = vunpack.c.l.b16 %v2848
    %v2865 = vunpack.c.l.b16 %v2849
    %v2866 = vunpack.c.l.b16 %v2850
    %v2867 = vunpack.c.l.b16 %v2851
    %v2868 = vunpack.c.l.b16 %v2852
    %v2869 = vunpack.c.l.b16 %v2853
    %v2870 = vpack.c.b16 %v2863, %v2862
    %v2871 = vpack.c.b16 %v2865, %v2864
    %v2872 = vpack.c.b16 %v2867, %v2866
    %v2873 = vpack.c.b16 %v2869, %v2868
    %v2879 = vsel %vm1593, %v2844, 0
    %v2882 = vsel %vm1593, %v2845, 0
    %2884 = vmatprep.subr.bf16.mxu0 0
    %2885 = vmatpush1.bf16.msra.mxu0 %v2870
    %2886 = vmatprep.subr.bf16.mxu0 0
    %2887 = vmatpush1.bf16.msra.mxu0 %v2871
    %2888 = vmatprep.subr.bf16.mxu0 0
    %2889 = vmatpush1.bf16.msra.mxu0 %v2872
    %2890 = vmatprep.subr.bf16.mxu0 0
    %2891 = vmatpush1.bf16.msra.mxu0 %v2873
    %2892 = vmatprep.subr.bf16.mxu0 0
    %2893 = vmatpush1.bf16.msra.mxu0 0
    %2894 = vmatprep.subr.bf16.mxu0 0
    %2895 = vmatpush1.bf16.msra.mxu0 0
    %2896 = vmatprep.subr.bf16.mxu0 0
    %2897 = vmatpush1.bf16.msra.mxu0 0
    %2898 = vmatprep.subr.bf16.mxu0 0
    %2899 = vmatpush1.bf16.msra.mxu0 0
    %2900 = vmatprep.subr.bf16.mxu0 0
    %2901 = vmatpush1.bf16.msra.mxu0 0
    %2902 = vmatprep.subr.bf16.mxu0 0
    %2903 = vmatpush1.bf16.msra.mxu0 0
    %2904 = vmatprep.subr.bf16.mxu0 0
    %2905 = vmatpush1.bf16.msra.mxu0 0
    %2906 = vmatprep.subr.bf16.mxu0 0
    %2907 = vmatpush1.bf16.msra.mxu0 0
    %2908 = vmatprep.subr.bf16.mxu0 0
    %2909 = vmatpush1.bf16.msra.mxu0 0
    %2910 = vmatprep.subr.bf16.mxu0 0
    %2911 = vmatpush1.bf16.msra.mxu0 0
    %2912 = vmatprep.subr.bf16.mxu0 0
    %2913 = vmatpush1.bf16.msra.mxu0 0
    %2914 = vmatprep.subr.bf16.mxu0 0
    %2915 = vmatpush1.bf16.msra.mxu0 0
    %2916 = vmatprep.mubr.bf16.mxu0 0
    %2917 = vmatmul.mubr.bf16.gmra.mrb[0].mxu0 %v2879
    %v2918 = vpop.f32.mrb[0].mxu0
    %v2919 = vadd.f32 0.0, %v2918
    %v2920 = vpop.f32.mrb[0].mxu0
    %v2921 = vpop.f32.mrb[0].mxu0
    %v2922 = vpop.f32.mrb[0].mxu0
    %2923 = vmatprep.mubr.bf16.mxu0 0
    %2924 = vmatmul.mubr.bf16.gmra.mrb[0].mxu0 %v2882
    %v2925 = vpop.f32.mrb[0].mxu0
    %v2926 = vadd.f32 0.0, %v2925
    %v2927 = vpop.f32.mrb[0].mxu0
    %v2928 = vpop.f32.mrb[0].mxu0
    %v2929 = vpop.f32.mrb[0].mxu0
    %2930 = vdwg.mxu0
    %v2931 = vadd.f32 %v2656, %v2919
    %v2932 = vadd.f32 %v2658, %v2926
    %v2933 = vld [vmem:[%s6 + $0x2b] sm:$0x1]
    %v2934 = vlaneseq
    %v2935 = vshrl.u32 %v2934, 7
    %v2936 = vsub.s32 0, %v2935
    %v2937 = vrot.slane %v2933, %v2936
    %v2938 = vadd.f32 %v2931, %v2937
    %v2939 = vadd.f32 %v2932, %v2937
    %v2940 = vld [vmem:[%s6 + $0x2c] sm:$0x1]
    %v2941 = vld [vmem:[%s6 + $0x2d] sm:$0x1]
    %v2942 = vsel %vm374, %v2938, 0.0
    %2943 = vadd.xlane.f32.xlu0 %v2942
    %v2944 = vpop.xlane.xlu0 %2943
    %v2945 = vsel %vm374, %v2939, 0.0
    %2946 = vadd.xlane.f32.xlu0 %v2945
    %v2947 = vpop.xlane.xlu0 %2946
    %v2948 = vmul.f32 %v2944, %v387
    %v2949 = vmul.f32 %v2947, %v387
    %v2950 = vsub.f32 %v2938, %v2948
    %v2951 = vsub.f32 %v2939, %v2949
    %v2952 = vmul.f32 %v2950, %v2950
    %v2953 = vmul.f32 %v2951, %v2951
    %v2954 = vsel %vm374, %v2952, 0.0
    %2955 = vadd.xlane.f32.xlu0 %v2954
    %v2956 = vpop.xlane.xlu0 %2955
    %v2957 = vsel %vm374, %v2953, 0.0
    %2958 = vadd.xlane.f32.xlu0 %v2957
    %v2959 = vpop.xlane.xlu0 %2958
    %v2960 = vmul.f32 %v2956, %v387
    %v2961 = vmul.f32 %v2959, %v387
    %v2962 = vadd.f32 %v2960, 1e-06
    %v2963 = vadd.f32 %v2961, 1e-06
    %v2964 = vrsqrt.pop %v2962
    %v2965 = vrsqrt.pop %v2963
    %v2966 = vmul.f32 %v2950, %v2964
    %v2967 = vmul.f32 %v2951, %v2965
    %v2968 = vlaneseq
    %v2969 = vshrl.u32 %v2968, 7
    %v2970 = vsub.s32 0, %v2969
    %v2971 = vrot.slane %v2940, %v2970
    %v2972 = vmul.f32 %v2966, %v2971
    %v2973 = vmul.f32 %v2967, %v2971
    %v2974 = vlaneseq
    %v2975 = vshrl.u32 %v2974, 7
    %v2976 = vsub.s32 0, %v2975
    %v2977 = vrot.slane %v2941, %v2976
    %v2978 = vadd.f32 %v2972, %v2977
    %v2979 = vadd.f32 %v2973, %v2977
    %v2981 = vrot.slane %v2979, 7
    %vm2983 = vcmask 1040384
    %v2984 = vsel %vm2983, %v2978, %v2981
    %v2985 = vpack.c.bf16 %v2984, %v2984
    %v2986 = vld [vmem:[%s3 + $0x120] sm:$0xf]
    %v2987 = vld [vmem:[%s3 + $0x124] sm:$0xf]
    %v2988 = vld [vmem:[%s3 + $0x128] sm:$0xf]
    %v2989 = vld [vmem:[%s3 + $0x12c] sm:$0xf]
    %v2990 = vld [vmem:[%s6 + $0x2e] sm:$0x1]
    %v2991 = vlaneseq
    %v2992 = vshrl.u32 %v2991, 7
    %v2993 = vsub.s32 0, %v2992
    %v2994 = vrot.slane %v2990, %v2993
    %v2999 = vunpack.c.l.b16 %v2986
    %v3000 = vunpack.c.l.b16 %v2987
    %v3001 = vunpack.c.l.b16 %v2988
    %v3002 = vunpack.c.l.b16 %v2989
    %v3003 = vpack.c.b16 %v3000, %v2999
    %v3004 = vpack.c.b16 %v3002, %v3001
    %v3008 = vsel %vm374, %v2985, 0
    %3010 = vmatprep.subr.bf16.mxu0 0
    %3011 = vmatpush1.bf16.msra.mxu0 %v3003
    %3012 = vmatprep.subr.bf16.mxu0 0
    %3013 = vmatpush1.bf16.msra.mxu0 %v3004
    %3014 = vmatprep.subr.bf16.mxu0 0
    %3015 = vmatpush1.bf16.msra.mxu0 0
    %3016 = vmatprep.subr.bf16.mxu0 0
    %3017 = vmatpush1.bf16.msra.mxu0 0
    %3018 = vmatprep.subr.bf16.mxu0 0
    %3019 = vmatpush1.bf16.msra.mxu0 0
    %3020 = vmatprep.subr.bf16.mxu0 0
    %3021 = vmatpush1.bf16.msra.mxu0 0
    %3022 = vmatprep.subr.bf16.mxu0 0
    %3023 = vmatpush1.bf16.msra.mxu0 0
    %3024 = vmatprep.subr.bf16.mxu0 0
    %3025 = vmatpush1.bf16.msra.mxu0 0
    %3026 = vmatprep.subr.bf16.mxu0 0
    %3027 = vmatpush1.bf16.msra.mxu0 0
    %3028 = vmatprep.subr.bf16.mxu0 0
    %3029 = vmatpush1.bf16.msra.mxu0 0
    %3030 = vmatprep.subr.bf16.mxu0 0
    %3031 = vmatpush1.bf16.msra.mxu0 0
    %3032 = vmatprep.subr.bf16.mxu0 0
    %3033 = vmatpush1.bf16.msra.mxu0 0
    %3034 = vmatprep.subr.bf16.mxu0 0
    %3035 = vmatpush1.bf16.msra.mxu0 0
    %3036 = vmatprep.subr.bf16.mxu0 0
    %3037 = vmatpush1.bf16.msra.mxu0 0
    %3038 = vmatprep.subr.bf16.mxu0 0
    %3039 = vmatpush1.bf16.msra.mxu0 0
    %3040 = vmatprep.subr.bf16.mxu0 0
    %3041 = vmatpush1.bf16.msra.mxu0 0
    %3042 = vmatprep.mubr.bf16.mxu0 0
    %3043 = vmatmul.mubr.bf16.gmra.mrb[0].mxu0 %v3008
    %v3044 = vpop.f32.mrb[0].mxu0
    %v3045 = vadd.f32 %v2994, %v3044
    %v3046 = vpop.f32.mrb[0].mxu0
    %v3047 = vpop.f32.mrb[0].mxu0
    %v3048 = vpop.f32.mrb[0].mxu0
    %3049 = vdwg.mxu0
    %v3050 = vtanh.pop %v3045
    %v3051 = vld [vmem:[%s0] sm:$0x3]
    %v3052 = vld [vmem:[%s7 + $0x2] sm:$0x1]
    %3054 = vset.pattern.permute.xlu0 0
    %3055 = vperm.xlu0 %3054, %v3051
    %v3056 = vpop.permute.xlu0 %3055
    %v3058 = vlaneseq
    %v3059 = vshrl.u32 %v3058, 7
    %v3060 = vsub.s32 0, %v3059
    %v3061 = vrot.slane %v3052, %v3060
    %v3062 = vmul.f32 %v3056, %v3061
    %v3063 = vld [vmem:[%s7 + $0x3] sm:$0x1]
    %v3064 = vlaneseq
    %v3065 = vshrl.u32 %v3064, 7
    %v3066 = vsub.s32 0, %v3065
    %v3067 = vrot.slane %v3063, %v3066
    %v3068 = vadd.f32 %v3062, %v3067
    %v3069 = vmax.f32 %v3068, 0.0
    %v3070 = vpack.c.bf16 %v3069, %v3069
    %v3071 = vld [vmem:[%s3 + $0x130] sm:$0xf]
    %v3072 = vld [vmem:[%s3 + $0x134] sm:$0xf]
    %v3073 = vld [vmem:[%s3 + $0x138] sm:$0xf]
    %v3074 = vld [vmem:[%s3 + $0x13c] sm:$0xf]
    %v3075 = vld [vmem:[%s3 + $0x140] sm:$0xf]
    %v3076 = vld [vmem:[%s3 + $0x144] sm:$0xf]
    %v3077 = vld [vmem:[%s3 + $0x148] sm:$0xf]
    %v3078 = vld [vmem:[%s3 + $0x14c] sm:$0xf]
    %v3079 = vld [vmem:[%s3 + $0x150] sm:$0xf]
    %v3080 = vld [vmem:[%s3 + $0x154] sm:$0xf]
    %v3081 = vld [vmem:[%s3 + $0x158] sm:$0xf]
    %v3082 = vld [vmem:[%s3 + $0x15c] sm:$0xf]
    %v3083 = vld [vmem:[%s6 + $0x2f] sm:$0x1]
    %v3084 = vlaneseq
    %v3085 = vshrl.u32 %v3084, 7
    %v3086 = vsub.s32 0, %v3085
    %v3087 = vrot.slane %v3083, %v3086
    %v3100 = vunpack.c.l.b16 %v3071
    %v3101 = vunpack.c.l.b16 %v3072
    %v3102 = vunpack.c.l.b16 %v3073
    %v3103 = vunpack.c.l.b16 %v3074
    %v3104 = vunpack.c.l.b16 %v3075
    %v3105 = vunpack.c.l.b16 %v3076
    %v3106 = vunpack.c.l.b16 %v3077
    %v3107 = vunpack.c.l.b16 %v3078
    %v3108 = vunpack.c.l.b16 %v3079
    %v3109 = vunpack.c.l.b16 %v3080
    %v3110 = vunpack.c.l.b16 %v3081
    %v3111 = vunpack.c.l.b16 %v3082
    %v3112 = vpack.c.b16 %v3101, %v3100
    %v3113 = vpack.c.b16 %v3103, %v3102
    %v3114 = vpack.c.b16 %v3105, %v3104
    %v3115 = vpack.c.b16 %v3107, %v3106
    %v3116 = vpack.c.b16 %v3109, %v3108
    %v3117 = vpack.c.b16 %v3111, %v3110
    %vm3124 = vcmask 785408
    %v3126 = vsel %vm3124, %v3070, 0
    %3128 = vmatprep.subr.bf16.mxu0 0
    %3129 = vmatpush1.bf16.msra.mxu0 %v3112
    %3130 = vmatprep.subr.bf16.mxu0 0
    %3131 = vmatpush1.bf16.msra.mxu0 %v3113
    %3132 = vmatprep.subr.bf16.mxu0 0
    %3133 = vmatpush1.bf16.msra.mxu0 %v3114
    %3134 = vmatprep.subr.bf16.mxu0 0
    %3135 = vmatpush1.bf16.msra.mxu0 %v3115
    %3136 = vmatprep.subr.bf16.mxu0 0
    %3137 = vmatpush1.bf16.msra.mxu0 %v3116
    %3138 = vmatprep.subr.bf16.mxu0 0
    %3139 = vmatpush1.bf16.msra.mxu0 %v3117
    %3140 = vmatprep.subr.bf16.mxu0 0
    %3141 = vmatpush1.bf16.msra.mxu0 0
    %3142 = vmatprep.subr.bf16.mxu0 0
    %3143 = vmatpush1.bf16.msra.mxu0 0
    %3144 = vmatprep.subr.bf16.mxu0 0
    %3145 = vmatpush1.bf16.msra.mxu0 0
    %3146 = vmatprep.subr.bf16.mxu0 0
    %3147 = vmatpush1.bf16.msra.mxu0 0
    %3148 = vmatprep.subr.bf16.mxu0 0
    %3149 = vmatpush1.bf16.msra.mxu0 0
    %3150 = vmatprep.subr.bf16.mxu0 0
    %3151 = vmatpush1.bf16.msra.mxu0 0
    %3152 = vmatprep.subr.bf16.mxu0 0
    %3153 = vmatpush1.bf16.msra.mxu0 0
    %3154 = vmatprep.subr.bf16.mxu0 0
    %3155 = vmatpush1.bf16.msra.mxu0 0
    %3156 = vmatprep.subr.bf16.mxu0 0
    %3157 = vmatpush1.bf16.msra.mxu0 0
    %3158 = vmatprep.subr.bf16.mxu0 0
    %3159 = vmatpush1.bf16.msra.mxu0 0
    %3160 = vmatprep.mubr.bf16.mxu0 0
    %3161 = vmatmul.mubr.bf16.gmra.mrb[0].mxu0 %v3126
    %v3162 = vpop.f32.mrb[0].mxu0
    %v3163 = vadd.f32 %v3087, %v3162
    %v3164 = vpop.f32.mrb[0].mxu0
    %v3165 = vpop.f32.mrb[0].mxu0
    %v3166 = vpop.f32.mrb[0].mxu0
    %3167 = vdwg.mxu0
    %3169 = vrot.lane.b32.xlu0 %v3163, 32
    %v3170 = vpop.permute.xlu0 %3169
    %v3172 = vsel %vm374, %v3050, %v3170
    %vm3173 = vcmask 517120
    %3174 = vst.msk [vmem:[#allocation2] sm:$0x3] %vm3173, %v3172
    %v3175 = vpack.c.bf16 %v3172, %v3172
    %v3176 = vld [vmem:[%s3 + $0x160] sm:$0xf]
    %v3177 = vld [vmem:[%s3 + $0x164] sm:$0xf]
    %v3178 = vld [vmem:[%s3 + $0x168] sm:$0xf]
    %v3179 = vld [vmem:[%s3 + $0x16c] sm:$0xf]
    %v3180 = vld [vmem:[%s3 + $0x170] sm:$0xf]
    %v3181 = vld [vmem:[%s3 + $0x174] sm:$0xf]
    %v3182 = vld [vmem:[%s3 + $0x178] sm:$0xf]
    %v3183 = vld [vmem:[%s3 + $0x17c] sm:$0xf]
    %v3184 = vld [vmem:[%s6 + $0x30] sm:$0x1]
    %v3185 = vlaneseq
    %v3186 = vshrl.u32 %v3185, 7
    %v3187 = vsub.s32 0, %v3186
    %v3188 = vrot.slane %v3184, %v3187
    %v3197 = vunpack.c.l.b16 %v3176
    %v3198 = vunpack.c.l.b16 %v3177
    %v3199 = vunpack.c.l.b16 %v3178
    %v3200 = vunpack.c.l.b16 %v3179
    %v3201 = vunpack.c.l.b16 %v3180
    %v3202 = vunpack.c.l.b16 %v3181
    %v3203 = vunpack.c.l.b16 %v3182
    %v3204 = vunpack.c.l.b16 %v3183
    %v3205 = vpack.c.b16 %v3198, %v3197
    %v3206 = vpack.c.b16 %v3200, %v3199
    %v3207 = vpack.c.b16 %v3202, %v3201
    %v3208 = vpack.c.b16 %v3204, %v3203
    %v3214 = vsel %vm1593, %v3175, 0
    %3216 = vmatprep.subr.bf16.mxu0 0
    %3217 = vmatpush1.bf16.msra.mxu0 %v3205
    %3218 = vmatprep.subr.bf16.mxu0 0
    %3219 = vmatpush1.bf16.msra.mxu0 %v3206
    %3220 = vmatprep.subr.bf16.mxu0 0
    %3221 = vmatpush1.bf16.msra.mxu0 %v3207
    %3222 = vmatprep.subr.bf16.mxu0 0
    %3223 = vmatpush1.bf16.msra.mxu0 %v3208
    %3224 = vmatprep.subr.bf16.mxu0 0
    %3225 = vmatpush1.bf16.msra.mxu0 0
    %3226 = vmatprep.subr.bf16.mxu0 0
    %3227 = vmatpush1.bf16.msra.mxu0 0
    %3228 = vmatprep.subr.bf16.mxu0 0
    %3229 = vmatpush1.bf16.msra.mxu0 0
    %3230 = vmatprep.subr.bf16.mxu0 0
    %3231 = vmatpush1.bf16.msra.mxu0 0
    %3232 = vmatprep.subr.bf16.mxu0 0
    %3233 = vmatpush1.bf16.msra.mxu0 0
    %3234 = vmatprep.subr.bf16.mxu0 0
    %3235 = vmatpush1.bf16.msra.mxu0 0
    %3236 = vmatprep.subr.bf16.mxu0 0
    %3237 = vmatpush1.bf16.msra.mxu0 0
    %3238 = vmatprep.subr.bf16.mxu0 0
    %3239 = vmatpush1.bf16.msra.mxu0 0
    %3240 = vmatprep.subr.bf16.mxu0 0
    %3241 = vmatpush1.bf16.msra.mxu0 0
    %3242 = vmatprep.subr.bf16.mxu0 0
    %3243 = vmatpush1.bf16.msra.mxu0 0
    %3244 = vmatprep.subr.bf16.mxu0 0
    %3245 = vmatpush1.bf16.msra.mxu0 0
    %3246 = vmatprep.subr.bf16.mxu0 0
    %3247 = vmatpush1.bf16.msra.mxu0 0
    %3248 = vmatprep.mubr.bf16.mxu0 0
    %3249 = vmatmul.mubr.bf16.gmra.mrb[0].mxu0 %v3214
    %v3250 = vpop.f32.mrb[0].mxu0
    %v3251 = vadd.f32 %v3188, %v3250
    %v3252 = vpop.f32.mrb[0].mxu0
    %v3253 = vpop.f32.mrb[0].mxu0
    %v3254 = vpop.f32.mrb[0].mxu0
    %3255 = vdwg.mxu0
    %vm3256 = vcmask 33792
    %3257 = vst.msk [vmem:[#allocation4] sm:$0x3] %vm3256, %v3251
    // Predicated region
    $region34: #{_fused_forward.1} parent=1 // pred_check
      _
    $region35: #{_fused_forward.1} parent=1 // pred_check_branch
      %3259 = sbr.rel (0) target = $region37
    $region36: #{_fused_forward.1} parent=1 // pred_region
      %s3261 = ssub.s32 32, 32
      %3262 = vsyncadd [#allocation3], %s3261
      %s3264 = sshll.u32 [#allocation2], 4
      %s3265 = int_to_ptr.vmem [resolvable:$true] %s3264
      %3267 = dma.vmem_to_hbm [thread:$0]  %s3265, 32, %s8, [#allocation3]
    $region37: #{_fused_forward.1} parent=1 // pred_fallthru
      _
    // Predicated region
    $region38: #{_fused_forward.1} parent=1 // pred_check
      _
    $region39: #{_fused_forward.1} parent=1 // pred_check_branch
      %3269 = sbr.rel (0) target = $region41
    $region40: #{_fused_forward.1} parent=1 // pred_region
      %s3271 = ssub.s32 32, 32
      %3272 = vsyncadd [#allocation5], %s3271
      %s3274 = sshll.u32 [#allocation4], 4
      %s3275 = int_to_ptr.vmem [resolvable:$true] %s3274
      %3277 = dma.vmem_to_hbm [thread:$0]  %s3275, 32, %s9, [#allocation5]
    $region41: #{_fused_forward.1} parent=1 // pred_fallthru
      _
    // Predicated region
    $region42: #{_fused_forward.1} parent=1 // pred_check
      _
    $region43: #{_fused_forward.1} parent=1 // pred_check_branch
      %3279 = sbr.rel (0) target = $region45
    $region44: #{_fused_forward.1} parent=1 // pred_region
      %3280 = dma.done [#allocation3], 32
    $region45: #{_fused_forward.1} parent=1 // pred_fallthru
      _
    // Predicated region
    $region46: #{_fused_forward.1} parent=1 // pred_check
      _
    $region47: #{_fused_forward.1} parent=1 // pred_check_branch
      %3282 = sbr.rel (0) target = $region49
    $region48: #{_fused_forward.1} parent=1 // pred_region
      %3283 = dma.done [#allocation5], 32
    $region49: #{_fused_forward.1} parent=1 // pred_fallthru
      _
    %3284 = vsyncpa [#allocation3], 1
    %3285 = vsyncpa [#allocation5], 1

</llo_original>
